<compile_context>
chip_gen: v7x
topology: tpu7x:2x2x1
jax: 0.10.0
libtpu: 0.0.40
codegen_flags: <defaults>
</compile_context>

<pallas_src>
import jax
import jax.numpy as jnp
import numpy as np
from jax import lax
from jax.experimental import pallas as pl
from jax.experimental.pallas import tpu as pltpu


# ----------------------------------------------------------------------------
# Fused kernel: all LSTM layers + decoder, single invocation (no grid).
# Ref order: emb2d, (w_ih_t, w_hh_t, b) * nlayers, h0, c0, dec_w_t, dec_b,
#            decoded_out, hN_out, cN_out, x_scr, gx_scr
# ----------------------------------------------------------------------------
def make_fused_kernel(nlayers, T, B, H):
    def kernel(*refs):
        emb_ref = refs[0]
        layer_refs = refs[1:1 + 3 * nlayers]
        h0_ref = refs[1 + 3 * nlayers]
        c0_ref = refs[2 + 3 * nlayers]
        decw_ref = refs[3 + 3 * nlayers]
        decb_ref = refs[4 + 3 * nlayers]
        dec_out_ref = refs[5 + 3 * nlayers]
        hN_ref = refs[6 + 3 * nlayers]
        cN_ref = refs[7 + 3 * nlayers]
        x_scr = refs[8 + 3 * nlayers]     # (T*B, H)  layer output buffer
        gx_scr = refs[9 + 3 * nlayers]    # (T*B, 4H) batched input projection

        for l in range(nlayers):
            w_ih = layer_refs[3 * l][...]       # (I_l, 4H)
            w_hh = layer_refs[3 * l + 1][...]   # (H, 4H)
            b = layer_refs[3 * l + 2][...]      # (1, 4H)

            # Batched input projection for ALL timesteps: one big MXU matmul.
            # Layer 0 reads the embedding block; later layers read the previous
            # layer's output scratch (still resident in VMEM).
            x_in = emb_ref[...] if l == 0 else x_scr[...]
            gx_scr[...] = (jnp.dot(x_in, w_ih,
                                   preferred_element_type=jnp.float32)
                           + b)                  # (T*B, 4H)

            h = h0_ref[l]                        # (B, H)
            c = c0_ref[l]                        # (B, H)
            # Statically unrolled time loop: only the recurrent matmul and the
            # gate nonlinearities run per step.  Gate math stays in f32
            # (v5e VPU/EUP have no bf16).
            for t in range(T):
                g = gx_scr[t * B:(t + 1) * B, :] + jnp.dot(
                    h, w_hh, preferred_element_type=jnp.float32)  # (B, 4H)
                i_g = jax.nn.sigmoid(g[:, 0:H])
                f_g = jax.nn.sigmoid(g[:, H:2 * H])
                g_g = jnp.tanh(g[:, 2 * H:3 * H])
                o_g = jax.nn.sigmoid(g[:, 3 * H:4 * H])
                c = f_g * c + i_g * g_g
                h = o_g * jnp.tanh(c)
                # Sublane-aligned (B, H) store; builds the layer output without
                # any concatenate.
                x_scr[t * B:(t + 1) * B, :] = h

            # Final states written exactly once per layer.
            hN_ref[l] = h
            cN_ref[l] = c
            # Inter-layer dropout = identity (eval).

        # Fused decoder: (T*B, H) @ (H, V) + bias.  V is a multiple of 128, so
        # the output store is lane-dense.
        dec_out_ref[...] = (jnp.dot(x_scr[...], decw_ref[...],
                                    preferred_element_type=jnp.float32)
                            + decb_ref[...])

    return kernel


def fused_rnn_forward(emb2d, lstm_params, h0, c0, dec_w_t, dec_b):
    """emb2d: (T*B, ninp); h0/c0: (nlayers, B, H); dec_w_t: (H, V); dec_b: (1, V)."""
    nlayers, B, H = h0.shape
    TB = emb2d.shape[0]
    T = TB // B
    V = dec_w_t.shape[1]

    inputs = [emb2d]
    in_specs = [pl.BlockSpec(emb2d.shape, lambda: (0, 0))]
    for l in range(nlayers):
        p = lstm_params[l]
        for name in ("w_ih_t", "w_hh_t", "b"):
            arr = p[name]
            inputs.append(arr)
            in_specs.append(pl.BlockSpec(arr.shape, lambda: (0, 0)))
    inputs += [h0, c0, dec_w_t, dec_b]
    in_specs += [
        pl.BlockSpec(h0.shape, lambda: (0, 0, 0)),
        pl.BlockSpec(c0.shape, lambda: (0, 0, 0)),
        pl.BlockSpec(dec_w_t.shape, lambda: (0, 0)),
        pl.BlockSpec(dec_b.shape, lambda: (0, 0)),
    ]

    out_shape = (
        jax.ShapeDtypeStruct((TB, V), jnp.float32),
        jax.ShapeDtypeStruct((nlayers, B, H), jnp.float32),
        jax.ShapeDtypeStruct((nlayers, B, H), jnp.float32),
    )
    out_specs = (
        pl.BlockSpec((TB, V), lambda: (0, 0)),
        pl.BlockSpec((nlayers, B, H), lambda: (0, 0, 0)),
        pl.BlockSpec((nlayers, B, H), lambda: (0, 0, 0)),
    )

    # TODO(synk): input_output_aliases={h0_idx: 1, c0_idx: 2} would update the
    # hidden state in place; omitted here because the script reuses h0/c0 for
    # the pure-JAX reference afterwards.
    return pl.pallas_call(
        make_fused_kernel(nlayers, T, B, H),
        out_shape=out_shape,
        in_specs=in_specs,
        out_specs=out_specs,
        scratch_shapes=[
            pltpu.VMEM((TB, H), jnp.float32),       # x_scr: layer outputs
            pltpu.VMEM((TB, 4 * H), jnp.float32),   # gx_scr: batched gates_x
        ],
        compiler_params=pltpu.CompilerParams(
            vmem_limit_bytes=32 * 1024 * 1024),
    )(*inputs)


# ----------------------------------------------------------------------------
# Full RNNModel forward (matches PyTorch module's return signature).
# ----------------------------------------------------------------------------
def rnn_model_forward(params, tokens, hidden):
    """tokens: (T, B) int32; hidden: (h0, c0) each (nlayers, B, H)."""
    h0, c0 = hidden
    T, B = tokens.shape
    ninp = params["encoder_w"].shape[1]

    # Embedding lookup (gather — glue outside the kernel); dropout = identity.
    emb = jnp.take(params["encoder_w"], tokens, axis=0)      # (T, B, ninp)
    emb2d = emb.reshape(T * B, ninp)

    decoded2d, hN, cN = fused_rnn_forward(
        emb2d, params["lstm"], h0, c0,
        params["decoder_w_t"], params["decoder_b"])

    V = params["decoder_w_t"].shape[1]
    decoded = decoded2d.reshape(T, B, V)
    return decoded, (hN, cN), 0.0, None, None


# ----------------------------------------------------------------------------
# Deterministic parameter construction (mirrors RNNModel.__init__ shapes).
# ----------------------------------------------------------------------------
def make_params(key, ntoken, ninp, nhid, nlayers):
    ks = jax.random.split(key, 2 + 4 * nlayers)
    initrange = 0.1
    encoder_w = jax.random.uniform(ks[0], (ntoken, ninp), jnp.float32,
                                   -initrange, initrange)
    decoder_w = jax.random.uniform(ks[1], (ntoken, nhid), jnp.float32,
                                   -initrange, initrange)
    lstm_params = []
    stdv = 1.0 / np.sqrt(nhid)
    for l in range(nlayers):
        in_dim = ninp if l == 0 else nhid
        kw = ks[2 + 4 * l: 6 + 4 * l]
        w_ih = jax.random.uniform(kw[0], (4 * nhid, in_dim), jnp.float32, -stdv, stdv)
        w_hh = jax.random.uniform(kw[1], (4 * nhid, nhid), jnp.float32, -stdv, stdv)
        b_ih = jax.random.uniform(kw[2], (4 * nhid,), jnp.float32, -stdv, stdv)
        b_hh = jax.random.uniform(kw[3], (4 * nhid,), jnp.float32, -stdv, stdv)
        lstm_params.append({
            "w_ih_t": w_ih.T,                       # (in_dim, 4H)
            "w_hh_t": w_hh.T,                       # (H, 4H)
            "b": (b_ih + b_hh).reshape(1, 4 * nhid),
        })
    return {
        "encoder_w": encoder_w,
        "lstm": lstm_params,
        "decoder_w_t": decoder_w.T,                 # (H, ntoken)
        "decoder_b": jnp.zeros((1, ntoken), jnp.float32),
    }


# ----------------------------------------------------------------------------
# Pure-JAX reference for correctness checking.
# ----------------------------------------------------------------------------
def reference_forward(params, tokens, hidden):
    h0, c0 = hidden
    nlayers = h0.shape[0]
    x = jnp.take(params["encoder_w"], tokens, axis=0)
    h_out, c_out = [], []
    for l in range(nlayers):
        W_ih = params["lstm"][l]["w_ih_t"]
        W_hh = params["lstm"][l]["w_hh_t"]
        b = params["lstm"][l]["b"][0]
        H = W_hh.shape[0]

        def step(carry, xt):
            h, c = carry
            g = xt @ W_ih + h @ W_hh + b
            i = jax.nn.sigmoid(g[:, 0:H])
            f = jax.nn.sigmoid(g[:, H:2 * H])
            gg = jnp.tanh(g[:, 2 * H:3 * H])
            o = jax.nn.sigmoid(g[:, 3 * H:4 * H])
            c = f * c + i * gg
            h = o * jnp.tanh(c)
            return (h, c), h

        (hT, cT), ys = lax.scan(step, (h0[l], c0[l]), x)
        h_out.append(hT)
        c_out.append(cT)
        x = ys
    T, B, H = x.shape
    dec = x.reshape(T * B, H) @ params["decoder_w_t"] + params["decoder_b"][0]
    return dec.reshape(T, B, -1), jnp.stack(h_out), jnp.stack(c_out)


if __name__ == "__main__":
    # Small shapes consistent with the module: seq=8, batch=8, ninp=128,
    # nhid=[128], nlayers=2, ntoken=256.
    T, B = 8, 8
    ntoken, ninp, nhid, nlayers = 256, 128, 128, 2

    key = jax.random.PRNGKey(0)
    kp, kt = jax.random.split(key)
    params = make_params(kp, ntoken, ninp, nhid, nlayers)

    tokens = jax.random.randint(kt, (T, B), 0, ntoken, dtype=jnp.int32)
    hidden = (jnp.zeros((nlayers, B, nhid), jnp.float32),
              jnp.zeros((nlayers, B, nhid), jnp.float32))

    decoded, (hN, cN), _, _, _ = rnn_model_forward(params, tokens, hidden)
    decoded = jax.block_until_ready(decoded)
    jax.block_until_ready(hN)
    jax.block_until_ready(cN)

    assert decoded.shape == (T, B, ntoken)
    assert hN.shape == (nlayers, B, nhid) and cN.shape == (nlayers, B, nhid)

    ref_dec, ref_h, ref_c = reference_forward(params, tokens, hidden)
    np.testing.assert_allclose(np.asarray(decoded), np.asarray(ref_dec),
                               rtol=1e-4, atol=1e-4)
    np.testing.assert_allclose(np.asarray(hN), np.asarray(ref_h),
                               rtol=1e-4, atol=1e-4)
    np.testing.assert_allclose(np.asarray(cN), np.asarray(ref_c),
                               rtol=1e-4, atol=1e-4)

    print("KERNEL_OK")
</pallas_src>

<mosaic_0001>
module attributes {stable_mosaic.version = 11 : i64} {
  func.func @kernel(%arg0: memref<64x128xf32, #tpu.memory_space<vmem>>, %arg1: memref<128x512xf32, #tpu.memory_space<vmem>>, %arg2: memref<128x512xf32, #tpu.memory_space<vmem>>, %arg3: memref<1x512xf32, #tpu.memory_space<vmem>>, %arg4: memref<128x512xf32, #tpu.memory_space<vmem>>, %arg5: memref<128x512xf32, #tpu.memory_space<vmem>>, %arg6: memref<1x512xf32, #tpu.memory_space<vmem>>, %arg7: memref<2x8x128xf32, #tpu.memory_space<vmem>>, %arg8: memref<2x8x128xf32, #tpu.memory_space<vmem>>, %arg9: memref<128x256xf32, #tpu.memory_space<vmem>>, %arg10: memref<1x256xf32, #tpu.memory_space<vmem>>, %arg11: memref<64x256xf32, #tpu.memory_space<vmem>>, %arg12: memref<2x8x128xf32, #tpu.memory_space<vmem>>, %arg13: memref<2x8x128xf32, #tpu.memory_space<vmem>>, %arg14: memref<64x128xf32, #tpu.memory_space<vmem>>, %arg15: memref<64x512xf32, #tpu.memory_space<vmem>>) attributes {dimension_semantics = [], scalar_prefetch = 0 : i64, scratch_operands = 2 : i64, tpu.core_type = #tpu.core_type<tc>} {
    %c0 = arith.constant 0 : index
    %c0_0 = arith.constant 0 : index
    %0 = vector.load %arg1[%c0, %c0_0] : memref<128x512xf32, #tpu.memory_space<vmem>>, vector<128x512xf32>
    %c0_1 = arith.constant 0 : index
    %c0_2 = arith.constant 0 : index
    %1 = vector.load %arg2[%c0_1, %c0_2] : memref<128x512xf32, #tpu.memory_space<vmem>>, vector<128x512xf32>
    %c0_3 = arith.constant 0 : index
    %c0_4 = arith.constant 0 : index
    %2 = vector.load %arg3[%c0_3, %c0_4] : memref<1x512xf32, #tpu.memory_space<vmem>>, vector<1x512xf32>
    %c0_5 = arith.constant 0 : index
    %c0_6 = arith.constant 0 : index
    %3 = vector.load %arg0[%c0_5, %c0_6] : memref<64x128xf32, #tpu.memory_space<vmem>>, vector<64x128xf32>
    %cst = arith.constant dense<0.000000e+00> : vector<64x512xf32>
    %4 = tpu.matmul %3, %0, %cst {dimension_numbers = #tpu.dot_dimension_numbers<[1], [0], [0], [1], [0, 0, 1, 1], [], []>} : vector<64x128xf32>, vector<128x512xf32>, vector<64x512xf32> -> vector<64x512xf32>
    %5 = vector.broadcast %2 : vector<1x512xf32> to vector<64x512xf32>
    %6 = arith.addf %4, %5 : vector<64x512xf32>
    %c0_7 = arith.constant 0 : index
    %c0_8 = arith.constant 0 : index
    %7 = vector.load %arg15[%c0_7, %c0_8] : memref<64x512xf32, #tpu.memory_space<vmem>>, vector<64x512xf32>
    tpu.vector_store %arg15[%c0_7, %c0_8], %6 {strides = array<i32>} : memref<64x512xf32, #tpu.memory_space<vmem>>, vector<64x512xf32>,
    %c0_9 = arith.constant 0 : index
    %c0_10 = arith.constant 0 : index
    %c0_11 = arith.constant 0 : index
    %8 = vector.load %arg7[%c0_9, %c0_10, %c0_11] : memref<2x8x128xf32, #tpu.memory_space<vmem>>, vector<1x8x128xf32>
    %9 = vector.shape_cast %8 : vector<1x8x128xf32> to vector<8x128xf32>
    %c0_12 = arith.constant 0 : index
    %c0_13 = arith.constant 0 : index
    %c0_14 = arith.constant 0 : index
    %10 = vector.load %arg8[%c0_12, %c0_13, %c0_14] : memref<2x8x128xf32, #tpu.memory_space<vmem>>, vector<1x8x128xf32>
    %11 = vector.shape_cast %10 : vector<1x8x128xf32> to vector<8x128xf32>
    %c0_15 = arith.constant 0 : index
    %c0_16 = arith.constant 0 : index
    %12 = vector.load %arg15[%c0_15, %c0_16] : memref<64x512xf32, #tpu.memory_space<vmem>>, vector<8x512xf32>
    %cst_17 = arith.constant dense<0.000000e+00> : vector<8x512xf32>
    %13 = tpu.matmul %9, %1, %cst_17 {dimension_numbers = #tpu.dot_dimension_numbers<[1], [0], [0], [1], [0, 0, 1, 1], [], []>} : vector<8x128xf32>, vector<128x512xf32>, vector<8x512xf32> -> vector<8x512xf32>
    %14 = arith.addf %12, %13 : vector<8x512xf32>
    %15 = vector.extract_strided_slice %14 {offsets = [0, 0], sizes = [8, 128], strides = [1, 1]} : vector<8x512xf32> to vector<8x128xf32>
    %16 = arith.negf %15 : vector<8x128xf32>
    %17 = math.exp %16 : vector<8x128xf32>
    %cst_18 = arith.constant 1.000000e+00 : f32
    %18 = vector.broadcast %cst_18 : f32 to vector<8x128xf32>
    %19 = arith.addf %18, %17 : vector<8x128xf32>
    %20 = arith.divf %18, %19 : vector<8x128xf32>
    %21 = vector.extract_strided_slice %14 {offsets = [0, 128], sizes = [8, 128], strides = [1, 1]} : vector<8x512xf32> to vector<8x128xf32>
    %22 = arith.negf %21 : vector<8x128xf32>
    %23 = math.exp %22 : vector<8x128xf32>
    %cst_19 = arith.constant 1.000000e+00 : f32
    %24 = vector.broadcast %cst_19 : f32 to vector<8x128xf32>
    %25 = arith.addf %24, %23 : vector<8x128xf32>
    %26 = arith.divf %24, %25 : vector<8x128xf32>
    %27 = vector.extract_strided_slice %14 {offsets = [0, 256], sizes = [8, 128], strides = [1, 1]} : vector<8x512xf32> to vector<8x128xf32>
    %28 = math.tanh %27 : vector<8x128xf32>
    %29 = vector.extract_strided_slice %14 {offsets = [0, 384], sizes = [8, 128], strides = [1, 1]} : vector<8x512xf32> to vector<8x128xf32>
    %30 = arith.negf %29 : vector<8x128xf32>
    %31 = math.exp %30 : vector<8x128xf32>
    %cst_20 = arith.constant 1.000000e+00 : f32
    %32 = vector.broadcast %cst_20 : f32 to vector<8x128xf32>
    %33 = arith.addf %32, %31 : vector<8x128xf32>
    %34 = arith.divf %32, %33 : vector<8x128xf32>
    %35 = arith.mulf %26, %11 : vector<8x128xf32>
    %36 = arith.mulf %20, %28 : vector<8x128xf32>
    %37 = arith.addf %35, %36 : vector<8x128xf32>
    %38 = math.tanh %37 : vector<8x128xf32>
    %39 = arith.mulf %34, %38 : vector<8x128xf32>
    %c0_21 = arith.constant 0 : index
    %c0_22 = arith.constant 0 : index
    %40 = vector.load %arg14[%c0_21, %c0_22] : memref<64x128xf32, #tpu.memory_space<vmem>>, vector<8x128xf32>
    tpu.vector_store %arg14[%c0_21, %c0_22], %39 {strides = array<i32>} : memref<64x128xf32, #tpu.memory_space<vmem>>, vector<8x128xf32>,
    %c8 = arith.constant 8 : index
    %c0_23 = arith.constant 0 : index
    %41 = vector.load %arg15[%c8, %c0_23] : memref<64x512xf32, #tpu.memory_space<vmem>>, vector<8x512xf32>
    %cst_24 = arith.constant dense<0.000000e+00> : vector<8x512xf32>
    %42 = tpu.matmul %39, %1, %cst_24 {dimension_numbers = #tpu.dot_dimension_numbers<[1], [0], [0], [1], [0, 0, 1, 1], [], []>} : vector<8x128xf32>, vector<128x512xf32>, vector<8x512xf32> -> vector<8x512xf32>
    %43 = arith.addf %41, %42 : vector<8x512xf32>
    %44 = vector.extract_strided_slice %43 {offsets = [0, 0], sizes = [8, 128], strides = [1, 1]} : vector<8x512xf32> to vector<8x128xf32>
    %45 = arith.negf %44 : vector<8x128xf32>
    %46 = math.exp %45 : vector<8x128xf32>
    %cst_25 = arith.constant 1.000000e+00 : f32
    %47 = vector.broadcast %cst_25 : f32 to vector<8x128xf32>
    %48 = arith.addf %47, %46 : vector<8x128xf32>
    %49 = arith.divf %47, %48 : vector<8x128xf32>
    %50 = vector.extract_strided_slice %43 {offsets = [0, 128], sizes = [8, 128], strides = [1, 1]} : vector<8x512xf32> to vector<8x128xf32>
    %51 = arith.negf %50 : vector<8x128xf32>
    %52 = math.exp %51 : vector<8x128xf32>
    %cst_26 = arith.constant 1.000000e+00 : f32
    %53 = vector.broadcast %cst_26 : f32 to vector<8x128xf32>
    %54 = arith.addf %53, %52 : vector<8x128xf32>
    %55 = arith.divf %53, %54 : vector<8x128xf32>
    %56 = vector.extract_strided_slice %43 {offsets = [0, 256], sizes = [8, 128], strides = [1, 1]} : vector<8x512xf32> to vector<8x128xf32>
    %57 = math.tanh %56 : vector<8x128xf32>
    %58 = vector.extract_strided_slice %43 {offsets = [0, 384], sizes = [8, 128], strides = [1, 1]} : vector<8x512xf32> to vector<8x128xf32>
    %59 = arith.negf %58 : vector<8x128xf32>
    %60 = math.exp %59 : vector<8x128xf32>
    %cst_27 = arith.constant 1.000000e+00 : f32
    %61 = vector.broadcast %cst_27 : f32 to vector<8x128xf32>
    %62 = arith.addf %61, %60 : vector<8x128xf32>
    %63 = arith.divf %61, %62 : vector<8x128xf32>
    %64 = arith.mulf %55, %37 : vector<8x128xf32>
    %65 = arith.mulf %49, %57 : vector<8x128xf32>
    %66 = arith.addf %64, %65 : vector<8x128xf32>
    %67 = math.tanh %66 : vector<8x128xf32>
    %68 = arith.mulf %63, %67 : vector<8x128xf32>
    %c8_28 = arith.constant 8 : index
    %c0_29 = arith.constant 0 : index
    %69 = vector.load %arg14[%c8_28, %c0_29] : memref<64x128xf32, #tpu.memory_space<vmem>>, vector<8x128xf32>
    tpu.vector_store %arg14[%c8_28, %c0_29], %68 {strides = array<i32>} : memref<64x128xf32, #tpu.memory_space<vmem>>, vector<8x128xf32>,
    %c16 = arith.constant 16 : index
    %c0_30 = arith.constant 0 : index
    %70 = vector.load %arg15[%c16, %c0_30] : memref<64x512xf32, #tpu.memory_space<vmem>>, vector<8x512xf32>
    %cst_31 = arith.constant dense<0.000000e+00> : vector<8x512xf32>
    %71 = tpu.matmul %68, %1, %cst_31 {dimension_numbers = #tpu.dot_dimension_numbers<[1], [0], [0], [1], [0, 0, 1, 1], [], []>} : vector<8x128xf32>, vector<128x512xf32>, vector<8x512xf32> -> vector<8x512xf32>
    %72 = arith.addf %70, %71 : vector<8x512xf32>
    %73 = vector.extract_strided_slice %72 {offsets = [0, 0], sizes = [8, 128], strides = [1, 1]} : vector<8x512xf32> to vector<8x128xf32>
    %74 = arith.negf %73 : vector<8x128xf32>
    %75 = math.exp %74 : vector<8x128xf32>
    %cst_32 = arith.constant 1.000000e+00 : f32
    %76 = vector.broadcast %cst_32 : f32 to vector<8x128xf32>
    %77 = arith.addf %76, %75 : vector<8x128xf32>
    %78 = arith.divf %76, %77 : vector<8x128xf32>
    %79 = vector.extract_strided_slice %72 {offsets = [0, 128], sizes = [8, 128], strides = [1, 1]} : vector<8x512xf32> to vector<8x128xf32>
    %80 = arith.negf %79 : vector<8x128xf32>
    %81 = math.exp %80 : vector<8x128xf32>
    %cst_33 = arith.constant 1.000000e+00 : f32
    %82 = vector.broadcast %cst_33 : f32 to vector<8x128xf32>
    %83 = arith.addf %82, %81 : vector<8x128xf32>
    %84 = arith.divf %82, %83 : vector<8x128xf32>
    %85 = vector.extract_strided_slice %72 {offsets = [0, 256], sizes = [8, 128], strides = [1, 1]} : vector<8x512xf32> to vector<8x128xf32>
    %86 = math.tanh %85 : vector<8x128xf32>
    %87 = vector.extract_strided_slice %72 {offsets = [0, 384], sizes = [8, 128], strides = [1, 1]} : vector<8x512xf32> to vector<8x128xf32>
    %88 = arith.negf %87 : vector<8x128xf32>
    %89 = math.exp %88 : vector<8x128xf32>
    %cst_34 = arith.constant 1.000000e+00 : f32
    %90 = vector.broadcast %cst_34 : f32 to vector<8x128xf32>
    %91 = arith.addf %90, %89 : vector<8x128xf32>
    %92 = arith.divf %90, %91 : vector<8x128xf32>
    %93 = arith.mulf %84, %66 : vector<8x128xf32>
    %94 = arith.mulf %78, %86 : vector<8x128xf32>
    %95 = arith.addf %93, %94 : vector<8x128xf32>
    %96 = math.tanh %95 : vector<8x128xf32>
    %97 = arith.mulf %92, %96 : vector<8x128xf32>
    %c16_35 = arith.constant 16 : index
    %c0_36 = arith.constant 0 : index
    %98 = vector.load %arg14[%c16_35, %c0_36] : memref<64x128xf32, #tpu.memory_space<vmem>>, vector<8x128xf32>
    tpu.vector_store %arg14[%c16_35, %c0_36], %97 {strides = array<i32>} : memref<64x128xf32, #tpu.memory_space<vmem>>, vector<8x128xf32>,
    %c24 = arith.constant 24 : index
    %c0_37 = arith.constant 0 : index
    %99 = vector.load %arg15[%c24, %c0_37] : memref<64x512xf32, #tpu.memory_space<vmem>>, vector<8x512xf32>
    %cst_38 = arith.constant dense<0.000000e+00> : vector<8x512xf32>
    %100 = tpu.matmul %97, %1, %cst_38 {dimension_numbers = #tpu.dot_dimension_numbers<[1], [0], [0], [1], [0, 0, 1, 1], [], []>} : vector<8x128xf32>, vector<128x512xf32>, vector<8x512xf32> -> vector<8x512xf32>
    %101 = arith.addf %99, %100 : vector<8x512xf32>
    %102 = vector.extract_strided_slice %101 {offsets = [0, 0], sizes = [8, 128], strides = [1, 1]} : vector<8x512xf32> to vector<8x128xf32>
    %103 = arith.negf %102 : vector<8x128xf32>
    %104 = math.exp %103 : vector<8x128xf32>
    %cst_39 = arith.constant 1.000000e+00 : f32
    %105 = vector.broadcast %cst_39 : f32 to vector<8x128xf32>
    %106 = arith.addf %105, %104 : vector<8x128xf32>
    %107 = arith.divf %105, %106 : vector<8x128xf32>
    %108 = vector.extract_strided_slice %101 {offsets = [0, 128], sizes = [8, 128], strides = [1, 1]} : vector<8x512xf32> to vector<8x128xf32>
    %109 = arith.negf %108 : vector<8x128xf32>
    %110 = math.exp %109 : vector<8x128xf32>
    %cst_40 = arith.constant 1.000000e+00 : f32
    %111 = vector.broadcast %cst_40 : f32 to vector<8x128xf32>
    %112 = arith.addf %111, %110 : vector<8x128xf32>
    %113 = arith.divf %111, %112 : vector<8x128xf32>
    %114 = vector.extract_strided_slice %101 {offsets = [0, 256], sizes = [8, 128], strides = [1, 1]} : vector<8x512xf32> to vector<8x128xf32>
    %115 = math.tanh %114 : vector<8x128xf32>
    %116 = vector.extract_strided_slice %101 {offsets = [0, 384], sizes = [8, 128], strides = [1, 1]} : vector<8x512xf32> to vector<8x128xf32>
    %117 = arith.negf %116 : vector<8x128xf32>
    %118 = math.exp %117 : vector<8x128xf32>
    %cst_41 = arith.constant 1.000000e+00 : f32
    %119 = vector.broadcast %cst_41 : f32 to vector<8x128xf32>
    %120 = arith.addf %119, %118 : vector<8x128xf32>
    %121 = arith.divf %119, %120 : vector<8x128xf32>
    %122 = arith.mulf %113, %95 : vector<8x128xf32>
    %123 = arith.mulf %107, %115 : vector<8x128xf32>
    %124 = arith.addf %122, %123 : vector<8x128xf32>
    %125 = math.tanh %124 : vector<8x128xf32>
    %126 = arith.mulf %121, %125 : vector<8x128xf32>
    %c24_42 = arith.constant 24 : index
    %c0_43 = arith.constant 0 : index
    %127 = vector.load %arg14[%c24_42, %c0_43] : memref<64x128xf32, #tpu.memory_space<vmem>>, vector<8x128xf32>
    tpu.vector_store %arg14[%c24_42, %c0_43], %126 {strides = array<i32>} : memref<64x128xf32, #tpu.memory_space<vmem>>, vector<8x128xf32>,
    %c32 = arith.constant 32 : index
    %c0_44 = arith.constant 0 : index
    %128 = vector.load %arg15[%c32, %c0_44] : memref<64x512xf32, #tpu.memory_space<vmem>>, vector<8x512xf32>
    %cst_45 = arith.constant dense<0.000000e+00> : vector<8x512xf32>
    %129 = tpu.matmul %126, %1, %cst_45 {dimension_numbers = #tpu.dot_dimension_numbers<[1], [0], [0], [1], [0, 0, 1, 1], [], []>} : vector<8x128xf32>, vector<128x512xf32>, vector<8x512xf32> -> vector<8x512xf32>
    %130 = arith.addf %128, %129 : vector<8x512xf32>
    %131 = vector.extract_strided_slice %130 {offsets = [0, 0], sizes = [8, 128], strides = [1, 1]} : vector<8x512xf32> to vector<8x128xf32>
    %132 = arith.negf %131 : vector<8x128xf32>
    %133 = math.exp %132 : vector<8x128xf32>
    %cst_46 = arith.constant 1.000000e+00 : f32
    %134 = vector.broadcast %cst_46 : f32 to vector<8x128xf32>
    %135 = arith.addf %134, %133 : vector<8x128xf32>
    %136 = arith.divf %134, %135 : vector<8x128xf32>
    %137 = vector.extract_strided_slice %130 {offsets = [0, 128], sizes = [8, 128], strides = [1, 1]} : vector<8x512xf32> to vector<8x128xf32>
    %138 = arith.negf %137 : vector<8x128xf32>
    %139 = math.exp %138 : vector<8x128xf32>
    %cst_47 = arith.constant 1.000000e+00 : f32
    %140 = vector.broadcast %cst_47 : f32 to vector<8x128xf32>
    %141 = arith.addf %140, %139 : vector<8x128xf32>
    %142 = arith.divf %140, %141 : vector<8x128xf32>
    %143 = vector.extract_strided_slice %130 {offsets = [0, 256], sizes = [8, 128], strides = [1, 1]} : vector<8x512xf32> to vector<8x128xf32>
    %144 = math.tanh %143 : vector<8x128xf32>
    %145 = vector.extract_strided_slice %130 {offsets = [0, 384], sizes = [8, 128], strides = [1, 1]} : vector<8x512xf32> to vector<8x128xf32>
    %146 = arith.negf %145 : vector<8x128xf32>
    %147 = math.exp %146 : vector<8x128xf32>
    %cst_48 = arith.constant 1.000000e+00 : f32
    %148 = vector.broadcast %cst_48 : f32 to vector<8x128xf32>
    %149 = arith.addf %148, %147 : vector<8x128xf32>
    %150 = arith.divf %148, %149 : vector<8x128xf32>
    %151 = arith.mulf %142, %124 : vector<8x128xf32>
    %152 = arith.mulf %136, %144 : vector<8x128xf32>
    %153 = arith.addf %151, %152 : vector<8x128xf32>
    %154 = math.tanh %153 : vector<8x128xf32>
    %155 = arith.mulf %150, %154 : vector<8x128xf32>
    %c32_49 = arith.constant 32 : index
    %c0_50 = arith.constant 0 : index
    %156 = vector.load %arg14[%c32_49, %c0_50] : memref<64x128xf32, #tpu.memory_space<vmem>>, vector<8x128xf32>
    tpu.vector_store %arg14[%c32_49, %c0_50], %155 {strides = array<i32>} : memref<64x128xf32, #tpu.memory_space<vmem>>, vector<8x128xf32>,
    %c40 = arith.constant 40 : index
    %c0_51 = arith.constant 0 : index
    %157 = vector.load %arg15[%c40, %c0_51] : memref<64x512xf32, #tpu.memory_space<vmem>>, vector<8x512xf32>
    %cst_52 = arith.constant dense<0.000000e+00> : vector<8x512xf32>
    %158 = tpu.matmul %155, %1, %cst_52 {dimension_numbers = #tpu.dot_dimension_numbers<[1], [0], [0], [1], [0, 0, 1, 1], [], []>} : vector<8x128xf32>, vector<128x512xf32>, vector<8x512xf32> -> vector<8x512xf32>
    %159 = arith.addf %157, %158 : vector<8x512xf32>
    %160 = vector.extract_strided_slice %159 {offsets = [0, 0], sizes = [8, 128], strides = [1, 1]} : vector<8x512xf32> to vector<8x128xf32>
    %161 = arith.negf %160 : vector<8x128xf32>
    %162 = math.exp %161 : vector<8x128xf32>
    %cst_53 = arith.constant 1.000000e+00 : f32
    %163 = vector.broadcast %cst_53 : f32 to vector<8x128xf32>
    %164 = arith.addf %163, %162 : vector<8x128xf32>
    %165 = arith.divf %163, %164 : vector<8x128xf32>
    %166 = vector.extract_strided_slice %159 {offsets = [0, 128], sizes = [8, 128], strides = [1, 1]} : vector<8x512xf32> to vector<8x128xf32>
    %167 = arith.negf %166 : vector<8x128xf32>
    %168 = math.exp %167 : vector<8x128xf32>
    %cst_54 = arith.constant 1.000000e+00 : f32
    %169 = vector.broadcast %cst_54 : f32 to vector<8x128xf32>
    %170 = arith.addf %169, %168 : vector<8x128xf32>
    %171 = arith.divf %169, %170 : vector<8x128xf32>
    %172 = vector.extract_strided_slice %159 {offsets = [0, 256], sizes = [8, 128], strides = [1, 1]} : vector<8x512xf32> to vector<8x128xf32>
    %173 = math.tanh %172 : vector<8x128xf32>
    %174 = vector.extract_strided_slice %159 {offsets = [0, 384], sizes = [8, 128], strides = [1, 1]} : vector<8x512xf32> to vector<8x128xf32>
    %175 = arith.negf %174 : vector<8x128xf32>
    %176 = math.exp %175 : vector<8x128xf32>
    %cst_55 = arith.constant 1.000000e+00 : f32
    %177 = vector.broadcast %cst_55 : f32 to vector<8x128xf32>
    %178 = arith.addf %177, %176 : vector<8x128xf32>
    %179 = arith.divf %177, %178 : vector<8x128xf32>
    %180 = arith.mulf %171, %153 : vector<8x128xf32>
    %181 = arith.mulf %165, %173 : vector<8x128xf32>
    %182 = arith.addf %180, %181 : vector<8x128xf32>
    %183 = math.tanh %182 : vector<8x128xf32>
    %184 = arith.mulf %179, %183 : vector<8x128xf32>
    %c40_56 = arith.constant 40 : index
    %c0_57 = arith.constant 0 : index
    %185 = vector.load %arg14[%c40_56, %c0_57] : memref<64x128xf32, #tpu.memory_space<vmem>>, vector<8x128xf32>
    tpu.vector_store %arg14[%c40_56, %c0_57], %184 {strides = array<i32>} : memref<64x128xf32, #tpu.memory_space<vmem>>, vector<8x128xf32>,
    %c48 = arith.constant 48 : index
    %c0_58 = arith.constant 0 : index
    %186 = vector.load %arg15[%c48, %c0_58] : memref<64x512xf32, #tpu.memory_space<vmem>>, vector<8x512xf32>
    %cst_59 = arith.constant dense<0.000000e+00> : vector<8x512xf32>
    %187 = tpu.matmul %184, %1, %cst_59 {dimension_numbers = #tpu.dot_dimension_numbers<[1], [0], [0], [1], [0, 0, 1, 1], [], []>} : vector<8x128xf32>, vector<128x512xf32>, vector<8x512xf32> -> vector<8x512xf32>
    %188 = arith.addf %186, %187 : vector<8x512xf32>
    %189 = vector.extract_strided_slice %188 {offsets = [0, 0], sizes = [8, 128], strides = [1, 1]} : vector<8x512xf32> to vector<8x128xf32>
    %190 = arith.negf %189 : vector<8x128xf32>
    %191 = math.exp %190 : vector<8x128xf32>
    %cst_60 = arith.constant 1.000000e+00 : f32
    %192 = vector.broadcast %cst_60 : f32 to vector<8x128xf32>
    %193 = arith.addf %192, %191 : vector<8x128xf32>
    %194 = arith.divf %192, %193 : vector<8x128xf32>
    %195 = vector.extract_strided_slice %188 {offsets = [0, 128], sizes = [8, 128], strides = [1, 1]} : vector<8x512xf32> to vector<8x128xf32>
    %196 = arith.negf %195 : vector<8x128xf32>
    %197 = math.exp %196 : vector<8x128xf32>
    %cst_61 = arith.constant 1.000000e+00 : f32
    %198 = vector.broadcast %cst_61 : f32 to vector<8x128xf32>
    %199 = arith.addf %198, %197 : vector<8x128xf32>
    %200 = arith.divf %198, %199 : vector<8x128xf32>
    %201 = vector.extract_strided_slice %188 {offsets = [0, 256], sizes = [8, 128], strides = [1, 1]} : vector<8x512xf32> to vector<8x128xf32>
    %202 = math.tanh %201 : vector<8x128xf32>
    %203 = vector.extract_strided_slice %188 {offsets = [0, 384], sizes = [8, 128], strides = [1, 1]} : vector<8x512xf32> to vector<8x128xf32>
    %204 = arith.negf %203 : vector<8x128xf32>
    %205 = math.exp %204 : vector<8x128xf32>
    %cst_62 = arith.constant 1.000000e+00 : f32
    %206 = vector.broadcast %cst_62 : f32 to vector<8x128xf32>
    %207 = arith.addf %206, %205 : vector<8x128xf32>
    %208 = arith.divf %206, %207 : vector<8x128xf32>
    %209 = arith.mulf %200, %182 : vector<8x128xf32>
    %210 = arith.mulf %194, %202 : vector<8x128xf32>
    %211 = arith.addf %209, %210 : vector<8x128xf32>
    %212 = math.tanh %211 : vector<8x128xf32>
    %213 = arith.mulf %208, %212 : vector<8x128xf32>
    %c48_63 = arith.constant 48 : index
    %c0_64 = arith.constant 0 : index
    %214 = vector.load %arg14[%c48_63, %c0_64] : memref<64x128xf32, #tpu.memory_space<vmem>>, vector<8x128xf32>
    tpu.vector_store %arg14[%c48_63, %c0_64], %213 {strides = array<i32>} : memref<64x128xf32, #tpu.memory_space<vmem>>, vector<8x128xf32>,
    %c56 = arith.constant 56 : index
    %c0_65 = arith.constant 0 : index
    %215 = vector.load %arg15[%c56, %c0_65] : memref<64x512xf32, #tpu.memory_space<vmem>>, vector<8x512xf32>
    %cst_66 = arith.constant dense<0.000000e+00> : vector<8x512xf32>
    %216 = tpu.matmul %213, %1, %cst_66 {dimension_numbers = #tpu.dot_dimension_numbers<[1], [0], [0], [1], [0, 0, 1, 1], [], []>} : vector<8x128xf32>, vector<128x512xf32>, vector<8x512xf32> -> vector<8x512xf32>
    %217 = arith.addf %215, %216 : vector<8x512xf32>
    %218 = vector.extract_strided_slice %217 {offsets = [0, 0], sizes = [8, 128], strides = [1, 1]} : vector<8x512xf32> to vector<8x128xf32>
    %219 = arith.negf %218 : vector<8x128xf32>
    %220 = math.exp %219 : vector<8x128xf32>
    %cst_67 = arith.constant 1.000000e+00 : f32
    %221 = vector.broadcast %cst_67 : f32 to vector<8x128xf32>
    %222 = arith.addf %221, %220 : vector<8x128xf32>
    %223 = arith.divf %221, %222 : vector<8x128xf32>
    %224 = vector.extract_strided_slice %217 {offsets = [0, 128], sizes = [8, 128], strides = [1, 1]} : vector<8x512xf32> to vector<8x128xf32>
    %225 = arith.negf %224 : vector<8x128xf32>
    %226 = math.exp %225 : vector<8x128xf32>
    %cst_68 = arith.constant 1.000000e+00 : f32
    %227 = vector.broadcast %cst_68 : f32 to vector<8x128xf32>
    %228 = arith.addf %227, %226 : vector<8x128xf32>
    %229 = arith.divf %227, %228 : vector<8x128xf32>
    %230 = vector.extract_strided_slice %217 {offsets = [0, 256], sizes = [8, 128], strides = [1, 1]} : vector<8x512xf32> to vector<8x128xf32>
    %231 = math.tanh %230 : vector<8x128xf32>
    %232 = vector.extract_strided_slice %217 {offsets = [0, 384], sizes = [8, 128], strides = [1, 1]} : vector<8x512xf32> to vector<8x128xf32>
    %233 = arith.negf %232 : vector<8x128xf32>
    %234 = math.exp %233 : vector<8x128xf32>
    %cst_69 = arith.constant 1.000000e+00 : f32
    %235 = vector.broadcast %cst_69 : f32 to vector<8x128xf32>
    %236 = arith.addf %235, %234 : vector<8x128xf32>
    %237 = arith.divf %235, %236 : vector<8x128xf32>
    %238 = arith.mulf %229, %211 : vector<8x128xf32>
    %239 = arith.mulf %223, %231 : vector<8x128xf32>
    %240 = arith.addf %238, %239 : vector<8x128xf32>
    %241 = math.tanh %240 : vector<8x128xf32>
    %242 = arith.mulf %237, %241 : vector<8x128xf32>
    %c56_70 = arith.constant 56 : index
    %c0_71 = arith.constant 0 : index
    %243 = vector.load %arg14[%c56_70, %c0_71] : memref<64x128xf32, #tpu.memory_space<vmem>>, vector<8x128xf32>
    tpu.vector_store %arg14[%c56_70, %c0_71], %242 {strides = array<i32>} : memref<64x128xf32, #tpu.memory_space<vmem>>, vector<8x128xf32>,
    %c0_72 = arith.constant 0 : index
    %c0_73 = arith.constant 0 : index
    %c0_74 = arith.constant 0 : index
    %244 = vector.load %arg12[%c0_72, %c0_73, %c0_74] : memref<2x8x128xf32, #tpu.memory_space<vmem>>, vector<1x8x128xf32>
    %245 = vector.shape_cast %244 : vector<1x8x128xf32> to vector<8x128xf32>
    %246 = vector.shape_cast %242 : vector<8x128xf32> to vector<1x8x128xf32>
    tpu.vector_store %arg12[%c0_72, %c0_73, %c0_74], %246 {strides = array<i32>} : memref<2x8x128xf32, #tpu.memory_space<vmem>>, vector<1x8x128xf32>,
    %c0_75 = arith.constant 0 : index
    %c0_76 = arith.constant 0 : index
    %c0_77 = arith.constant 0 : index
    %247 = vector.load %arg13[%c0_75, %c0_76, %c0_77] : memref<2x8x128xf32, #tpu.memory_space<vmem>>, vector<1x8x128xf32>
    %248 = vector.shape_cast %247 : vector<1x8x128xf32> to vector<8x128xf32>
    %249 = vector.shape_cast %240 : vector<8x128xf32> to vector<1x8x128xf32>
    tpu.vector_store %arg13[%c0_75, %c0_76, %c0_77], %249 {strides = array<i32>} : memref<2x8x128xf32, #tpu.memory_space<vmem>>, vector<1x8x128xf32>,
    %c0_78 = arith.constant 0 : index
    %c0_79 = arith.constant 0 : index
    %250 = vector.load %arg4[%c0_78, %c0_79] : memref<128x512xf32, #tpu.memory_space<vmem>>, vector<128x512xf32>
    %c0_80 = arith.constant 0 : index
    %c0_81 = arith.constant 0 : index
    %251 = vector.load %arg5[%c0_80, %c0_81] : memref<128x512xf32, #tpu.memory_space<vmem>>, vector<128x512xf32>
    %c0_82 = arith.constant 0 : index
    %c0_83 = arith.constant 0 : index
    %252 = vector.load %arg6[%c0_82, %c0_83] : memref<1x512xf32, #tpu.memory_space<vmem>>, vector<1x512xf32>
    %c0_84 = arith.constant 0 : index
    %c0_85 = arith.constant 0 : index
    %253 = vector.load %arg14[%c0_84, %c0_85] : memref<64x128xf32, #tpu.memory_space<vmem>>, vector<64x128xf32>
    %cst_86 = arith.constant dense<0.000000e+00> : vector<64x512xf32>
    %254 = tpu.matmul %253, %250, %cst_86 {dimension_numbers = #tpu.dot_dimension_numbers<[1], [0], [0], [1], [0, 0, 1, 1], [], []>} : vector<64x128xf32>, vector<128x512xf32>, vector<64x512xf32> -> vector<64x512xf32>
    %255 = vector.broadcast %252 : vector<1x512xf32> to vector<64x512xf32>
    %256 = arith.addf %254, %255 : vector<64x512xf32>
    %c0_87 = arith.constant 0 : index
    %c0_88 = arith.constant 0 : index
    %257 = vector.load %arg15[%c0_87, %c0_88] : memref<64x512xf32, #tpu.memory_space<vmem>>, vector<64x512xf32>
    tpu.vector_store %arg15[%c0_87, %c0_88], %256 {strides = array<i32>} : memref<64x512xf32, #tpu.memory_space<vmem>>, vector<64x512xf32>,
    %c1 = arith.constant 1 : index
    %c0_89 = arith.constant 0 : index
    %c0_90 = arith.constant 0 : index
    %258 = vector.load %arg7[%c1, %c0_89, %c0_90] : memref<2x8x128xf32, #tpu.memory_space<vmem>>, vector<1x8x128xf32>
    %259 = vector.shape_cast %258 : vector<1x8x128xf32> to vector<8x128xf32>
    %c1_91 = arith.constant 1 : index
    %c0_92 = arith.constant 0 : index
    %c0_93 = arith.constant 0 : index
    %260 = vector.load %arg8[%c1_91, %c0_92, %c0_93] : memref<2x8x128xf32, #tpu.memory_space<vmem>>, vector<1x8x128xf32>
    %261 = vector.shape_cast %260 : vector<1x8x128xf32> to vector<8x128xf32>
    %c0_94 = arith.constant 0 : index
    %c0_95 = arith.constant 0 : index
    %262 = vector.load %arg15[%c0_94, %c0_95] : memref<64x512xf32, #tpu.memory_space<vmem>>, vector<8x512xf32>
    %cst_96 = arith.constant dense<0.000000e+00> : vector<8x512xf32>
    %263 = tpu.matmul %259, %251, %cst_96 {dimension_numbers = #tpu.dot_dimension_numbers<[1], [0], [0], [1], [0, 0, 1, 1], [], []>} : vector<8x128xf32>, vector<128x512xf32>, vector<8x512xf32> -> vector<8x512xf32>
    %264 = arith.addf %262, %263 : vector<8x512xf32>
    %265 = vector.extract_strided_slice %264 {offsets = [0, 0], sizes = [8, 128], strides = [1, 1]} : vector<8x512xf32> to vector<8x128xf32>
    %266 = arith.negf %265 : vector<8x128xf32>
    %267 = math.exp %266 : vector<8x128xf32>
    %cst_97 = arith.constant 1.000000e+00 : f32
    %268 = vector.broadcast %cst_97 : f32 to vector<8x128xf32>
    %269 = arith.addf %268, %267 : vector<8x128xf32>
    %270 = arith.divf %268, %269 : vector<8x128xf32>
    %271 = vector.extract_strided_slice %264 {offsets = [0, 128], sizes = [8, 128], strides = [1, 1]} : vector<8x512xf32> to vector<8x128xf32>
    %272 = arith.negf %271 : vector<8x128xf32>
    %273 = math.exp %272 : vector<8x128xf32>
    %cst_98 = arith.constant 1.000000e+00 : f32
    %274 = vector.broadcast %cst_98 : f32 to vector<8x128xf32>
    %275 = arith.addf %274, %273 : vector<8x128xf32>
    %276 = arith.divf %274, %275 : vector<8x128xf32>
    %277 = vector.extract_strided_slice %264 {offsets = [0, 256], sizes = [8, 128], strides = [1, 1]} : vector<8x512xf32> to vector<8x128xf32>
    %278 = math.tanh %277 : vector<8x128xf32>
    %279 = vector.extract_strided_slice %264 {offsets = [0, 384], sizes = [8, 128], strides = [1, 1]} : vector<8x512xf32> to vector<8x128xf32>
    %280 = arith.negf %279 : vector<8x128xf32>
    %281 = math.exp %280 : vector<8x128xf32>
    %cst_99 = arith.constant 1.000000e+00 : f32
    %282 = vector.broadcast %cst_99 : f32 to vector<8x128xf32>
    %283 = arith.addf %282, %281 : vector<8x128xf32>
    %284 = arith.divf %282, %283 : vector<8x128xf32>
    %285 = arith.mulf %276, %261 : vector<8x128xf32>
    %286 = arith.mulf %270, %278 : vector<8x128xf32>
    %287 = arith.addf %285, %286 : vector<8x128xf32>
    %288 = math.tanh %287 : vector<8x128xf32>
    %289 = arith.mulf %284, %288 : vector<8x128xf32>
    %c0_100 = arith.constant 0 : index
    %c0_101 = arith.constant 0 : index
    %290 = vector.load %arg14[%c0_100, %c0_101] : memref<64x128xf32, #tpu.memory_space<vmem>>, vector<8x128xf32>
    tpu.vector_store %arg14[%c0_100, %c0_101], %289 {strides = array<i32>} : memref<64x128xf32, #tpu.memory_space<vmem>>, vector<8x128xf32>,
    %c8_102 = arith.constant 8 : index
    %c0_103 = arith.constant 0 : index
    %291 = vector.load %arg15[%c8_102, %c0_103] : memref<64x512xf32, #tpu.memory_space<vmem>>, vector<8x512xf32>
    %cst_104 = arith.constant dense<0.000000e+00> : vector<8x512xf32>
    %292 = tpu.matmul %289, %251, %cst_104 {dimension_numbers = #tpu.dot_dimension_numbers<[1], [0], [0], [1], [0, 0, 1, 1], [], []>} : vector<8x128xf32>, vector<128x512xf32>, vector<8x512xf32> -> vector<8x512xf32>
    %293 = arith.addf %291, %292 : vector<8x512xf32>
    %294 = vector.extract_strided_slice %293 {offsets = [0, 0], sizes = [8, 128], strides = [1, 1]} : vector<8x512xf32> to vector<8x128xf32>
    %295 = arith.negf %294 : vector<8x128xf32>
    %296 = math.exp %295 : vector<8x128xf32>
    %cst_105 = arith.constant 1.000000e+00 : f32
    %297 = vector.broadcast %cst_105 : f32 to vector<8x128xf32>
    %298 = arith.addf %297, %296 : vector<8x128xf32>
    %299 = arith.divf %297, %298 : vector<8x128xf32>
    %300 = vector.extract_strided_slice %293 {offsets = [0, 128], sizes = [8, 128], strides = [1, 1]} : vector<8x512xf32> to vector<8x128xf32>
    %301 = arith.negf %300 : vector<8x128xf32>
    %302 = math.exp %301 : vector<8x128xf32>
    %cst_106 = arith.constant 1.000000e+00 : f32
    %303 = vector.broadcast %cst_106 : f32 to vector<8x128xf32>
    %304 = arith.addf %303, %302 : vector<8x128xf32>
    %305 = arith.divf %303, %304 : vector<8x128xf32>
    %306 = vector.extract_strided_slice %293 {offsets = [0, 256], sizes = [8, 128], strides = [1, 1]} : vector<8x512xf32> to vector<8x128xf32>
    %307 = math.tanh %306 : vector<8x128xf32>
    %308 = vector.extract_strided_slice %293 {offsets = [0, 384], sizes = [8, 128], strides = [1, 1]} : vector<8x512xf32> to vector<8x128xf32>
    %309 = arith.negf %308 : vector<8x128xf32>
    %310 = math.exp %309 : vector<8x128xf32>
    %cst_107 = arith.constant 1.000000e+00 : f32
    %311 = vector.broadcast %cst_107 : f32 to vector<8x128xf32>
    %312 = arith.addf %311, %310 : vector<8x128xf32>
    %313 = arith.divf %311, %312 : vector<8x128xf32>
    %314 = arith.mulf %305, %287 : vector<8x128xf32>
    %315 = arith.mulf %299, %307 : vector<8x128xf32>
    %316 = arith.addf %314, %315 : vector<8x128xf32>
    %317 = math.tanh %316 : vector<8x128xf32>
    %318 = arith.mulf %313, %317 : vector<8x128xf32>
    %c8_108 = arith.constant 8 : index
    %c0_109 = arith.constant 0 : index
    %319 = vector.load %arg14[%c8_108, %c0_109] : memref<64x128xf32, #tpu.memory_space<vmem>>, vector<8x128xf32>
    tpu.vector_store %arg14[%c8_108, %c0_109], %318 {strides = array<i32>} : memref<64x128xf32, #tpu.memory_space<vmem>>, vector<8x128xf32>,
    %c16_110 = arith.constant 16 : index
    %c0_111 = arith.constant 0 : index
    %320 = vector.load %arg15[%c16_110, %c0_111] : memref<64x512xf32, #tpu.memory_space<vmem>>, vector<8x512xf32>
    %cst_112 = arith.constant dense<0.000000e+00> : vector<8x512xf32>
    %321 = tpu.matmul %318, %251, %cst_112 {dimension_numbers = #tpu.dot_dimension_numbers<[1], [0], [0], [1], [0, 0, 1, 1], [], []>} : vector<8x128xf32>, vector<128x512xf32>, vector<8x512xf32> -> vector<8x512xf32>
    %322 = arith.addf %320, %321 : vector<8x512xf32>
    %323 = vector.extract_strided_slice %322 {offsets = [0, 0], sizes = [8, 128], strides = [1, 1]} : vector<8x512xf32> to vector<8x128xf32>
    %324 = arith.negf %323 : vector<8x128xf32>
    %325 = math.exp %324 : vector<8x128xf32>
    %cst_113 = arith.constant 1.000000e+00 : f32
    %326 = vector.broadcast %cst_113 : f32 to vector<8x128xf32>
    %327 = arith.addf %326, %325 : vector<8x128xf32>
    %328 = arith.divf %326, %327 : vector<8x128xf32>
    %329 = vector.extract_strided_slice %322 {offsets = [0, 128], sizes = [8, 128], strides = [1, 1]} : vector<8x512xf32> to vector<8x128xf32>
    %330 = arith.negf %329 : vector<8x128xf32>
    %331 = math.exp %330 : vector<8x128xf32>
    %cst_114 = arith.constant 1.000000e+00 : f32
    %332 = vector.broadcast %cst_114 : f32 to vector<8x128xf32>
    %333 = arith.addf %332, %331 : vector<8x128xf32>
    %334 = arith.divf %332, %333 : vector<8x128xf32>
    %335 = vector.extract_strided_slice %322 {offsets = [0, 256], sizes = [8, 128], strides = [1, 1]} : vector<8x512xf32> to vector<8x128xf32>
    %336 = math.tanh %335 : vector<8x128xf32>
    %337 = vector.extract_strided_slice %322 {offsets = [0, 384], sizes = [8, 128], strides = [1, 1]} : vector<8x512xf32> to vector<8x128xf32>
    %338 = arith.negf %337 : vector<8x128xf32>
    %339 = math.exp %338 : vector<8x128xf32>
    %cst_115 = arith.constant 1.000000e+00 : f32
    %340 = vector.broadcast %cst_115 : f32 to vector<8x128xf32>
    %341 = arith.addf %340, %339 : vector<8x128xf32>
    %342 = arith.divf %340, %341 : vector<8x128xf32>
    %343 = arith.mulf %334, %316 : vector<8x128xf32>
    %344 = arith.mulf %328, %336 : vector<8x128xf32>
    %345 = arith.addf %343, %344 : vector<8x128xf32>
    %346 = math.tanh %345 : vector<8x128xf32>
    %347 = arith.mulf %342, %346 : vector<8x128xf32>
    %c16_116 = arith.constant 16 : index
    %c0_117 = arith.constant 0 : index
    %348 = vector.load %arg14[%c16_116, %c0_117] : memref<64x128xf32, #tpu.memory_space<vmem>>, vector<8x128xf32>
    tpu.vector_store %arg14[%c16_116, %c0_117], %347 {strides = array<i32>} : memref<64x128xf32, #tpu.memory_space<vmem>>, vector<8x128xf32>,
    %c24_118 = arith.constant 24 : index
    %c0_119 = arith.constant 0 : index
    %349 = vector.load %arg15[%c24_118, %c0_119] : memref<64x512xf32, #tpu.memory_space<vmem>>, vector<8x512xf32>
    %cst_120 = arith.constant dense<0.000000e+00> : vector<8x512xf32>
    %350 = tpu.matmul %347, %251, %cst_120 {dimension_numbers = #tpu.dot_dimension_numbers<[1], [0], [0], [1], [0, 0, 1, 1], [], []>} : vector<8x128xf32>, vector<128x512xf32>, vector<8x512xf32> -> vector<8x512xf32>
    %351 = arith.addf %349, %350 : vector<8x512xf32>
    %352 = vector.extract_strided_slice %351 {offsets = [0, 0], sizes = [8, 128], strides = [1, 1]} : vector<8x512xf32> to vector<8x128xf32>
    %353 = arith.negf %352 : vector<8x128xf32>
    %354 = math.exp %353 : vector<8x128xf32>
    %cst_121 = arith.constant 1.000000e+00 : f32
    %355 = vector.broadcast %cst_121 : f32 to vector<8x128xf32>
    %356 = arith.addf %355, %354 : vector<8x128xf32>
    %357 = arith.divf %355, %356 : vector<8x128xf32>
    %358 = vector.extract_strided_slice %351 {offsets = [0, 128], sizes = [8, 128], strides = [1, 1]} : vector<8x512xf32> to vector<8x128xf32>
    %359 = arith.negf %358 : vector<8x128xf32>
    %360 = math.exp %359 : vector<8x128xf32>
    %cst_122 = arith.constant 1.000000e+00 : f32
    %361 = vector.broadcast %cst_122 : f32 to vector<8x128xf32>
    %362 = arith.addf %361, %360 : vector<8x128xf32>
    %363 = arith.divf %361, %362 : vector<8x128xf32>
    %364 = vector.extract_strided_slice %351 {offsets = [0, 256], sizes = [8, 128], strides = [1, 1]} : vector<8x512xf32> to vector<8x128xf32>
    %365 = math.tanh %364 : vector<8x128xf32>
    %366 = vector.extract_strided_slice %351 {offsets = [0, 384], sizes = [8, 128], strides = [1, 1]} : vector<8x512xf32> to vector<8x128xf32>
    %367 = arith.negf %366 : vector<8x128xf32>
    %368 = math.exp %367 : vector<8x128xf32>
    %cst_123 = arith.constant 1.000000e+00 : f32
    %369 = vector.broadcast %cst_123 : f32 to vector<8x128xf32>
    %370 = arith.addf %369, %368 : vector<8x128xf32>
    %371 = arith.divf %369, %370 : vector<8x128xf32>
    %372 = arith.mulf %363, %345 : vector<8x128xf32>
    %373 = arith.mulf %357, %365 : vector<8x128xf32>
    %374 = arith.addf %372, %373 : vector<8x128xf32>
    %375 = math.tanh %374 : vector<8x128xf32>
    %376 = arith.mulf %371, %375 : vector<8x128xf32>
    %c24_124 = arith.constant 24 : index
    %c0_125 = arith.constant 0 : index
    %377 = vector.load %arg14[%c24_124, %c0_125] : memref<64x128xf32, #tpu.memory_space<vmem>>, vector<8x128xf32>
    tpu.vector_store %arg14[%c24_124, %c0_125], %376 {strides = array<i32>} : memref<64x128xf32, #tpu.memory_space<vmem>>, vector<8x128xf32>,
    %c32_126 = arith.constant 32 : index
    %c0_127 = arith.constant 0 : index
    %378 = vector.load %arg15[%c32_126, %c0_127] : memref<64x512xf32, #tpu.memory_space<vmem>>, vector<8x512xf32>
    %cst_128 = arith.constant dense<0.000000e+00> : vector<8x512xf32>
    %379 = tpu.matmul %376, %251, %cst_128 {dimension_numbers = #tpu.dot_dimension_numbers<[1], [0], [0], [1], [0, 0, 1, 1], [], []>} : vector<8x128xf32>, vector<128x512xf32>, vector<8x512xf32> -> vector<8x512xf32>
    %380 = arith.addf %378, %379 : vector<8x512xf32>
    %381 = vector.extract_strided_slice %380 {offsets = [0, 0], sizes = [8, 128], strides = [1, 1]} : vector<8x512xf32> to vector<8x128xf32>
    %382 = arith.negf %381 : vector<8x128xf32>
    %383 = math.exp %382 : vector<8x128xf32>
    %cst_129 = arith.constant 1.000000e+00 : f32
    %384 = vector.broadcast %cst_129 : f32 to vector<8x128xf32>
    %385 = arith.addf %384, %383 : vector<8x128xf32>
    %386 = arith.divf %384, %385 : vector<8x128xf32>
    %387 = vector.extract_strided_slice %380 {offsets = [0, 128], sizes = [8, 128], strides = [1, 1]} : vector<8x512xf32> to vector<8x128xf32>
    %388 = arith.negf %387 : vector<8x128xf32>
    %389 = math.exp %388 : vector<8x128xf32>
    %cst_130 = arith.constant 1.000000e+00 : f32
    %390 = vector.broadcast %cst_130 : f32 to vector<8x128xf32>
    %391 = arith.addf %390, %389 : vector<8x128xf32>
    %392 = arith.divf %390, %391 : vector<8x128xf32>
    %393 = vector.extract_strided_slice %380 {offsets = [0, 256], sizes = [8, 128], strides = [1, 1]} : vector<8x512xf32> to vector<8x128xf32>
    %394 = math.tanh %393 : vector<8x128xf32>
    %395 = vector.extract_strided_slice %380 {offsets = [0, 384], sizes = [8, 128], strides = [1, 1]} : vector<8x512xf32> to vector<8x128xf32>
    %396 = arith.negf %395 : vector<8x128xf32>
    %397 = math.exp %396 : vector<8x128xf32>
    %cst_131 = arith.constant 1.000000e+00 : f32
    %398 = vector.broadcast %cst_131 : f32 to vector<8x128xf32>
    %399 = arith.addf %398, %397 : vector<8x128xf32>
    %400 = arith.divf %398, %399 : vector<8x128xf32>
    %401 = arith.mulf %392, %374 : vector<8x128xf32>
    %402 = arith.mulf %386, %394 : vector<8x128xf32>
    %403 = arith.addf %401, %402 : vector<8x128xf32>
    %404 = math.tanh %403 : vector<8x128xf32>
    %405 = arith.mulf %400, %404 : vector<8x128xf32>
    %c32_132 = arith.constant 32 : index
    %c0_133 = arith.constant 0 : index
    %406 = vector.load %arg14[%c32_132, %c0_133] : memref<64x128xf32, #tpu.memory_space<vmem>>, vector<8x128xf32>
    tpu.vector_store %arg14[%c32_132, %c0_133], %405 {strides = array<i32>} : memref<64x128xf32, #tpu.memory_space<vmem>>, vector<8x128xf32>,
    %c40_134 = arith.constant 40 : index
    %c0_135 = arith.constant 0 : index
    %407 = vector.load %arg15[%c40_134, %c0_135] : memref<64x512xf32, #tpu.memory_space<vmem>>, vector<8x512xf32>
    %cst_136 = arith.constant dense<0.000000e+00> : vector<8x512xf32>
    %408 = tpu.matmul %405, %251, %cst_136 {dimension_numbers = #tpu.dot_dimension_numbers<[1], [0], [0], [1], [0, 0, 1, 1], [], []>} : vector<8x128xf32>, vector<128x512xf32>, vector<8x512xf32> -> vector<8x512xf32>
    %409 = arith.addf %407, %408 : vector<8x512xf32>
    %410 = vector.extract_strided_slice %409 {offsets = [0, 0], sizes = [8, 128], strides = [1, 1]} : vector<8x512xf32> to vector<8x128xf32>
    %411 = arith.negf %410 : vector<8x128xf32>
    %412 = math.exp %411 : vector<8x128xf32>
    %cst_137 = arith.constant 1.000000e+00 : f32
    %413 = vector.broadcast %cst_137 : f32 to vector<8x128xf32>
    %414 = arith.addf %413, %412 : vector<8x128xf32>
    %415 = arith.divf %413, %414 : vector<8x128xf32>
    %416 = vector.extract_strided_slice %409 {offsets = [0, 128], sizes = [8, 128], strides = [1, 1]} : vector<8x512xf32> to vector<8x128xf32>
    %417 = arith.negf %416 : vector<8x128xf32>
    %418 = math.exp %417 : vector<8x128xf32>
    %cst_138 = arith.constant 1.000000e+00 : f32
    %419 = vector.broadcast %cst_138 : f32 to vector<8x128xf32>
    %420 = arith.addf %419, %418 : vector<8x128xf32>
    %421 = arith.divf %419, %420 : vector<8x128xf32>
    %422 = vector.extract_strided_slice %409 {offsets = [0, 256], sizes = [8, 128], strides = [1, 1]} : vector<8x512xf32> to vector<8x128xf32>
    %423 = math.tanh %422 : vector<8x128xf32>
    %424 = vector.extract_strided_slice %409 {offsets = [0, 384], sizes = [8, 128], strides = [1, 1]} : vector<8x512xf32> to vector<8x128xf32>
    %425 = arith.negf %424 : vector<8x128xf32>
    %426 = math.exp %425 : vector<8x128xf32>
    %cst_139 = arith.constant 1.000000e+00 : f32
    %427 = vector.broadcast %cst_139 : f32 to vector<8x128xf32>
    %428 = arith.addf %427, %426 : vector<8x128xf32>
    %429 = arith.divf %427, %428 : vector<8x128xf32>
    %430 = arith.mulf %421, %403 : vector<8x128xf32>
    %431 = arith.mulf %415, %423 : vector<8x128xf32>
    %432 = arith.addf %430, %431 : vector<8x128xf32>
    %433 = math.tanh %432 : vector<8x128xf32>
    %434 = arith.mulf %429, %433 : vector<8x128xf32>
    %c40_140 = arith.constant 40 : index
    %c0_141 = arith.constant 0 : index
    %435 = vector.load %arg14[%c40_140, %c0_141] : memref<64x128xf32, #tpu.memory_space<vmem>>, vector<8x128xf32>
    tpu.vector_store %arg14[%c40_140, %c0_141], %434 {strides = array<i32>} : memref<64x128xf32, #tpu.memory_space<vmem>>, vector<8x128xf32>,
    %c48_142 = arith.constant 48 : index
    %c0_143 = arith.constant 0 : index
    %436 = vector.load %arg15[%c48_142, %c0_143] : memref<64x512xf32, #tpu.memory_space<vmem>>, vector<8x512xf32>
    %cst_144 = arith.constant dense<0.000000e+00> : vector<8x512xf32>
    %437 = tpu.matmul %434, %251, %cst_144 {dimension_numbers = #tpu.dot_dimension_numbers<[1], [0], [0], [1], [0, 0, 1, 1], [], []>} : vector<8x128xf32>, vector<128x512xf32>, vector<8x512xf32> -> vector<8x512xf32>
    %438 = arith.addf %436, %437 : vector<8x512xf32>
    %439 = vector.extract_strided_slice %438 {offsets = [0, 0], sizes = [8, 128], strides = [1, 1]} : vector<8x512xf32> to vector<8x128xf32>
    %440 = arith.negf %439 : vector<8x128xf32>
    %441 = math.exp %440 : vector<8x128xf32>
    %cst_145 = arith.constant 1.000000e+00 : f32
    %442 = vector.broadcast %cst_145 : f32 to vector<8x128xf32>
    %443 = arith.addf %442, %441 : vector<8x128xf32>
    %444 = arith.divf %442, %443 : vector<8x128xf32>
    %445 = vector.extract_strided_slice %438 {offsets = [0, 128], sizes = [8, 128], strides = [1, 1]} : vector<8x512xf32> to vector<8x128xf32>
    %446 = arith.negf %445 : vector<8x128xf32>
    %447 = math.exp %446 : vector<8x128xf32>
    %cst_146 = arith.constant 1.000000e+00 : f32
    %448 = vector.broadcast %cst_146 : f32 to vector<8x128xf32>
    %449 = arith.addf %448, %447 : vector<8x128xf32>
    %450 = arith.divf %448, %449 : vector<8x128xf32>
    %451 = vector.extract_strided_slice %438 {offsets = [0, 256], sizes = [8, 128], strides = [1, 1]} : vector<8x512xf32> to vector<8x128xf32>
    %452 = math.tanh %451 : vector<8x128xf32>
    %453 = vector.extract_strided_slice %438 {offsets = [0, 384], sizes = [8, 128], strides = [1, 1]} : vector<8x512xf32> to vector<8x128xf32>
    %454 = arith.negf %453 : vector<8x128xf32>
    %455 = math.exp %454 : vector<8x128xf32>
    %cst_147 = arith.constant 1.000000e+00 : f32
    %456 = vector.broadcast %cst_147 : f32 to vector<8x128xf32>
    %457 = arith.addf %456, %455 : vector<8x128xf32>
    %458 = arith.divf %456, %457 : vector<8x128xf32>
    %459 = arith.mulf %450, %432 : vector<8x128xf32>
    %460 = arith.mulf %444, %452 : vector<8x128xf32>
    %461 = arith.addf %459, %460 : vector<8x128xf32>
    %462 = math.tanh %461 : vector<8x128xf32>
    %463 = arith.mulf %458, %462 : vector<8x128xf32>
    %c48_148 = arith.constant 48 : index
    %c0_149 = arith.constant 0 : index
    %464 = vector.load %arg14[%c48_148, %c0_149] : memref<64x128xf32, #tpu.memory_space<vmem>>, vector<8x128xf32>
    tpu.vector_store %arg14[%c48_148, %c0_149], %463 {strides = array<i32>} : memref<64x128xf32, #tpu.memory_space<vmem>>, vector<8x128xf32>,
    %c56_150 = arith.constant 56 : index
    %c0_151 = arith.constant 0 : index
    %465 = vector.load %arg15[%c56_150, %c0_151] : memref<64x512xf32, #tpu.memory_space<vmem>>, vector<8x512xf32>
    %cst_152 = arith.constant dense<0.000000e+00> : vector<8x512xf32>
    %466 = tpu.matmul %463, %251, %cst_152 {dimension_numbers = #tpu.dot_dimension_numbers<[1], [0], [0], [1], [0, 0, 1, 1], [], []>} : vector<8x128xf32>, vector<128x512xf32>, vector<8x512xf32> -> vector<8x512xf32>
    %467 = arith.addf %465, %466 : vector<8x512xf32>
    %468 = vector.extract_strided_slice %467 {offsets = [0, 0], sizes = [8, 128], strides = [1, 1]} : vector<8x512xf32> to vector<8x128xf32>
    %469 = arith.negf %468 : vector<8x128xf32>
    %470 = math.exp %469 : vector<8x128xf32>
    %cst_153 = arith.constant 1.000000e+00 : f32
    %471 = vector.broadcast %cst_153 : f32 to vector<8x128xf32>
    %472 = arith.addf %471, %470 : vector<8x128xf32>
    %473 = arith.divf %471, %472 : vector<8x128xf32>
    %474 = vector.extract_strided_slice %467 {offsets = [0, 128], sizes = [8, 128], strides = [1, 1]} : vector<8x512xf32> to vector<8x128xf32>
    %475 = arith.negf %474 : vector<8x128xf32>
    %476 = math.exp %475 : vector<8x128xf32>
    %cst_154 = arith.constant 1.000000e+00 : f32
    %477 = vector.broadcast %cst_154 : f32 to vector<8x128xf32>
    %478 = arith.addf %477, %476 : vector<8x128xf32>
    %479 = arith.divf %477, %478 : vector<8x128xf32>
    %480 = vector.extract_strided_slice %467 {offsets = [0, 256], sizes = [8, 128], strides = [1, 1]} : vector<8x512xf32> to vector<8x128xf32>
    %481 = math.tanh %480 : vector<8x128xf32>
    %482 = vector.extract_strided_slice %467 {offsets = [0, 384], sizes = [8, 128], strides = [1, 1]} : vector<8x512xf32> to vector<8x128xf32>
    %483 = arith.negf %482 : vector<8x128xf32>
    %484 = math.exp %483 : vector<8x128xf32>
    %cst_155 = arith.constant 1.000000e+00 : f32
    %485 = vector.broadcast %cst_155 : f32 to vector<8x128xf32>
    %486 = arith.addf %485, %484 : vector<8x128xf32>
    %487 = arith.divf %485, %486 : vector<8x128xf32>
    %488 = arith.mulf %479, %461 : vector<8x128xf32>
    %489 = arith.mulf %473, %481 : vector<8x128xf32>
    %490 = arith.addf %488, %489 : vector<8x128xf32>
    %491 = math.tanh %490 : vector<8x128xf32>
    %492 = arith.mulf %487, %491 : vector<8x128xf32>
    %c56_156 = arith.constant 56 : index
    %c0_157 = arith.constant 0 : index
    %493 = vector.load %arg14[%c56_156, %c0_157] : memref<64x128xf32, #tpu.memory_space<vmem>>, vector<8x128xf32>
    tpu.vector_store %arg14[%c56_156, %c0_157], %492 {strides = array<i32>} : memref<64x128xf32, #tpu.memory_space<vmem>>, vector<8x128xf32>,
    %c1_158 = arith.constant 1 : index
    %c0_159 = arith.constant 0 : index
    %c0_160 = arith.constant 0 : index
    %494 = vector.load %arg12[%c1_158, %c0_159, %c0_160] : memref<2x8x128xf32, #tpu.memory_space<vmem>>, vector<1x8x128xf32>
    %495 = vector.shape_cast %494 : vector<1x8x128xf32> to vector<8x128xf32>
    %496 = vector.shape_cast %492 : vector<8x128xf32> to vector<1x8x128xf32>
    tpu.vector_store %arg12[%c1_158, %c0_159, %c0_160], %496 {strides = array<i32>} : memref<2x8x128xf32, #tpu.memory_space<vmem>>, vector<1x8x128xf32>,
    %c1_161 = arith.constant 1 : index
    %c0_162 = arith.constant 0 : index
    %c0_163 = arith.constant 0 : index
    %497 = vector.load %arg13[%c1_161, %c0_162, %c0_163] : memref<2x8x128xf32, #tpu.memory_space<vmem>>, vector<1x8x128xf32>
    %498 = vector.shape_cast %497 : vector<1x8x128xf32> to vector<8x128xf32>
    %499 = vector.shape_cast %490 : vector<8x128xf32> to vector<1x8x128xf32>
    tpu.vector_store %arg13[%c1_161, %c0_162, %c0_163], %499 {strides = array<i32>} : memref<2x8x128xf32, #tpu.memory_space<vmem>>, vector<1x8x128xf32>,
    %c0_164 = arith.constant 0 : index
    %c0_165 = arith.constant 0 : index
    %500 = vector.load %arg14[%c0_164, %c0_165] : memref<64x128xf32, #tpu.memory_space<vmem>>, vector<64x128xf32>
    %c0_166 = arith.constant 0 : index
    %c0_167 = arith.constant 0 : index
    %501 = vector.load %arg9[%c0_166, %c0_167] : memref<128x256xf32, #tpu.memory_space<vmem>>, vector<128x256xf32>
    %cst_168 = arith.constant dense<0.000000e+00> : vector<64x256xf32>
    %502 = tpu.matmul %500, %501, %cst_168 {dimension_numbers = #tpu.dot_dimension_numbers<[1], [0], [0], [1], [0, 0, 1, 1], [], []>} : vector<64x128xf32>, vector<128x256xf32>, vector<64x256xf32> -> vector<64x256xf32>
    %c0_169 = arith.constant 0 : index
    %c0_170 = arith.constant 0 : index
    %503 = vector.load %arg10[%c0_169, %c0_170] : memref<1x256xf32, #tpu.memory_space<vmem>>, vector<1x256xf32>
    %504 = vector.broadcast %503 : vector<1x256xf32> to vector<64x256xf32>
    %505 = arith.addf %502, %504 : vector<64x256xf32>
    %c0_171 = arith.constant 0 : index
    %c0_172 = arith.constant 0 : index
    %506 = vector.load %arg11[%c0_171, %c0_172] : memref<64x256xf32, #tpu.memory_space<vmem>>, vector<64x256xf32>
    tpu.vector_store %arg11[%c0_171, %c0_172], %505 {strides = array<i32>} : memref<64x256xf32, #tpu.memory_space<vmem>>, vector<64x256xf32>,
    return
  }
}

</mosaic_0001>

<llo_original>
// kernel: tpu_custom_call.1
$region0: #{tpu_custom_call.1}
  #allocation0 [shape = 'u32[]', space=smem, size = 0x4, offset = 0x4, fixed_abs, tag = 'smem constant byte address 0x4 - core index']
  #allocation1 [shape = 'u32[144,128]{1,0:T(1,128)}', space=vmem, size = 0x12000, scoped, tag = 'internal scratch']
  #allocation2 [shape = 'f32[64,128]{1,0:T(8,128)}', space=vmem, size = 0x8000, scoped, tag = 'scratch operand']
  #allocation3 [shape = 'f32[64,512]{1,0:T(8,128)}', space=vmem, size = 0x20000, scoped, tag = 'scratch operand']
  %s0 = inlined_call_operand.hbm [shape: f32[64,128], index: 0, kind: input, shape index: {}]
  %s1 = inlined_call_operand.hbm [shape: f32[128,512], index: 1, kind: input, shape index: {}]
  %s2 = inlined_call_operand.hbm [shape: f32[128,512], index: 2, kind: input, shape index: {}]
  %s3 = inlined_call_operand.vmem [shape: f32[1,512], index: 3, kind: input, shape index: {}]
  %s4 = inlined_call_operand.hbm [shape: f32[128,512], index: 4, kind: input, shape index: {}]
  %s5 = inlined_call_operand.hbm [shape: f32[128,512], index: 5, kind: input, shape index: {}]
  %s6 = inlined_call_operand.vmem [shape: f32[1,512], index: 6, kind: input, shape index: {}]
  %s7 = inlined_call_operand.vmem [shape: f32[2,8,128], index: 7, kind: input, shape index: {}]
  %s8 = inlined_call_operand.hbm [shape: f32[2,8,128], index: 8, kind: input, shape index: {}]
  %s9 = inlined_call_operand.hbm [shape: f32[128,256], index: 9, kind: input, shape index: {}]
  %s10 = inlined_call_operand.vmem [shape: f32[1,256], index: 10, kind: input, shape index: {}]
  %s11 = inlined_call_operand.hbm [shape: f32[64,256], index: 11, kind: output, shape index: {0}]
  %s12 = inlined_call_operand.hbm [shape: f32[2,8,128], index: 12, kind: output, shape index: {1}]
  %s13 = inlined_call_operand.hbm [shape: f32[2,8,128], index: 13, kind: output, shape index: {2}]
  %14 = xla_tuple %s11, %s12, %s13
  %s15 = sld [smem:[#allocation0]]
  $region98: #{tpu_custom_call.1} parent=0
    _
  %s17 = ssub.s32 1, %s15
  %s18 = scalar_select 0, %s17, %s15
  $region1: #{tpu_custom_call.1} parent=0
    #allocation4 [shape = 'u8[32768]{0}', space=vmem, size = 0x8000, scoped, tag = 'input window, operand 0, single buffered']
    #allocation5 [shape = 's32[1]{0}', space=sflag, size = 0x4, scoped, tag = 'scoped memory for tpu_custom_call.1']
    #allocation6 [shape = 's32[1]{0}', space=sflag, size = 0x4, scoped, tag = 'scoped memory for tpu_custom_call.1']
    #allocation7 [shape = 'u8[262144]{0}', space=vmem, size = 0x40000, scoped, tag = 'input window, operand 1, single buffered']
    #allocation8 [shape = 's32[1]{0}', space=sflag, size = 0x4, scoped, tag = 'scoped memory for tpu_custom_call.1']
    #allocation9 [shape = 'u8[262144]{0}', space=vmem, size = 0x40000, scoped, tag = 'input window, operand 2, single buffered']
    #allocation10 [shape = 'u8[262144]{0}', space=vmem, size = 0x40000, scoped, tag = 'input window, operand 4, single buffered']
    #allocation11 [shape = 's32[1]{0}', space=sflag, size = 0x4, scoped, tag = 'scoped memory for tpu_custom_call.1']
    #allocation12 [shape = 'u8[262144]{0}', space=vmem, size = 0x40000, scoped, tag = 'input window, operand 5, single buffered']
    #allocation13 [shape = 'u8[8192]{0}', space=vmem, size = 0x2000, scoped, tag = 'input window, operand 8, single buffered']
    #allocation14 [shape = 's32[1]{0}', space=sflag, size = 0x4, scoped, tag = 'scoped memory for tpu_custom_call.1']
    #allocation15 [shape = 'u8[131072]{0}', space=vmem, size = 0x20000, scoped, tag = 'input window, operand 9, single buffered']
    #allocation16 [shape = 'u8[65536]{0}', space=vmem, size = 0x10000, scoped, tag = 'output window, operand 0, single buffered']
    #allocation17 [shape = 'u8[8192]{0}', space=vmem, size = 0x2000, scoped, tag = 'output window, operand 1, single buffered']
    #allocation18 [shape = 's32[1]{0}', space=sflag, size = 0x4, scoped, tag = 'scoped memory for tpu_custom_call.1']
    #allocation19 [shape = 'u8[8192]{0}', space=vmem, size = 0x2000, scoped, tag = 'output window, operand 2, single buffered']
    %19 = vsyncpa [#allocation5], 0
    %20 = vsyncpa [#allocation8], 0
    %21 = vsyncpa [#allocation11], 0
    %22 = vsyncpa [#allocation14], 0
    %23 = vsyncpa [#allocation6], 0
    %24 = vsyncpa [#allocation18], 0
    // Predicated region
    $region2: #{tpu_custom_call.1} parent=1 // pred_check
      _
    $region3: #{tpu_custom_call.1} parent=1 // pred_check_branch
      %26 = sbr.rel (0) target = $region5
    $region4: #{tpu_custom_call.1} parent=1 // pred_region
      %s28 = ssub.s32 1024, 1024
      %29 = vsyncadd [#allocation5], %s28
      %s30 = sshll.u32 [#allocation4], 4
      %s31 = int_to_ptr.vmem [resolvable:$true] %s30
      %36 = dma.hbm_to_vmem [thread:$0]  %s0, 1024, %s31, [#allocation5], 128, 128, 8
    $region5: #{tpu_custom_call.1} parent=1 // pred_fallthru
      _
    // Predicated region
    $region6: #{tpu_custom_call.1} parent=1 // pred_check
      _
    $region7: #{tpu_custom_call.1} parent=1 // pred_check_branch
      %38 = sbr.rel (0) target = $region9
    $region8: #{tpu_custom_call.1} parent=1 // pred_region
      %s40 = ssub.s32 8192, 8192
      %41 = vsyncadd [#allocation8], %s40
      %s42 = sshll.u32 [#allocation7], 4
      %s43 = int_to_ptr.vmem [resolvable:$true] %s42
      %48 = dma.hbm_to_vmem [thread:$0]  %s1, 8192, %s43, [#allocation8], 512, 512, 32
    $region9: #{tpu_custom_call.1} parent=1 // pred_fallthru
      _
    // Predicated region
    $region10: #{tpu_custom_call.1} parent=1 // pred_check
      _
    $region11: #{tpu_custom_call.1} parent=1 // pred_check_branch
      %50 = sbr.rel (0) target = $region13
    $region12: #{tpu_custom_call.1} parent=1 // pred_region
      %s52 = ssub.s32 8192, 8192
      %53 = vsyncadd [#allocation8], %s52
      %s54 = sshll.u32 [#allocation9], 4
      %s55 = int_to_ptr.vmem [resolvable:$true] %s54
      %60 = dma.hbm_to_vmem [thread:$0]  %s2, 8192, %s55, [#allocation8], 512, 512, 32
    $region13: #{tpu_custom_call.1} parent=1 // pred_fallthru
      _
    // Predicated region
    $region14: #{tpu_custom_call.1} parent=1 // pred_check
      _
    $region15: #{tpu_custom_call.1} parent=1 // pred_check_branch
      %62 = sbr.rel (0) target = $region17
    $region16: #{tpu_custom_call.1} parent=1 // pred_region
      _
    $region17: #{tpu_custom_call.1} parent=1 // pred_fallthru
      _
    // Predicated region
    $region18: #{tpu_custom_call.1} parent=1 // pred_check
      _
    $region19: #{tpu_custom_call.1} parent=1 // pred_check_branch
      %64 = sbr.rel (0) target = $region21
    $region20: #{tpu_custom_call.1} parent=1 // pred_region
      %s66 = ssub.s32 8192, 8192
      %67 = vsyncadd [#allocation11], %s66
      %s68 = sshll.u32 [#allocation10], 4
      %s69 = int_to_ptr.vmem [resolvable:$true] %s68
      %74 = dma.hbm_to_vmem [thread:$0]  %s4, 8192, %s69, [#allocation11], 512, 512, 32
    $region21: #{tpu_custom_call.1} parent=1 // pred_fallthru
      _
    // Predicated region
    $region22: #{tpu_custom_call.1} parent=1 // pred_check
      _
    $region23: #{tpu_custom_call.1} parent=1 // pred_check_branch
      %76 = sbr.rel (0) target = $region25
    $region24: #{tpu_custom_call.1} parent=1 // pred_region
      %s78 = ssub.s32 8192, 8192
      %79 = vsyncadd [#allocation11], %s78
      %s80 = sshll.u32 [#allocation12], 4
      %s81 = int_to_ptr.vmem [resolvable:$true] %s80
      %86 = dma.hbm_to_vmem [thread:$0]  %s5, 8192, %s81, [#allocation11], 512, 512, 32
    $region25: #{tpu_custom_call.1} parent=1 // pred_fallthru
      _
    // Predicated region
    $region26: #{tpu_custom_call.1} parent=1 // pred_check
      _
    $region27: #{tpu_custom_call.1} parent=1 // pred_check_branch
      %88 = sbr.rel (0) target = $region29
    $region28: #{tpu_custom_call.1} parent=1 // pred_region
      _
    $region29: #{tpu_custom_call.1} parent=1 // pred_fallthru
      _
    // Predicated region
    $region30: #{tpu_custom_call.1} parent=1 // pred_check
      _
    $region31: #{tpu_custom_call.1} parent=1 // pred_check_branch
      %90 = sbr.rel (0) target = $region33
    $region32: #{tpu_custom_call.1} parent=1 // pred_region
      _
    $region33: #{tpu_custom_call.1} parent=1 // pred_fallthru
      _
    // Predicated region
    $region34: #{tpu_custom_call.1} parent=1 // pred_check
      _
    $region35: #{tpu_custom_call.1} parent=1 // pred_check_branch
      %92 = sbr.rel (0) target = $region37
    $region36: #{tpu_custom_call.1} parent=1 // pred_region
      %s94 = ssub.s32 256, 256
      %95 = vsyncadd [#allocation14], %s94
      %s96 = sshll.u32 [#allocation13], 4
      %s97 = int_to_ptr.vmem [resolvable:$true] %s96
      %102 = dma.hbm_to_vmem [thread:$0]  %s8, 256, %s97, [#allocation14], 128, 128, 8
    $region37: #{tpu_custom_call.1} parent=1 // pred_fallthru
      _
    // Predicated region
    $region38: #{tpu_custom_call.1} parent=1 // pred_check
      _
    $region39: #{tpu_custom_call.1} parent=1 // pred_check_branch
      %104 = sbr.rel (0) target = $region41
    $region40: #{tpu_custom_call.1} parent=1 // pred_region
      %s106 = ssub.s32 4096, 4096
      %107 = vsyncadd [#allocation14], %s106
      %s108 = sshll.u32 [#allocation15], 4
      %s109 = int_to_ptr.vmem [resolvable:$true] %s108
      %114 = dma.hbm_to_vmem [thread:$0]  %s9, 4096, %s109, [#allocation14], 256, 256, 16
    $region41: #{tpu_custom_call.1} parent=1 // pred_fallthru
      _
    // Predicated region
    $region42: #{tpu_custom_call.1} parent=1 // pred_check
      _
    $region43: #{tpu_custom_call.1} parent=1 // pred_check_branch
      %116 = sbr.rel (0) target = $region45
    $region44: #{tpu_custom_call.1} parent=1 // pred_region
      _
    $region45: #{tpu_custom_call.1} parent=1 // pred_fallthru
      _
    // Predicated region
    $region46: #{tpu_custom_call.1} parent=1 // pred_check
      _
    $region47: #{tpu_custom_call.1} parent=1 // pred_check_branch
      %118 = sbr.rel (0) target = $region49
    $region48: #{tpu_custom_call.1} parent=1 // pred_region
      %119 = dma.done [#allocation5], 1024
    $region49: #{tpu_custom_call.1} parent=1 // pred_fallthru
      _
    // Predicated region
    $region50: #{tpu_custom_call.1} parent=1 // pred_check
      _
    $region51: #{tpu_custom_call.1} parent=1 // pred_check_branch
      %121 = sbr.rel (0) target = $region53
    $region52: #{tpu_custom_call.1} parent=1 // pred_region
      %122 = dma.done [#allocation8], 8192
    $region53: #{tpu_custom_call.1} parent=1 // pred_fallthru
      _
    // Predicated region
    $region54: #{tpu_custom_call.1} parent=1 // pred_check
      _
    $region55: #{tpu_custom_call.1} parent=1 // pred_check_branch
      %124 = sbr.rel (0) target = $region57
    $region56: #{tpu_custom_call.1} parent=1 // pred_region
      %125 = dma.done [#allocation8], 8192
    $region57: #{tpu_custom_call.1} parent=1 // pred_fallthru
      _
    // Predicated region
    $region58: #{tpu_custom_call.1} parent=1 // pred_check
      _
    $region59: #{tpu_custom_call.1} parent=1 // pred_check_branch
      %127 = sbr.rel (0) target = $region61
    $region60: #{tpu_custom_call.1} parent=1 // pred_region
      %128 = dma.done [#allocation11], 8192
    $region61: #{tpu_custom_call.1} parent=1 // pred_fallthru
      _
    // Predicated region
    $region62: #{tpu_custom_call.1} parent=1 // pred_check
      _
    $region63: #{tpu_custom_call.1} parent=1 // pred_check_branch
      %130 = sbr.rel (0) target = $region65
    $region64: #{tpu_custom_call.1} parent=1 // pred_region
      %131 = dma.done [#allocation11], 8192
    $region65: #{tpu_custom_call.1} parent=1 // pred_fallthru
      _
    // Predicated region
    $region66: #{tpu_custom_call.1} parent=1 // pred_check
      _
    $region67: #{tpu_custom_call.1} parent=1 // pred_check_branch
      %133 = sbr.rel (0) target = $region69
    $region68: #{tpu_custom_call.1} parent=1 // pred_region
      %134 = dma.done [#allocation14], 256
    $region69: #{tpu_custom_call.1} parent=1 // pred_fallthru
      _
    // Predicated region
    $region70: #{tpu_custom_call.1} parent=1 // pred_check
      _
    $region71: #{tpu_custom_call.1} parent=1 // pred_check_branch
      %136 = sbr.rel (0) target = $region73
    $region72: #{tpu_custom_call.1} parent=1 // pred_region
      %137 = dma.done [#allocation14], 4096
    $region73: #{tpu_custom_call.1} parent=1 // pred_fallthru
      _
    %v138 = vld [vmem:[#allocation7] sm:$0xff]
    %v139 = vld [vmem:[#allocation7 + $0x8] sm:$0xff]
    %v140 = vld [vmem:[#allocation7 + $0x10] sm:$0xff]
    %v141 = vld [vmem:[#allocation7 + $0x18] sm:$0xff]
    %v142 = vld [vmem:[#allocation7 + $0x20] sm:$0xff]
    %v143 = vld [vmem:[#allocation7 + $0x28] sm:$0xff]
    %v144 = vld [vmem:[#allocation7 + $0x30] sm:$0xff]
    %v145 = vld [vmem:[#allocation7 + $0x38] sm:$0xff]
    %v146 = vld [vmem:[#allocation7 + $0x40] sm:$0xff]
    %v147 = vld [vmem:[#allocation7 + $0x48] sm:$0xff]
    %v148 = vld [vmem:[#allocation7 + $0x50] sm:$0xff]
    %v149 = vld [vmem:[#allocation7 + $0x58] sm:$0xff]
    %v150 = vld [vmem:[#allocation7 + $0x60] sm:$0xff]
    %v151 = vld [vmem:[#allocation7 + $0x68] sm:$0xff]
    %v152 = vld [vmem:[#allocation7 + $0x70] sm:$0xff]
    %v153 = vld [vmem:[#allocation7 + $0x78] sm:$0xff]
    %v154 = vld [vmem:[#allocation7 + $0x80] sm:$0xff]
    %v155 = vld [vmem:[#allocation7 + $0x88] sm:$0xff]
    %v156 = vld [vmem:[#allocation7 + $0x90] sm:$0xff]
    %v157 = vld [vmem:[#allocation7 + $0x98] sm:$0xff]
    %v158 = vld [vmem:[#allocation7 + $0xa0] sm:$0xff]
    %v159 = vld [vmem:[#allocation7 + $0xa8] sm:$0xff]
    %v160 = vld [vmem:[#allocation7 + $0xb0] sm:$0xff]
    %v161 = vld [vmem:[#allocation7 + $0xb8] sm:$0xff]
    %v162 = vld [vmem:[#allocation7 + $0xc0] sm:$0xff]
    %v163 = vld [vmem:[#allocation7 + $0xc8] sm:$0xff]
    %v164 = vld [vmem:[#allocation7 + $0xd0] sm:$0xff]
    %v165 = vld [vmem:[#allocation7 + $0xd8] sm:$0xff]
    %v166 = vld [vmem:[#allocation7 + $0xe0] sm:$0xff]
    %v167 = vld [vmem:[#allocation7 + $0xe8] sm:$0xff]
    %v168 = vld [vmem:[#allocation7 + $0xf0] sm:$0xff]
    %v169 = vld [vmem:[#allocation7 + $0xf8] sm:$0xff]
    %v170 = vld [vmem:[#allocation7 + $0x100] sm:$0xff]
    %v171 = vld [vmem:[#allocation7 + $0x108] sm:$0xff]
    %v172 = vld [vmem:[#allocation7 + $0x110] sm:$0xff]
    %v173 = vld [vmem:[#allocation7 + $0x118] sm:$0xff]
    %v174 = vld [vmem:[#allocation7 + $0x120] sm:$0xff]
    %v175 = vld [vmem:[#allocation7 + $0x128] sm:$0xff]
    %v176 = vld [vmem:[#allocation7 + $0x130] sm:$0xff]
    %v177 = vld [vmem:[#allocation7 + $0x138] sm:$0xff]
    %v178 = vld [vmem:[#allocation7 + $0x140] sm:$0xff]
    %v179 = vld [vmem:[#allocation7 + $0x148] sm:$0xff]
    %v180 = vld [vmem:[#allocation7 + $0x150] sm:$0xff]
    %v181 = vld [vmem:[#allocation7 + $0x158] sm:$0xff]
    %v182 = vld [vmem:[#allocation7 + $0x160] sm:$0xff]
    %v183 = vld [vmem:[#allocation7 + $0x168] sm:$0xff]
    %v184 = vld [vmem:[#allocation7 + $0x170] sm:$0xff]
    %v185 = vld [vmem:[#allocation7 + $0x178] sm:$0xff]
    %v186 = vld [vmem:[#allocation7 + $0x180] sm:$0xff]
    %v187 = vld [vmem:[#allocation7 + $0x188] sm:$0xff]
    %v188 = vld [vmem:[#allocation7 + $0x190] sm:$0xff]
    %v189 = vld [vmem:[#allocation7 + $0x198] sm:$0xff]
    %v190 = vld [vmem:[#allocation7 + $0x1a0] sm:$0xff]
    %v191 = vld [vmem:[#allocation7 + $0x1a8] sm:$0xff]
    %v192 = vld [vmem:[#allocation7 + $0x1b0] sm:$0xff]
    %v193 = vld [vmem:[#allocation7 + $0x1b8] sm:$0xff]
    %v194 = vld [vmem:[#allocation7 + $0x1c0] sm:$0xff]
    %v195 = vld [vmem:[#allocation7 + $0x1c8] sm:$0xff]
    %v196 = vld [vmem:[#allocation7 + $0x1d0] sm:$0xff]
    %v197 = vld [vmem:[#allocation7 + $0x1d8] sm:$0xff]
    %v198 = vld [vmem:[#allocation7 + $0x1e0] sm:$0xff]
    %v199 = vld [vmem:[#allocation7 + $0x1e8] sm:$0xff]
    %v200 = vld [vmem:[#allocation7 + $0x1f0] sm:$0xff]
    %v201 = vld [vmem:[#allocation7 + $0x1f8] sm:$0xff]
    %v202 = vld [vmem:[#allocation9] sm:$0xff]
    %v203 = vld [vmem:[#allocation9 + $0x8] sm:$0xff]
    %v204 = vld [vmem:[#allocation9 + $0x10] sm:$0xff]
    %v205 = vld [vmem:[#allocation9 + $0x18] sm:$0xff]
    %v206 = vld [vmem:[#allocation9 + $0x20] sm:$0xff]
    %v207 = vld [vmem:[#allocation9 + $0x28] sm:$0xff]
    %v208 = vld [vmem:[#allocation9 + $0x30] sm:$0xff]
    %v209 = vld [vmem:[#allocation9 + $0x38] sm:$0xff]
    %v210 = vld [vmem:[#allocation9 + $0x40] sm:$0xff]
    %v211 = vld [vmem:[#allocation9 + $0x48] sm:$0xff]
    %v212 = vld [vmem:[#allocation9 + $0x50] sm:$0xff]
    %v213 = vld [vmem:[#allocation9 + $0x58] sm:$0xff]
    %v214 = vld [vmem:[#allocation9 + $0x60] sm:$0xff]
    %v215 = vld [vmem:[#allocation9 + $0x68] sm:$0xff]
    %v216 = vld [vmem:[#allocation9 + $0x70] sm:$0xff]
    %v217 = vld [vmem:[#allocation9 + $0x78] sm:$0xff]
    %v218 = vld [vmem:[#allocation9 + $0x80] sm:$0xff]
    %v219 = vld [vmem:[#allocation9 + $0x88] sm:$0xff]
    %v220 = vld [vmem:[#allocation9 + $0x90] sm:$0xff]
    %v221 = vld [vmem:[#allocation9 + $0x98] sm:$0xff]
    %v222 = vld [vmem:[#allocation9 + $0xa0] sm:$0xff]
    %v223 = vld [vmem:[#allocation9 + $0xa8] sm:$0xff]
    %v224 = vld [vmem:[#allocation9 + $0xb0] sm:$0xff]
    %v225 = vld [vmem:[#allocation9 + $0xb8] sm:$0xff]
    %v226 = vld [vmem:[#allocation9 + $0xc0] sm:$0xff]
    %v227 = vld [vmem:[#allocation9 + $0xc8] sm:$0xff]
    %v228 = vld [vmem:[#allocation9 + $0xd0] sm:$0xff]
    %v229 = vld [vmem:[#allocation9 + $0xd8] sm:$0xff]
    %v230 = vld [vmem:[#allocation9 + $0xe0] sm:$0xff]
    %v231 = vld [vmem:[#allocation9 + $0xe8] sm:$0xff]
    %v232 = vld [vmem:[#allocation9 + $0xf0] sm:$0xff]
    %v233 = vld [vmem:[#allocation9 + $0xf8] sm:$0xff]
    %v234 = vld [vmem:[#allocation9 + $0x100] sm:$0xff]
    %v235 = vld [vmem:[#allocation9 + $0x108] sm:$0xff]
    %v236 = vld [vmem:[#allocation9 + $0x110] sm:$0xff]
    %v237 = vld [vmem:[#allocation9 + $0x118] sm:$0xff]
    %v238 = vld [vmem:[#allocation9 + $0x120] sm:$0xff]
    %v239 = vld [vmem:[#allocation9 + $0x128] sm:$0xff]
    %v240 = vld [vmem:[#allocation9 + $0x130] sm:$0xff]
    %v241 = vld [vmem:[#allocation9 + $0x138] sm:$0xff]
    %v242 = vld [vmem:[#allocation9 + $0x140] sm:$0xff]
    %v243 = vld [vmem:[#allocation9 + $0x148] sm:$0xff]
    %v244 = vld [vmem:[#allocation9 + $0x150] sm:$0xff]
    %v245 = vld [vmem:[#allocation9 + $0x158] sm:$0xff]
    %v246 = vld [vmem:[#allocation9 + $0x160] sm:$0xff]
    %v247 = vld [vmem:[#allocation9 + $0x168] sm:$0xff]
    %v248 = vld [vmem:[#allocation9 + $0x170] sm:$0xff]
    %v249 = vld [vmem:[#allocation9 + $0x178] sm:$0xff]
    %v250 = vld [vmem:[#allocation9 + $0x180] sm:$0xff]
    %v251 = vld [vmem:[#allocation9 + $0x188] sm:$0xff]
    %v252 = vld [vmem:[#allocation9 + $0x190] sm:$0xff]
    %v253 = vld [vmem:[#allocation9 + $0x198] sm:$0xff]
    %v254 = vld [vmem:[#allocation9 + $0x1a0] sm:$0xff]
    %v255 = vld [vmem:[#allocation9 + $0x1a8] sm:$0xff]
    %v256 = vld [vmem:[#allocation9 + $0x1b0] sm:$0xff]
    %v257 = vld [vmem:[#allocation9 + $0x1b8] sm:$0xff]
    %v258 = vld [vmem:[#allocation9 + $0x1c0] sm:$0xff]
    %v259 = vld [vmem:[#allocation9 + $0x1c8] sm:$0xff]
    %v260 = vld [vmem:[#allocation9 + $0x1d0] sm:$0xff]
    %v261 = vld [vmem:[#allocation9 + $0x1d8] sm:$0xff]
    %v262 = vld [vmem:[#allocation9 + $0x1e0] sm:$0xff]
    %v263 = vld [vmem:[#allocation9 + $0x1e8] sm:$0xff]
    %v264 = vld [vmem:[#allocation9 + $0x1f0] sm:$0xff]
    %v265 = vld [vmem:[#allocation9 + $0x1f8] sm:$0xff]
    %v266 = vld [vmem:[%s3] sm:$0xf]
    %v267 = vld [vmem:[#allocation4] sm:$0xff]
    %v268 = vld [vmem:[#allocation4 + $0x8] sm:$0xff]
    %v269 = vld [vmem:[#allocation4 + $0x10] sm:$0xff]
    %v270 = vld [vmem:[#allocation4 + $0x18] sm:$0xff]
    %v271 = vld [vmem:[#allocation4 + $0x20] sm:$0xff]
    %v272 = vld [vmem:[#allocation4 + $0x28] sm:$0xff]
    %v273 = vld [vmem:[#allocation4 + $0x30] sm:$0xff]
    %v274 = vld [vmem:[#allocation4 + $0x38] sm:$0xff]
    %v276 = vlaneseq
    %v277 = vshrl.u32 %v276, 7
    %v278 = vsub.s32 0, %v277
    %v279 = vrot.slane %v266, %v278
    %v280 = vlaneseq
    %v281 = vshrl.u32 %v280, 7
    %v282 = vsub.s32 1, %v281
    %v283 = vrot.slane %v266, %v282
    %v284 = vlaneseq
    %v285 = vshrl.u32 %v284, 7
    %v286 = vsub.s32 2, %v285
    %v287 = vrot.slane %v266, %v286
    %v288 = vlaneseq
    %v289 = vshrl.u32 %v288, 7
    %v290 = vsub.s32 3, %v289
    %v291 = vrot.slane %v266, %v290
    %296 = vmatprep.subr.mxu0 %v139
    %297 = vmatpush1.msra.mxu0 %v138
    %298 = vmatprep.subr.mxu0 %v143
    %299 = vmatpush1.msra.mxu0 %v142
    %300 = vmatprep.subr.mxu0 %v147
    %301 = vmatpush1.msra.mxu0 %v146
    %302 = vmatprep.subr.mxu0 %v151
    %303 = vmatpush1.msra.mxu0 %v150
    %304 = vmatprep.subr.mxu0 %v155
    %305 = vmatpush1.msra.mxu0 %v154
    %306 = vmatprep.subr.mxu0 %v159
    %307 = vmatpush1.msra.mxu0 %v158
    %308 = vmatprep.subr.mxu0 %v163
    %309 = vmatpush1.msra.mxu0 %v162
    %310 = vmatprep.subr.mxu0 %v167
    %311 = vmatpush1.msra.mxu0 %v166
    %312 = vmatprep.subr.mxu0 %v171
    %313 = vmatpush1.msra.mxu0 %v170
    %314 = vmatprep.subr.mxu0 %v175
    %315 = vmatpush1.msra.mxu0 %v174
    %316 = vmatprep.subr.mxu0 %v179
    %317 = vmatpush1.msra.mxu0 %v178
    %318 = vmatprep.subr.mxu0 %v183
    %319 = vmatpush1.msra.mxu0 %v182
    %320 = vmatprep.subr.mxu0 %v187
    %321 = vmatpush1.msra.mxu0 %v186
    %322 = vmatprep.subr.mxu0 %v191
    %323 = vmatpush1.msra.mxu0 %v190
    %324 = vmatprep.subr.mxu0 %v195
    %325 = vmatpush1.msra.mxu0 %v194
    %326 = vmatprep.subr.mxu0 %v199
    %327 = vmatpush1.msra.mxu0 %v198
    %328 = vmatprep.subr.mxu0 0.0
    %329 = vmatpush1.msra.mxu0 0.0
    %330 = vmatprep.subr.mxu0 0.0
    %331 = vmatpush1.msra.mxu0 0.0
    %332 = vmatprep.subr.mxu0 0.0
    %333 = vmatpush1.msra.mxu0 0.0
    %334 = vmatprep.subr.mxu0 0.0
    %335 = vmatpush1.msra.mxu0 0.0
    %336 = vmatprep.subr.mxu0 0.0
    %337 = vmatpush1.msra.mxu0 0.0
    %338 = vmatprep.subr.mxu0 0.0
    %339 = vmatpush1.msra.mxu0 0.0
    %340 = vmatprep.subr.mxu0 0.0
    %341 = vmatpush1.msra.mxu0 0.0
    %342 = vmatprep.subr.mxu0 0.0
    %343 = vmatpush1.msra.mxu0 0.0
    %344 = vmatprep.subr.mxu0 0.0
    %345 = vmatpush1.msra.mxu0 0.0
    %346 = vmatprep.subr.mxu0 0.0
    %347 = vmatpush1.msra.mxu0 0.0
    %348 = vmatprep.subr.mxu0 0.0
    %349 = vmatpush1.msra.mxu0 0.0
    %350 = vmatprep.subr.mxu0 0.0
    %351 = vmatpush1.msra.mxu0 0.0
    %352 = vmatprep.subr.mxu0 0.0
    %353 = vmatpush1.msra.mxu0 0.0
    %354 = vmatprep.subr.mxu0 0.0
    %355 = vmatpush1.msra.mxu0 0.0
    %356 = vmatprep.subr.mxu0 0.0
    %357 = vmatpush1.msra.mxu0 0.0
    %358 = vmatprep.subr.mxu0 0.0
    %359 = vmatpush1.msra.mxu0 0.0
    %360 = vmatprep.mubr.f32.mxu0 0.0
    %361 = vmatmul.mubr.f32.gmra.mrb[0].mxu0 %v267
    %v362 = vpop.f32.mrb[0].mxu0
    %v363 = vadd.f32 %v279, %v362
    %v364 = vpop.f32.mrb[0].mxu0
    %v365 = vadd.f32 %v283, %v364
    %366 = vmatprep.mubr.f32.mxu0 0.0
    %367 = vmatmul.mubr.f32.gmra.mrb[0].mxu0 %v268
    %v368 = vpop.f32.mrb[0].mxu0
    %v369 = vadd.f32 %v279, %v368
    %v370 = vpop.f32.mrb[0].mxu0
    %v371 = vadd.f32 %v283, %v370
    %372 = vmatprep.mubr.f32.mxu0 0.0
    %373 = vmatmul.mubr.f32.gmra.mrb[0].mxu0 %v269
    %v374 = vpop.f32.mrb[0].mxu0
    %v375 = vadd.f32 %v279, %v374
    %v376 = vpop.f32.mrb[0].mxu0
    %v377 = vadd.f32 %v283, %v376
    %378 = vmatprep.mubr.f32.mxu0 0.0
    %379 = vmatmul.mubr.f32.gmra.mrb[0].mxu0 %v270
    %v380 = vpop.f32.mrb[0].mxu0
    %v381 = vadd.f32 %v279, %v380
    %v382 = vpop.f32.mrb[0].mxu0
    %v383 = vadd.f32 %v283, %v382
    %384 = vmatprep.mubr.f32.mxu0 0.0
    %385 = vmatmul.mubr.f32.gmra.mrb[0].mxu0 %v271
    %v386 = vpop.f32.mrb[0].mxu0
    %v387 = vadd.f32 %v279, %v386
    %v388 = vpop.f32.mrb[0].mxu0
    %v389 = vadd.f32 %v283, %v388
    %390 = vmatprep.mubr.f32.mxu0 0.0
    %391 = vmatmul.mubr.f32.gmra.mrb[0].mxu0 %v272
    %v392 = vpop.f32.mrb[0].mxu0
    %v393 = vadd.f32 %v279, %v392
    %v394 = vpop.f32.mrb[0].mxu0
    %v395 = vadd.f32 %v283, %v394
    %396 = vmatprep.mubr.f32.mxu0 0.0
    %397 = vmatmul.mubr.f32.gmra.mrb[0].mxu0 %v273
    %v398 = vpop.f32.mrb[0].mxu0
    %v399 = vadd.f32 %v279, %v398
    %v400 = vpop.f32.mrb[0].mxu0
    %v401 = vadd.f32 %v283, %v400
    %402 = vmatprep.mubr.f32.mxu0 0.0
    %403 = vmatmul.mubr.f32.gmra.mrb[0].mxu0 %v274
    %v404 = vpop.f32.mrb[0].mxu0
    %v405 = vadd.f32 %v279, %v404
    %v406 = vpop.f32.mrb[0].mxu0
    %v407 = vadd.f32 %v283, %v406
    %408 = vdwg.mxu0
    %409 = vmatprep.subr.mxu0 %v141
    %410 = vmatpush1.msra.mxu0 %v140
    %411 = vmatprep.subr.mxu0 %v145
    %412 = vmatpush1.msra.mxu0 %v144
    %413 = vmatprep.subr.mxu0 %v149
    %414 = vmatpush1.msra.mxu0 %v148
    %415 = vmatprep.subr.mxu0 %v153
    %416 = vmatpush1.msra.mxu0 %v152
    %417 = vmatprep.subr.mxu0 %v157
    %418 = vmatpush1.msra.mxu0 %v156
    %419 = vmatprep.subr.mxu0 %v161
    %420 = vmatpush1.msra.mxu0 %v160
    %421 = vmatprep.subr.mxu0 %v165
    %422 = vmatpush1.msra.mxu0 %v164
    %423 = vmatprep.subr.mxu0 %v169
    %424 = vmatpush1.msra.mxu0 %v168
    %425 = vmatprep.subr.mxu0 %v173
    %426 = vmatpush1.msra.mxu0 %v172
    %427 = vmatprep.subr.mxu0 %v177
    %428 = vmatpush1.msra.mxu0 %v176
    %429 = vmatprep.subr.mxu0 %v181
    %430 = vmatpush1.msra.mxu0 %v180
    %431 = vmatprep.subr.mxu0 %v185
    %432 = vmatpush1.msra.mxu0 %v184
    %433 = vmatprep.subr.mxu0 %v189
    %434 = vmatpush1.msra.mxu0 %v188
    %435 = vmatprep.subr.mxu0 %v193
    %436 = vmatpush1.msra.mxu0 %v192
    %437 = vmatprep.subr.mxu0 %v197
    %438 = vmatpush1.msra.mxu0 %v196
    %439 = vmatprep.subr.mxu0 %v201
    %440 = vmatpush1.msra.mxu0 %v200
    %441 = vmatprep.subr.mxu0 0.0
    %442 = vmatpush1.msra.mxu0 0.0
    %443 = vmatprep.subr.mxu0 0.0
    %444 = vmatpush1.msra.mxu0 0.0
    %445 = vmatprep.subr.mxu0 0.0
    %446 = vmatpush1.msra.mxu0 0.0
    %447 = vmatprep.subr.mxu0 0.0
    %448 = vmatpush1.msra.mxu0 0.0
    %449 = vmatprep.subr.mxu0 0.0
    %450 = vmatpush1.msra.mxu0 0.0
    %451 = vmatprep.subr.mxu0 0.0
    %452 = vmatpush1.msra.mxu0 0.0
    %453 = vmatprep.subr.mxu0 0.0
    %454 = vmatpush1.msra.mxu0 0.0
    %455 = vmatprep.subr.mxu0 0.0
    %456 = vmatpush1.msra.mxu0 0.0
    %457 = vmatprep.subr.mxu0 0.0
    %458 = vmatpush1.msra.mxu0 0.0
    %459 = vmatprep.subr.mxu0 0.0
    %460 = vmatpush1.msra.mxu0 0.0
    %461 = vmatprep.subr.mxu0 0.0
    %462 = vmatpush1.msra.mxu0 0.0
    %463 = vmatprep.subr.mxu0 0.0
    %464 = vmatpush1.msra.mxu0 0.0
    %465 = vmatprep.subr.mxu0 0.0
    %466 = vmatpush1.msra.mxu0 0.0
    %467 = vmatprep.subr.mxu0 0.0
    %468 = vmatpush1.msra.mxu0 0.0
    %469 = vmatprep.subr.mxu0 0.0
    %470 = vmatpush1.msra.mxu0 0.0
    %471 = vmatprep.subr.mxu0 0.0
    %472 = vmatpush1.msra.mxu0 0.0
    %473 = vmatprep.mubr.f32.mxu0 0.0
    %474 = vmatmul.mubr.f32.gmra.mrb[0].mxu0 %v267
    %v475 = vpop.f32.mrb[0].mxu0
    %v476 = vadd.f32 %v287, %v475
    %v477 = vpop.f32.mrb[0].mxu0
    %v478 = vadd.f32 %v291, %v477
    %479 = vmatprep.mubr.f32.mxu0 0.0
    %480 = vmatmul.mubr.f32.gmra.mrb[0].mxu0 %v268
    %v481 = vpop.f32.mrb[0].mxu0
    %v482 = vadd.f32 %v287, %v481
    %v483 = vpop.f32.mrb[0].mxu0
    %v484 = vadd.f32 %v291, %v483
    %485 = vmatprep.mubr.f32.mxu0 0.0
    %486 = vmatmul.mubr.f32.gmra.mrb[0].mxu0 %v269
    %v487 = vpop.f32.mrb[0].mxu0
    %v488 = vadd.f32 %v287, %v487
    %v489 = vpop.f32.mrb[0].mxu0
    %v490 = vadd.f32 %v291, %v489
    %491 = vmatprep.mubr.f32.mxu0 0.0
    %492 = vmatmul.mubr.f32.gmra.mrb[0].mxu0 %v270
    %v493 = vpop.f32.mrb[0].mxu0
    %v494 = vadd.f32 %v287, %v493
    %v495 = vpop.f32.mrb[0].mxu0
    %v496 = vadd.f32 %v291, %v495
    %497 = vmatprep.mubr.f32.mxu0 0.0
    %498 = vmatmul.mubr.f32.gmra.mrb[0].mxu0 %v271
    %v499 = vpop.f32.mrb[0].mxu0
    %v500 = vadd.f32 %v287, %v499
    %v501 = vpop.f32.mrb[0].mxu0
    %v502 = vadd.f32 %v291, %v501
    %503 = vmatprep.mubr.f32.mxu0 0.0
    %504 = vmatmul.mubr.f32.gmra.mrb[0].mxu0 %v272
    %v505 = vpop.f32.mrb[0].mxu0
    %v506 = vadd.f32 %v287, %v505
    %v507 = vpop.f32.mrb[0].mxu0
    %v508 = vadd.f32 %v291, %v507
    %509 = vmatprep.mubr.f32.mxu0 0.0
    %510 = vmatmul.mubr.f32.gmra.mrb[0].mxu0 %v273
    %v511 = vpop.f32.mrb[0].mxu0
    %v512 = vadd.f32 %v287, %v511
    %v513 = vpop.f32.mrb[0].mxu0
    %v514 = vadd.f32 %v291, %v513
    %515 = vmatprep.mubr.f32.mxu0 0.0
    %516 = vmatmul.mubr.f32.gmra.mrb[0].mxu0 %v274
    %v517 = vpop.f32.mrb[0].mxu0
    %v518 = vadd.f32 %v287, %v517
    %v519 = vpop.f32.mrb[0].mxu0
    %v520 = vadd.f32 %v291, %v519
    %521 = vdwg.mxu0
    %522 = vst [vmem:[#allocation3] sm:$0xff] %v363
    %523 = vst [vmem:[#allocation3 + $0x8] sm:$0xff] %v365
    %524 = vst [vmem:[#allocation3 + $0x10] sm:$0xff] %v476
    %525 = vst [vmem:[#allocation3 + $0x18] sm:$0xff] %v478
    %526 = vst [vmem:[#allocation3 + $0x20] sm:$0xff] %v369
    %527 = vst [vmem:[#allocation3 + $0x28] sm:$0xff] %v371
    %528 = vst [vmem:[#allocation3 + $0x30] sm:$0xff] %v482
    %529 = vst [vmem:[#allocation3 + $0x38] sm:$0xff] %v484
    %530 = vst [vmem:[#allocation3 + $0x40] sm:$0xff] %v375
    %531 = vst [vmem:[#allocation3 + $0x48] sm:$0xff] %v377
    %532 = vst [vmem:[#allocation3 + $0x50] sm:$0xff] %v488
    %533 = vst [vmem:[#allocation3 + $0x58] sm:$0xff] %v490
    %534 = vst [vmem:[#allocation3 + $0x60] sm:$0xff] %v381
    %535 = vst [vmem:[#allocation3 + $0x68] sm:$0xff] %v383
    %536 = vst [vmem:[#allocation3 + $0x70] sm:$0xff] %v494
    %537 = vst [vmem:[#allocation3 + $0x78] sm:$0xff] %v496
    %538 = vst [vmem:[#allocation3 + $0x80] sm:$0xff] %v387
    %539 = vst [vmem:[#allocation3 + $0x88] sm:$0xff] %v389
    %540 = vst [vmem:[#allocation3 + $0x90] sm:$0xff] %v500
    %541 = vst [vmem:[#allocation3 + $0x98] sm:$0xff] %v502
    %542 = vst [vmem:[#allocation3 + $0xa0] sm:$0xff] %v393
    %543 = vst [vmem:[#allocation3 + $0xa8] sm:$0xff] %v395
    %544 = vst [vmem:[#allocation3 + $0xb0] sm:$0xff] %v506
    %545 = vst [vmem:[#allocation3 + $0xb8] sm:$0xff] %v508
    %546 = vst [vmem:[#allocation3 + $0xc0] sm:$0xff] %v399
    %547 = vst [vmem:[#allocation3 + $0xc8] sm:$0xff] %v401
    %548 = vst [vmem:[#allocation3 + $0xd0] sm:$0xff] %v512
    %549 = vst [vmem:[#allocation3 + $0xd8] sm:$0xff] %v514
    %550 = vst [vmem:[#allocation3 + $0xe0] sm:$0xff] %v405
    %551 = vst [vmem:[#allocation3 + $0xe8] sm:$0xff] %v407
    %552 = vst [vmem:[#allocation3 + $0xf0] sm:$0xff] %v518
    %553 = vst [vmem:[#allocation3 + $0xf8] sm:$0xff] %v520
    %v554 = vld [vmem:[%s7] sm:$0xff]
    %v555 = vld [vmem:[#allocation13] sm:$0xff]
    %v556 = vld [vmem:[#allocation3] sm:$0xff]
    %v557 = vld [vmem:[#allocation3 + $0x8] sm:$0xff]
    %v558 = vld [vmem:[#allocation3 + $0x10] sm:$0xff]
    %v559 = vld [vmem:[#allocation3 + $0x18] sm:$0xff]
    %560 = vmatprep.subr.mxu0 %v203
    %561 = vmatpush1.msra.mxu0 %v202
    %562 = vmatprep.subr.mxu0 %v207
    %563 = vmatpush1.msra.mxu0 %v206
    %564 = vmatprep.subr.mxu0 %v211
    %565 = vmatpush1.msra.mxu0 %v210
    %566 = vmatprep.subr.mxu0 %v215
    %567 = vmatpush1.msra.mxu0 %v214
    %568 = vmatprep.subr.mxu0 %v219
    %569 = vmatpush1.msra.mxu0 %v218
    %570 = vmatprep.subr.mxu0 %v223
    %571 = vmatpush1.msra.mxu0 %v222
    %572 = vmatprep.subr.mxu0 %v227
    %573 = vmatpush1.msra.mxu0 %v226
    %574 = vmatprep.subr.mxu0 %v231
    %575 = vmatpush1.msra.mxu0 %v230
    %576 = vmatprep.subr.mxu0 %v235
    %577 = vmatpush1.msra.mxu0 %v234
    %578 = vmatprep.subr.mxu0 %v239
    %579 = vmatpush1.msra.mxu0 %v238
    %580 = vmatprep.subr.mxu0 %v243
    %581 = vmatpush1.msra.mxu0 %v242
    %582 = vmatprep.subr.mxu0 %v247
    %583 = vmatpush1.msra.mxu0 %v246
    %584 = vmatprep.subr.mxu0 %v251
    %585 = vmatpush1.msra.mxu0 %v250
    %586 = vmatprep.subr.mxu0 %v255
    %587 = vmatpush1.msra.mxu0 %v254
    %588 = vmatprep.subr.mxu0 %v259
    %589 = vmatpush1.msra.mxu0 %v258
    %590 = vmatprep.subr.mxu0 %v263
    %591 = vmatpush1.msra.mxu0 %v262
    %592 = vmatprep.subr.mxu0 0.0
    %593 = vmatpush1.msra.mxu0 0.0
    %594 = vmatprep.subr.mxu0 0.0
    %595 = vmatpush1.msra.mxu0 0.0
    %596 = vmatprep.subr.mxu0 0.0
    %597 = vmatpush1.msra.mxu0 0.0
    %598 = vmatprep.subr.mxu0 0.0
    %599 = vmatpush1.msra.mxu0 0.0
    %600 = vmatprep.subr.mxu0 0.0
    %601 = vmatpush1.msra.mxu0 0.0
    %602 = vmatprep.subr.mxu0 0.0
    %603 = vmatpush1.msra.mxu0 0.0
    %604 = vmatprep.subr.mxu0 0.0
    %605 = vmatpush1.msra.mxu0 0.0
    %606 = vmatprep.subr.mxu0 0.0
    %607 = vmatpush1.msra.mxu0 0.0
    %608 = vmatprep.subr.mxu0 0.0
    %609 = vmatpush1.msra.mxu0 0.0
    %610 = vmatprep.subr.mxu0 0.0
    %611 = vmatpush1.msra.mxu0 0.0
    %612 = vmatprep.subr.mxu0 0.0
    %613 = vmatpush1.msra.mxu0 0.0
    %614 = vmatprep.subr.mxu0 0.0
    %615 = vmatpush1.msra.mxu0 0.0
    %616 = vmatprep.subr.mxu0 0.0
    %617 = vmatpush1.msra.mxu0 0.0
    %618 = vmatprep.subr.mxu0 0.0
    %619 = vmatpush1.msra.mxu0 0.0
    %620 = vmatprep.subr.mxu0 0.0
    %621 = vmatpush1.msra.mxu0 0.0
    %622 = vmatprep.subr.mxu0 0.0
    %623 = vmatpush1.msra.mxu0 0.0
    %624 = vmatprep.mubr.f32.mxu0 0.0
    %625 = vmatmul.mubr.f32.gmra.mrb[0].mxu0 %v554
    %v626 = vpop.f32.mrb[0].mxu0
    %v627 = vadd.f32 0.0, %v626
    %v628 = vpop.f32.mrb[0].mxu0
    %v629 = vadd.f32 0.0, %v628
    %630 = vdwg.mxu0
    %631 = vmatprep.subr.mxu0 %v205
    %632 = vmatpush1.msra.mxu0 %v204
    %633 = vmatprep.subr.mxu0 %v209
    %634 = vmatpush1.msra.mxu0 %v208
    %635 = vmatprep.subr.mxu0 %v213
    %636 = vmatpush1.msra.mxu0 %v212
    %637 = vmatprep.subr.mxu0 %v217
    %638 = vmatpush1.msra.mxu0 %v216
    %639 = vmatprep.subr.mxu0 %v221
    %640 = vmatpush1.msra.mxu0 %v220
    %641 = vmatprep.subr.mxu0 %v225
    %642 = vmatpush1.msra.mxu0 %v224
    %643 = vmatprep.subr.mxu0 %v229
    %644 = vmatpush1.msra.mxu0 %v228
    %645 = vmatprep.subr.mxu0 %v233
    %646 = vmatpush1.msra.mxu0 %v232
    %647 = vmatprep.subr.mxu0 %v237
    %648 = vmatpush1.msra.mxu0 %v236
    %649 = vmatprep.subr.mxu0 %v241
    %650 = vmatpush1.msra.mxu0 %v240
    %651 = vmatprep.subr.mxu0 %v245
    %652 = vmatpush1.msra.mxu0 %v244
    %653 = vmatprep.subr.mxu0 %v249
    %654 = vmatpush1.msra.mxu0 %v248
    %655 = vmatprep.subr.mxu0 %v253
    %656 = vmatpush1.msra.mxu0 %v252
    %657 = vmatprep.subr.mxu0 %v257
    %658 = vmatpush1.msra.mxu0 %v256
    %659 = vmatprep.subr.mxu0 %v261
    %660 = vmatpush1.msra.mxu0 %v260
    %661 = vmatprep.subr.mxu0 %v265
    %662 = vmatpush1.msra.mxu0 %v264
    %663 = vmatprep.subr.mxu0 0.0
    %664 = vmatpush1.msra.mxu0 0.0
    %665 = vmatprep.subr.mxu0 0.0
    %666 = vmatpush1.msra.mxu0 0.0
    %667 = vmatprep.subr.mxu0 0.0
    %668 = vmatpush1.msra.mxu0 0.0
    %669 = vmatprep.subr.mxu0 0.0
    %670 = vmatpush1.msra.mxu0 0.0
    %671 = vmatprep.subr.mxu0 0.0
    %672 = vmatpush1.msra.mxu0 0.0
    %673 = vmatprep.subr.mxu0 0.0
    %674 = vmatpush1.msra.mxu0 0.0
    %675 = vmatprep.subr.mxu0 0.0
    %676 = vmatpush1.msra.mxu0 0.0
    %677 = vmatprep.subr.mxu0 0.0
    %678 = vmatpush1.msra.mxu0 0.0
    %679 = vmatprep.subr.mxu0 0.0
    %680 = vmatpush1.msra.mxu0 0.0
    %681 = vmatprep.subr.mxu0 0.0
    %682 = vmatpush1.msra.mxu0 0.0
    %683 = vmatprep.subr.mxu0 0.0
    %684 = vmatpush1.msra.mxu0 0.0
    %685 = vmatprep.subr.mxu0 0.0
    %686 = vmatpush1.msra.mxu0 0.0
    %687 = vmatprep.subr.mxu0 0.0
    %688 = vmatpush1.msra.mxu0 0.0
    %689 = vmatprep.subr.mxu0 0.0
    %690 = vmatpush1.msra.mxu0 0.0
    %691 = vmatprep.subr.mxu0 0.0
    %692 = vmatpush1.msra.mxu0 0.0
    %693 = vmatprep.subr.mxu0 0.0
    %694 = vmatpush1.msra.mxu0 0.0
    %695 = vmatprep.mubr.f32.mxu0 0.0
    %696 = vmatmul.mubr.f32.gmra.mrb[0].mxu0 %v554
    %v697 = vpop.f32.mrb[0].mxu0
    %v698 = vadd.f32 0.0, %v697
    %v699 = vpop.f32.mrb[0].mxu0
    %v700 = vadd.f32 0.0, %v699
    %701 = vdwg.mxu0
    %v702 = vadd.f32 %v556, %v627
    %v703 = vadd.f32 %v557, %v629
    %v704 = vadd.f32 %v558, %v698
    %v705 = vadd.f32 %v559, %v700
    %v706 = vxor.u32 %v702, 2147483648
    %v707 = vmul.f32 %v706, 1.442695
    %v708 = vpow.pop %v707
    %v709 = vadd.f32 %v708, 1.0
    %v710 = vrcp.pop %v709
    %v711 = vmul.f32 1.0, %v710
    %v712 = vxor.u32 %v703, 2147483648
    %v713 = vmul.f32 %v712, 1.442695
    %v714 = vpow.pop %v713
    %v715 = vadd.f32 %v714, 1.0
    %v716 = vrcp.pop %v715
    %v717 = vmul.f32 1.0, %v716
    %v718 = vtanh.pop %v704
    %v719 = vxor.u32 %v705, 2147483648
    %v720 = vmul.f32 %v719, 1.442695
    %v721 = vpow.pop %v720
    %v722 = vadd.f32 %v721, 1.0
    %v723 = vrcp.pop %v722
    %v724 = vmul.f32 1.0, %v723
    %v725 = vmul.f32 %v717, %v555
    %v726 = vmul.f32 %v711, %v718
    %v727 = vadd.f32 %v725, %v726
    %v728 = vtanh.pop %v727
    %v729 = vmul.f32 %v724, %v728
    %730 = vst [vmem:[#allocation2] sm:$0xff] %v729
    %v731 = vld [vmem:[#allocation3 + $0x20] sm:$0xff]
    %v732 = vld [vmem:[#allocation3 + $0x28] sm:$0xff]
    %v733 = vld [vmem:[#allocation3 + $0x30] sm:$0xff]
    %v734 = vld [vmem:[#allocation3 + $0x38] sm:$0xff]
    %735 = vmatprep.subr.mxu0 %v203
    %736 = vmatpush1.msra.mxu0 %v202
    %737 = vmatprep.subr.mxu0 %v207
    %738 = vmatpush1.msra.mxu0 %v206
    %739 = vmatprep.subr.mxu0 %v211
    %740 = vmatpush1.msra.mxu0 %v210
    %741 = vmatprep.subr.mxu0 %v215
    %742 = vmatpush1.msra.mxu0 %v214
    %743 = vmatprep.subr.mxu0 %v219
    %744 = vmatpush1.msra.mxu0 %v218
    %745 = vmatprep.subr.mxu0 %v223
    %746 = vmatpush1.msra.mxu0 %v222
    %747 = vmatprep.subr.mxu0 %v227
    %748 = vmatpush1.msra.mxu0 %v226
    %749 = vmatprep.subr.mxu0 %v231
    %750 = vmatpush1.msra.mxu0 %v230
    %751 = vmatprep.subr.mxu0 %v235
    %752 = vmatpush1.msra.mxu0 %v234
    %753 = vmatprep.subr.mxu0 %v239
    %754 = vmatpush1.msra.mxu0 %v238
    %755 = vmatprep.subr.mxu0 %v243
    %756 = vmatpush1.msra.mxu0 %v242
    %757 = vmatprep.subr.mxu0 %v247
    %758 = vmatpush1.msra.mxu0 %v246
    %759 = vmatprep.subr.mxu0 %v251
    %760 = vmatpush1.msra.mxu0 %v250
    %761 = vmatprep.subr.mxu0 %v255
    %762 = vmatpush1.msra.mxu0 %v254
    %763 = vmatprep.subr.mxu0 %v259
    %764 = vmatpush1.msra.mxu0 %v258
    %765 = vmatprep.subr.mxu0 %v263
    %766 = vmatpush1.msra.mxu0 %v262
    %767 = vmatprep.subr.mxu0 0.0
    %768 = vmatpush1.msra.mxu0 0.0
    %769 = vmatprep.subr.mxu0 0.0
    %770 = vmatpush1.msra.mxu0 0.0
    %771 = vmatprep.subr.mxu0 0.0
    %772 = vmatpush1.msra.mxu0 0.0
    %773 = vmatprep.subr.mxu0 0.0
    %774 = vmatpush1.msra.mxu0 0.0
    %775 = vmatprep.subr.mxu0 0.0
    %776 = vmatpush1.msra.mxu0 0.0
    %777 = vmatprep.subr.mxu0 0.0
    %778 = vmatpush1.msra.mxu0 0.0
    %779 = vmatprep.subr.mxu0 0.0
    %780 = vmatpush1.msra.mxu0 0.0
    %781 = vmatprep.subr.mxu0 0.0
    %782 = vmatpush1.msra.mxu0 0.0
    %783 = vmatprep.subr.mxu0 0.0
    %784 = vmatpush1.msra.mxu0 0.0
    %785 = vmatprep.subr.mxu0 0.0
    %786 = vmatpush1.msra.mxu0 0.0
    %787 = vmatprep.subr.mxu0 0.0
    %788 = vmatpush1.msra.mxu0 0.0
    %789 = vmatprep.subr.mxu0 0.0
    %790 = vmatpush1.msra.mxu0 0.0
    %791 = vmatprep.subr.mxu0 0.0
    %792 = vmatpush1.msra.mxu0 0.0
    %793 = vmatprep.subr.mxu0 0.0
    %794 = vmatpush1.msra.mxu0 0.0
    %795 = vmatprep.subr.mxu0 0.0
    %796 = vmatpush1.msra.mxu0 0.0
    %797 = vmatprep.subr.mxu0 0.0
    %798 = vmatpush1.msra.mxu0 0.0
    %799 = vmatprep.mubr.f32.mxu0 0.0
    %800 = vmatmul.mubr.f32.gmra.mrb[0].mxu0 %v729
    %v801 = vpop.f32.mrb[0].mxu0
    %v802 = vadd.f32 0.0, %v801
    %v803 = vpop.f32.mrb[0].mxu0
    %v804 = vadd.f32 0.0, %v803
    %805 = vdwg.mxu0
    %806 = vmatprep.subr.mxu0 %v205
    %807 = vmatpush1.msra.mxu0 %v204
    %808 = vmatprep.subr.mxu0 %v209
    %809 = vmatpush1.msra.mxu0 %v208
    %810 = vmatprep.subr.mxu0 %v213
    %811 = vmatpush1.msra.mxu0 %v212
    %812 = vmatprep.subr.mxu0 %v217
    %813 = vmatpush1.msra.mxu0 %v216
    %814 = vmatprep.subr.mxu0 %v221
    %815 = vmatpush1.msra.mxu0 %v220
    %816 = vmatprep.subr.mxu0 %v225
    %817 = vmatpush1.msra.mxu0 %v224
    %818 = vmatprep.subr.mxu0 %v229
    %819 = vmatpush1.msra.mxu0 %v228
    %820 = vmatprep.subr.mxu0 %v233
    %821 = vmatpush1.msra.mxu0 %v232
    %822 = vmatprep.subr.mxu0 %v237
    %823 = vmatpush1.msra.mxu0 %v236
    %824 = vmatprep.subr.mxu0 %v241
    %825 = vmatpush1.msra.mxu0 %v240
    %826 = vmatprep.subr.mxu0 %v245
    %827 = vmatpush1.msra.mxu0 %v244
    %828 = vmatprep.subr.mxu0 %v249
    %829 = vmatpush1.msra.mxu0 %v248
    %830 = vmatprep.subr.mxu0 %v253
    %831 = vmatpush1.msra.mxu0 %v252
    %832 = vmatprep.subr.mxu0 %v257
    %833 = vmatpush1.msra.mxu0 %v256
    %834 = vmatprep.subr.mxu0 %v261
    %835 = vmatpush1.msra.mxu0 %v260
    %836 = vmatprep.subr.mxu0 %v265
    %837 = vmatpush1.msra.mxu0 %v264
    %838 = vmatprep.subr.mxu0 0.0
    %839 = vmatpush1.msra.mxu0 0.0
    %840 = vmatprep.subr.mxu0 0.0
    %841 = vmatpush1.msra.mxu0 0.0
    %842 = vmatprep.subr.mxu0 0.0
    %843 = vmatpush1.msra.mxu0 0.0
    %844 = vmatprep.subr.mxu0 0.0
    %845 = vmatpush1.msra.mxu0 0.0
    %846 = vmatprep.subr.mxu0 0.0
    %847 = vmatpush1.msra.mxu0 0.0
    %848 = vmatprep.subr.mxu0 0.0
    %849 = vmatpush1.msra.mxu0 0.0
    %850 = vmatprep.subr.mxu0 0.0
    %851 = vmatpush1.msra.mxu0 0.0
    %852 = vmatprep.subr.mxu0 0.0
    %853 = vmatpush1.msra.mxu0 0.0
    %854 = vmatprep.subr.mxu0 0.0
    %855 = vmatpush1.msra.mxu0 0.0
    %856 = vmatprep.subr.mxu0 0.0
    %857 = vmatpush1.msra.mxu0 0.0
    %858 = vmatprep.subr.mxu0 0.0
    %859 = vmatpush1.msra.mxu0 0.0
    %860 = vmatprep.subr.mxu0 0.0
    %861 = vmatpush1.msra.mxu0 0.0
    %862 = vmatprep.subr.mxu0 0.0
    %863 = vmatpush1.msra.mxu0 0.0
    %864 = vmatprep.subr.mxu0 0.0
    %865 = vmatpush1.msra.mxu0 0.0
    %866 = vmatprep.subr.mxu0 0.0
    %867 = vmatpush1.msra.mxu0 0.0
    %868 = vmatprep.subr.mxu0 0.0
    %869 = vmatpush1.msra.mxu0 0.0
    %870 = vmatprep.mubr.f32.mxu0 0.0
    %871 = vmatmul.mubr.f32.gmra.mrb[0].mxu0 %v729
    %v872 = vpop.f32.mrb[0].mxu0
    %v873 = vadd.f32 0.0, %v872
    %v874 = vpop.f32.mrb[0].mxu0
    %v875 = vadd.f32 0.0, %v874
    %876 = vdwg.mxu0
    %v877 = vadd.f32 %v731, %v802
    %v878 = vadd.f32 %v732, %v804
    %v879 = vadd.f32 %v733, %v873
    %v880 = vadd.f32 %v734, %v875
    %v881 = vxor.u32 %v877, 2147483648
    %v882 = vmul.f32 %v881, 1.442695
    %v883 = vpow.pop %v882
    %v884 = vadd.f32 %v883, 1.0
    %v885 = vrcp.pop %v884
    %v886 = vmul.f32 1.0, %v885
    %v887 = vxor.u32 %v878, 2147483648
    %v888 = vmul.f32 %v887, 1.442695
    %v889 = vpow.pop %v888
    %v890 = vadd.f32 %v889, 1.0
    %v891 = vrcp.pop %v890
    %v892 = vmul.f32 1.0, %v891
    %v893 = vtanh.pop %v879
    %v894 = vxor.u32 %v880, 2147483648
    %v895 = vmul.f32 %v894, 1.442695
    %v896 = vpow.pop %v895
    %v897 = vadd.f32 %v896, 1.0
    %v898 = vrcp.pop %v897
    %v899 = vmul.f32 1.0, %v898
    %v900 = vmul.f32 %v892, %v727
    %v901 = vmul.f32 %v886, %v893
    %v902 = vadd.f32 %v900, %v901
    %v903 = vtanh.pop %v902
    %v904 = vmul.f32 %v899, %v903
    %905 = vst [vmem:[#allocation2 + $0x8] sm:$0xff] %v904
    %v906 = vld [vmem:[#allocation3 + $0x40] sm:$0xff]
    %v907 = vld [vmem:[#allocation3 + $0x48] sm:$0xff]
    %v908 = vld [vmem:[#allocation3 + $0x50] sm:$0xff]
    %v909 = vld [vmem:[#allocation3 + $0x58] sm:$0xff]
    %910 = vmatprep.subr.mxu0 %v203
    %911 = vmatpush1.msra.mxu0 %v202
    %912 = vmatprep.subr.mxu0 %v207
    %913 = vmatpush1.msra.mxu0 %v206
    %914 = vmatprep.subr.mxu0 %v211
    %915 = vmatpush1.msra.mxu0 %v210
    %916 = vmatprep.subr.mxu0 %v215
    %917 = vmatpush1.msra.mxu0 %v214
    %918 = vmatprep.subr.mxu0 %v219
    %919 = vmatpush1.msra.mxu0 %v218
    %920 = vmatprep.subr.mxu0 %v223
    %921 = vmatpush1.msra.mxu0 %v222
    %922 = vmatprep.subr.mxu0 %v227
    %923 = vmatpush1.msra.mxu0 %v226
    %924 = vmatprep.subr.mxu0 %v231
    %925 = vmatpush1.msra.mxu0 %v230
    %926 = vmatprep.subr.mxu0 %v235
    %927 = vmatpush1.msra.mxu0 %v234
    %928 = vmatprep.subr.mxu0 %v239
    %929 = vmatpush1.msra.mxu0 %v238
    %930 = vmatprep.subr.mxu0 %v243
    %931 = vmatpush1.msra.mxu0 %v242
    %932 = vmatprep.subr.mxu0 %v247
    %933 = vmatpush1.msra.mxu0 %v246
    %934 = vmatprep.subr.mxu0 %v251
    %935 = vmatpush1.msra.mxu0 %v250
    %936 = vmatprep.subr.mxu0 %v255
    %937 = vmatpush1.msra.mxu0 %v254
    %938 = vmatprep.subr.mxu0 %v259
    %939 = vmatpush1.msra.mxu0 %v258
    %940 = vmatprep.subr.mxu0 %v263
    %941 = vmatpush1.msra.mxu0 %v262
    %942 = vmatprep.subr.mxu0 0.0
    %943 = vmatpush1.msra.mxu0 0.0
    %944 = vmatprep.subr.mxu0 0.0
    %945 = vmatpush1.msra.mxu0 0.0
    %946 = vmatprep.subr.mxu0 0.0
    %947 = vmatpush1.msra.mxu0 0.0
    %948 = vmatprep.subr.mxu0 0.0
    %949 = vmatpush1.msra.mxu0 0.0
    %950 = vmatprep.subr.mxu0 0.0
    %951 = vmatpush1.msra.mxu0 0.0
    %952 = vmatprep.subr.mxu0 0.0
    %953 = vmatpush1.msra.mxu0 0.0
    %954 = vmatprep.subr.mxu0 0.0
    %955 = vmatpush1.msra.mxu0 0.0
    %956 = vmatprep.subr.mxu0 0.0
    %957 = vmatpush1.msra.mxu0 0.0
    %958 = vmatprep.subr.mxu0 0.0
    %959 = vmatpush1.msra.mxu0 0.0
    %960 = vmatprep.subr.mxu0 0.0
    %961 = vmatpush1.msra.mxu0 0.0
    %962 = vmatprep.subr.mxu0 0.0
    %963 = vmatpush1.msra.mxu0 0.0
    %964 = vmatprep.subr.mxu0 0.0
    %965 = vmatpush1.msra.mxu0 0.0
    %966 = vmatprep.subr.mxu0 0.0
    %967 = vmatpush1.msra.mxu0 0.0
    %968 = vmatprep.subr.mxu0 0.0
    %969 = vmatpush1.msra.mxu0 0.0
    %970 = vmatprep.subr.mxu0 0.0
    %971 = vmatpush1.msra.mxu0 0.0
    %972 = vmatprep.subr.mxu0 0.0
    %973 = vmatpush1.msra.mxu0 0.0
    %974 = vmatprep.mubr.f32.mxu0 0.0
    %975 = vmatmul.mubr.f32.gmra.mrb[0].mxu0 %v904
    %v976 = vpop.f32.mrb[0].mxu0
    %v977 = vadd.f32 0.0, %v976
    %v978 = vpop.f32.mrb[0].mxu0
    %v979 = vadd.f32 0.0, %v978
    %980 = vdwg.mxu0
    %981 = vmatprep.subr.mxu0 %v205
    %982 = vmatpush1.msra.mxu0 %v204
    %983 = vmatprep.subr.mxu0 %v209
    %984 = vmatpush1.msra.mxu0 %v208
    %985 = vmatprep.subr.mxu0 %v213
    %986 = vmatpush1.msra.mxu0 %v212
    %987 = vmatprep.subr.mxu0 %v217
    %988 = vmatpush1.msra.mxu0 %v216
    %989 = vmatprep.subr.mxu0 %v221
    %990 = vmatpush1.msra.mxu0 %v220
    %991 = vmatprep.subr.mxu0 %v225
    %992 = vmatpush1.msra.mxu0 %v224
    %993 = vmatprep.subr.mxu0 %v229
    %994 = vmatpush1.msra.mxu0 %v228
    %995 = vmatprep.subr.mxu0 %v233
    %996 = vmatpush1.msra.mxu0 %v232
    %997 = vmatprep.subr.mxu0 %v237
    %998 = vmatpush1.msra.mxu0 %v236
    %999 = vmatprep.subr.mxu0 %v241
    %1000 = vmatpush1.msra.mxu0 %v240
    %1001 = vmatprep.subr.mxu0 %v245
    %1002 = vmatpush1.msra.mxu0 %v244
    %1003 = vmatprep.subr.mxu0 %v249
    %1004 = vmatpush1.msra.mxu0 %v248
    %1005 = vmatprep.subr.mxu0 %v253
    %1006 = vmatpush1.msra.mxu0 %v252
    %1007 = vmatprep.subr.mxu0 %v257
    %1008 = vmatpush1.msra.mxu0 %v256
    %1009 = vmatprep.subr.mxu0 %v261
    %1010 = vmatpush1.msra.mxu0 %v260
    %1011 = vmatprep.subr.mxu0 %v265
    %1012 = vmatpush1.msra.mxu0 %v264
    %1013 = vmatprep.subr.mxu0 0.0
    %1014 = vmatpush1.msra.mxu0 0.0
    %1015 = vmatprep.subr.mxu0 0.0
    %1016 = vmatpush1.msra.mxu0 0.0
    %1017 = vmatprep.subr.mxu0 0.0
    %1018 = vmatpush1.msra.mxu0 0.0
    %1019 = vmatprep.subr.mxu0 0.0
    %1020 = vmatpush1.msra.mxu0 0.0
    %1021 = vmatprep.subr.mxu0 0.0
    %1022 = vmatpush1.msra.mxu0 0.0
    %1023 = vmatprep.subr.mxu0 0.0
    %1024 = vmatpush1.msra.mxu0 0.0
    %1025 = vmatprep.subr.mxu0 0.0
    %1026 = vmatpush1.msra.mxu0 0.0
    %1027 = vmatprep.subr.mxu0 0.0
    %1028 = vmatpush1.msra.mxu0 0.0
    %1029 = vmatprep.subr.mxu0 0.0
    %1030 = vmatpush1.msra.mxu0 0.0
    %1031 = vmatprep.subr.mxu0 0.0
    %1032 = vmatpush1.msra.mxu0 0.0
    %1033 = vmatprep.subr.mxu0 0.0
    %1034 = vmatpush1.msra.mxu0 0.0
    %1035 = vmatprep.subr.mxu0 0.0
    %1036 = vmatpush1.msra.mxu0 0.0
    %1037 = vmatprep.subr.mxu0 0.0
    %1038 = vmatpush1.msra.mxu0 0.0
    %1039 = vmatprep.subr.mxu0 0.0
    %1040 = vmatpush1.msra.mxu0 0.0
    %1041 = vmatprep.subr.mxu0 0.0
    %1042 = vmatpush1.msra.mxu0 0.0
    %1043 = vmatprep.subr.mxu0 0.0
    %1044 = vmatpush1.msra.mxu0 0.0
    %1045 = vmatprep.mubr.f32.mxu0 0.0
    %1046 = vmatmul.mubr.f32.gmra.mrb[0].mxu0 %v904
    %v1047 = vpop.f32.mrb[0].mxu0
    %v1048 = vadd.f32 0.0, %v1047
    %v1049 = vpop.f32.mrb[0].mxu0
    %v1050 = vadd.f32 0.0, %v1049
    %1051 = vdwg.mxu0
    %v1052 = vadd.f32 %v906, %v977
    %v1053 = vadd.f32 %v907, %v979
    %v1054 = vadd.f32 %v908, %v1048
    %v1055 = vadd.f32 %v909, %v1050
    %v1056 = vxor.u32 %v1052, 2147483648
    %v1057 = vmul.f32 %v1056, 1.442695
    %v1058 = vpow.pop %v1057
    %v1059 = vadd.f32 %v1058, 1.0
    %v1060 = vrcp.pop %v1059
    %v1061 = vmul.f32 1.0, %v1060
    %v1062 = vxor.u32 %v1053, 2147483648
    %v1063 = vmul.f32 %v1062, 1.442695
    %v1064 = vpow.pop %v1063
    %v1065 = vadd.f32 %v1064, 1.0
    %v1066 = vrcp.pop %v1065
    %v1067 = vmul.f32 1.0, %v1066
    %v1068 = vtanh.pop %v1054
    %v1069 = vxor.u32 %v1055, 2147483648
    %v1070 = vmul.f32 %v1069, 1.442695
    %v1071 = vpow.pop %v1070
    %v1072 = vadd.f32 %v1071, 1.0
    %v1073 = vrcp.pop %v1072
    %v1074 = vmul.f32 1.0, %v1073
    %v1075 = vmul.f32 %v1067, %v902
    %v1076 = vmul.f32 %v1061, %v1068
    %v1077 = vadd.f32 %v1075, %v1076
    %v1078 = vtanh.pop %v1077
    %v1079 = vmul.f32 %v1074, %v1078
    %1080 = vst [vmem:[#allocation2 + $0x10] sm:$0xff] %v1079
    %v1081 = vld [vmem:[#allocation3 + $0x60] sm:$0xff]
    %v1082 = vld [vmem:[#allocation3 + $0x68] sm:$0xff]
    %v1083 = vld [vmem:[#allocation3 + $0x70] sm:$0xff]
    %v1084 = vld [vmem:[#allocation3 + $0x78] sm:$0xff]
    %1085 = vmatprep.subr.mxu0 %v203
    %1086 = vmatpush1.msra.mxu0 %v202
    %1087 = vmatprep.subr.mxu0 %v207
    %1088 = vmatpush1.msra.mxu0 %v206
    %1089 = vmatprep.subr.mxu0 %v211
    %1090 = vmatpush1.msra.mxu0 %v210
    %1091 = vmatprep.subr.mxu0 %v215
    %1092 = vmatpush1.msra.mxu0 %v214
    %1093 = vmatprep.subr.mxu0 %v219
    %1094 = vmatpush1.msra.mxu0 %v218
    %1095 = vmatprep.subr.mxu0 %v223
    %1096 = vmatpush1.msra.mxu0 %v222
    %1097 = vmatprep.subr.mxu0 %v227
    %1098 = vmatpush1.msra.mxu0 %v226
    %1099 = vmatprep.subr.mxu0 %v231
    %1100 = vmatpush1.msra.mxu0 %v230
    %1101 = vmatprep.subr.mxu0 %v235
    %1102 = vmatpush1.msra.mxu0 %v234
    %1103 = vmatprep.subr.mxu0 %v239
    %1104 = vmatpush1.msra.mxu0 %v238
    %1105 = vmatprep.subr.mxu0 %v243
    %1106 = vmatpush1.msra.mxu0 %v242
    %1107 = vmatprep.subr.mxu0 %v247
    %1108 = vmatpush1.msra.mxu0 %v246
    %1109 = vmatprep.subr.mxu0 %v251
    %1110 = vmatpush1.msra.mxu0 %v250
    %1111 = vmatprep.subr.mxu0 %v255
    %1112 = vmatpush1.msra.mxu0 %v254
    %1113 = vmatprep.subr.mxu0 %v259
    %1114 = vmatpush1.msra.mxu0 %v258
    %1115 = vmatprep.subr.mxu0 %v263
    %1116 = vmatpush1.msra.mxu0 %v262
    %1117 = vmatprep.subr.mxu0 0.0
    %1118 = vmatpush1.msra.mxu0 0.0
    %1119 = vmatprep.subr.mxu0 0.0
    %1120 = vmatpush1.msra.mxu0 0.0
    %1121 = vmatprep.subr.mxu0 0.0
    %1122 = vmatpush1.msra.mxu0 0.0
    %1123 = vmatprep.subr.mxu0 0.0
    %1124 = vmatpush1.msra.mxu0 0.0
    %1125 = vmatprep.subr.mxu0 0.0
    %1126 = vmatpush1.msra.mxu0 0.0
    %1127 = vmatprep.subr.mxu0 0.0
    %1128 = vmatpush1.msra.mxu0 0.0
    %1129 = vmatprep.subr.mxu0 0.0
    %1130 = vmatpush1.msra.mxu0 0.0
    %1131 = vmatprep.subr.mxu0 0.0
    %1132 = vmatpush1.msra.mxu0 0.0
    %1133 = vmatprep.subr.mxu0 0.0
    %1134 = vmatpush1.msra.mxu0 0.0
    %1135 = vmatprep.subr.mxu0 0.0
    %1136 = vmatpush1.msra.mxu0 0.0
    %1137 = vmatprep.subr.mxu0 0.0
    %1138 = vmatpush1.msra.mxu0 0.0
    %1139 = vmatprep.subr.mxu0 0.0
    %1140 = vmatpush1.msra.mxu0 0.0
    %1141 = vmatprep.subr.mxu0 0.0
    %1142 = vmatpush1.msra.mxu0 0.0
    %1143 = vmatprep.subr.mxu0 0.0
    %1144 = vmatpush1.msra.mxu0 0.0
    %1145 = vmatprep.subr.mxu0 0.0
    %1146 = vmatpush1.msra.mxu0 0.0
    %1147 = vmatprep.subr.mxu0 0.0
    %1148 = vmatpush1.msra.mxu0 0.0
    %1149 = vmatprep.mubr.f32.mxu0 0.0
    %1150 = vmatmul.mubr.f32.gmra.mrb[0].mxu0 %v1079
    %v1151 = vpop.f32.mrb[0].mxu0
    %v1152 = vadd.f32 0.0, %v1151
    %v1153 = vpop.f32.mrb[0].mxu0
    %v1154 = vadd.f32 0.0, %v1153
    %1155 = vdwg.mxu0
    %1156 = vmatprep.subr.mxu0 %v205
    %1157 = vmatpush1.msra.mxu0 %v204
    %1158 = vmatprep.subr.mxu0 %v209
    %1159 = vmatpush1.msra.mxu0 %v208
    %1160 = vmatprep.subr.mxu0 %v213
    %1161 = vmatpush1.msra.mxu0 %v212
    %1162 = vmatprep.subr.mxu0 %v217
    %1163 = vmatpush1.msra.mxu0 %v216
    %1164 = vmatprep.subr.mxu0 %v221
    %1165 = vmatpush1.msra.mxu0 %v220
    %1166 = vmatprep.subr.mxu0 %v225
    %1167 = vmatpush1.msra.mxu0 %v224
    %1168 = vmatprep.subr.mxu0 %v229
    %1169 = vmatpush1.msra.mxu0 %v228
    %1170 = vmatprep.subr.mxu0 %v233
    %1171 = vmatpush1.msra.mxu0 %v232
    %1172 = vmatprep.subr.mxu0 %v237
    %1173 = vmatpush1.msra.mxu0 %v236
    %1174 = vmatprep.subr.mxu0 %v241
    %1175 = vmatpush1.msra.mxu0 %v240
    %1176 = vmatprep.subr.mxu0 %v245
    %1177 = vmatpush1.msra.mxu0 %v244
    %1178 = vmatprep.subr.mxu0 %v249
    %1179 = vmatpush1.msra.mxu0 %v248
    %1180 = vmatprep.subr.mxu0 %v253
    %1181 = vmatpush1.msra.mxu0 %v252
    %1182 = vmatprep.subr.mxu0 %v257
    %1183 = vmatpush1.msra.mxu0 %v256
    %1184 = vmatprep.subr.mxu0 %v261
    %1185 = vmatpush1.msra.mxu0 %v260
    %1186 = vmatprep.subr.mxu0 %v265
    %1187 = vmatpush1.msra.mxu0 %v264
    %1188 = vmatprep.subr.mxu0 0.0
    %1189 = vmatpush1.msra.mxu0 0.0
    %1190 = vmatprep.subr.mxu0 0.0
    %1191 = vmatpush1.msra.mxu0 0.0
    %1192 = vmatprep.subr.mxu0 0.0
    %1193 = vmatpush1.msra.mxu0 0.0
    %1194 = vmatprep.subr.mxu0 0.0
    %1195 = vmatpush1.msra.mxu0 0.0
    %1196 = vmatprep.subr.mxu0 0.0
    %1197 = vmatpush1.msra.mxu0 0.0
    %1198 = vmatprep.subr.mxu0 0.0
    %1199 = vmatpush1.msra.mxu0 0.0
    %1200 = vmatprep.subr.mxu0 0.0
    %1201 = vmatpush1.msra.mxu0 0.0
    %1202 = vmatprep.subr.mxu0 0.0
    %1203 = vmatpush1.msra.mxu0 0.0
    %1204 = vmatprep.subr.mxu0 0.0
    %1205 = vmatpush1.msra.mxu0 0.0
    %1206 = vmatprep.subr.mxu0 0.0
    %1207 = vmatpush1.msra.mxu0 0.0
    %1208 = vmatprep.subr.mxu0 0.0
    %1209 = vmatpush1.msra.mxu0 0.0
    %1210 = vmatprep.subr.mxu0 0.0
    %1211 = vmatpush1.msra.mxu0 0.0
    %1212 = vmatprep.subr.mxu0 0.0
    %1213 = vmatpush1.msra.mxu0 0.0
    %1214 = vmatprep.subr.mxu0 0.0
    %1215 = vmatpush1.msra.mxu0 0.0
    %1216 = vmatprep.subr.mxu0 0.0
    %1217 = vmatpush1.msra.mxu0 0.0
    %1218 = vmatprep.subr.mxu0 0.0
    %1219 = vmatpush1.msra.mxu0 0.0
    %1220 = vmatprep.mubr.f32.mxu0 0.0
    %1221 = vmatmul.mubr.f32.gmra.mrb[0].mxu0 %v1079
    %v1222 = vpop.f32.mrb[0].mxu0
    %v1223 = vadd.f32 0.0, %v1222
    %v1224 = vpop.f32.mrb[0].mxu0
    %v1225 = vadd.f32 0.0, %v1224
    %1226 = vdwg.mxu0
    %v1227 = vadd.f32 %v1081, %v1152
    %v1228 = vadd.f32 %v1082, %v1154
    %v1229 = vadd.f32 %v1083, %v1223
    %v1230 = vadd.f32 %v1084, %v1225
    %v1231 = vxor.u32 %v1227, 2147483648
    %v1232 = vmul.f32 %v1231, 1.442695
    %v1233 = vpow.pop %v1232
    %v1234 = vadd.f32 %v1233, 1.0
    %v1235 = vrcp.pop %v1234
    %v1236 = vmul.f32 1.0, %v1235
    %v1237 = vxor.u32 %v1228, 2147483648
    %v1238 = vmul.f32 %v1237, 1.442695
    %v1239 = vpow.pop %v1238
    %v1240 = vadd.f32 %v1239, 1.0
    %v1241 = vrcp.pop %v1240
    %v1242 = vmul.f32 1.0, %v1241
    %v1243 = vtanh.pop %v1229
    %v1244 = vxor.u32 %v1230, 2147483648
    %v1245 = vmul.f32 %v1244, 1.442695
    %v1246 = vpow.pop %v1245
    %v1247 = vadd.f32 %v1246, 1.0
    %v1248 = vrcp.pop %v1247
    %v1249 = vmul.f32 1.0, %v1248
    %v1250 = vmul.f32 %v1242, %v1077
    %v1251 = vmul.f32 %v1236, %v1243
    %v1252 = vadd.f32 %v1250, %v1251
    %v1253 = vtanh.pop %v1252
    %v1254 = vmul.f32 %v1249, %v1253
    %1255 = vst [vmem:[#allocation2 + $0x18] sm:$0xff] %v1254
    %v1256 = vld [vmem:[#allocation3 + $0x80] sm:$0xff]
    %v1257 = vld [vmem:[#allocation3 + $0x88] sm:$0xff]
    %v1258 = vld [vmem:[#allocation3 + $0x90] sm:$0xff]
    %v1259 = vld [vmem:[#allocation3 + $0x98] sm:$0xff]
    %1260 = vmatprep.subr.mxu0 %v203
    %1261 = vmatpush1.msra.mxu0 %v202
    %1262 = vmatprep.subr.mxu0 %v207
    %1263 = vmatpush1.msra.mxu0 %v206
    %1264 = vmatprep.subr.mxu0 %v211
    %1265 = vmatpush1.msra.mxu0 %v210
    %1266 = vmatprep.subr.mxu0 %v215
    %1267 = vmatpush1.msra.mxu0 %v214
    %1268 = vmatprep.subr.mxu0 %v219
    %1269 = vmatpush1.msra.mxu0 %v218
    %1270 = vmatprep.subr.mxu0 %v223
    %1271 = vmatpush1.msra.mxu0 %v222
    %1272 = vmatprep.subr.mxu0 %v227
    %1273 = vmatpush1.msra.mxu0 %v226
    %1274 = vmatprep.subr.mxu0 %v231
    %1275 = vmatpush1.msra.mxu0 %v230
    %1276 = vmatprep.subr.mxu0 %v235
    %1277 = vmatpush1.msra.mxu0 %v234
    %1278 = vmatprep.subr.mxu0 %v239
    %1279 = vmatpush1.msra.mxu0 %v238
    %1280 = vmatprep.subr.mxu0 %v243
    %1281 = vmatpush1.msra.mxu0 %v242
    %1282 = vmatprep.subr.mxu0 %v247
    %1283 = vmatpush1.msra.mxu0 %v246
    %1284 = vmatprep.subr.mxu0 %v251
    %1285 = vmatpush1.msra.mxu0 %v250
    %1286 = vmatprep.subr.mxu0 %v255
    %1287 = vmatpush1.msra.mxu0 %v254
    %1288 = vmatprep.subr.mxu0 %v259
    %1289 = vmatpush1.msra.mxu0 %v258
    %1290 = vmatprep.subr.mxu0 %v263
    %1291 = vmatpush1.msra.mxu0 %v262
    %1292 = vmatprep.subr.mxu0 0.0
    %1293 = vmatpush1.msra.mxu0 0.0
    %1294 = vmatprep.subr.mxu0 0.0
    %1295 = vmatpush1.msra.mxu0 0.0
    %1296 = vmatprep.subr.mxu0 0.0
    %1297 = vmatpush1.msra.mxu0 0.0
    %1298 = vmatprep.subr.mxu0 0.0
    %1299 = vmatpush1.msra.mxu0 0.0
    %1300 = vmatprep.subr.mxu0 0.0
    %1301 = vmatpush1.msra.mxu0 0.0
    %1302 = vmatprep.subr.mxu0 0.0
    %1303 = vmatpush1.msra.mxu0 0.0
    %1304 = vmatprep.subr.mxu0 0.0
    %1305 = vmatpush1.msra.mxu0 0.0
    %1306 = vmatprep.subr.mxu0 0.0
    %1307 = vmatpush1.msra.mxu0 0.0
    %1308 = vmatprep.subr.mxu0 0.0
    %1309 = vmatpush1.msra.mxu0 0.0
    %1310 = vmatprep.subr.mxu0 0.0
    %1311 = vmatpush1.msra.mxu0 0.0
    %1312 = vmatprep.subr.mxu0 0.0
    %1313 = vmatpush1.msra.mxu0 0.0
    %1314 = vmatprep.subr.mxu0 0.0
    %1315 = vmatpush1.msra.mxu0 0.0
    %1316 = vmatprep.subr.mxu0 0.0
    %1317 = vmatpush1.msra.mxu0 0.0
    %1318 = vmatprep.subr.mxu0 0.0
    %1319 = vmatpush1.msra.mxu0 0.0
    %1320 = vmatprep.subr.mxu0 0.0
    %1321 = vmatpush1.msra.mxu0 0.0
    %1322 = vmatprep.subr.mxu0 0.0
    %1323 = vmatpush1.msra.mxu0 0.0
    %1324 = vmatprep.mubr.f32.mxu0 0.0
    %1325 = vmatmul.mubr.f32.gmra.mrb[0].mxu0 %v1254
    %v1326 = vpop.f32.mrb[0].mxu0
    %v1327 = vadd.f32 0.0, %v1326
    %v1328 = vpop.f32.mrb[0].mxu0
    %v1329 = vadd.f32 0.0, %v1328
    %1330 = vdwg.mxu0
    %1331 = vmatprep.subr.mxu0 %v205
    %1332 = vmatpush1.msra.mxu0 %v204
    %1333 = vmatprep.subr.mxu0 %v209
    %1334 = vmatpush1.msra.mxu0 %v208
    %1335 = vmatprep.subr.mxu0 %v213
    %1336 = vmatpush1.msra.mxu0 %v212
    %1337 = vmatprep.subr.mxu0 %v217
    %1338 = vmatpush1.msra.mxu0 %v216
    %1339 = vmatprep.subr.mxu0 %v221
    %1340 = vmatpush1.msra.mxu0 %v220
    %1341 = vmatprep.subr.mxu0 %v225
    %1342 = vmatpush1.msra.mxu0 %v224
    %1343 = vmatprep.subr.mxu0 %v229
    %1344 = vmatpush1.msra.mxu0 %v228
    %1345 = vmatprep.subr.mxu0 %v233
    %1346 = vmatpush1.msra.mxu0 %v232
    %1347 = vmatprep.subr.mxu0 %v237
    %1348 = vmatpush1.msra.mxu0 %v236
    %1349 = vmatprep.subr.mxu0 %v241
    %1350 = vmatpush1.msra.mxu0 %v240
    %1351 = vmatprep.subr.mxu0 %v245
    %1352 = vmatpush1.msra.mxu0 %v244
    %1353 = vmatprep.subr.mxu0 %v249
    %1354 = vmatpush1.msra.mxu0 %v248
    %1355 = vmatprep.subr.mxu0 %v253
    %1356 = vmatpush1.msra.mxu0 %v252
    %1357 = vmatprep.subr.mxu0 %v257
    %1358 = vmatpush1.msra.mxu0 %v256
    %1359 = vmatprep.subr.mxu0 %v261
    %1360 = vmatpush1.msra.mxu0 %v260
    %1361 = vmatprep.subr.mxu0 %v265
    %1362 = vmatpush1.msra.mxu0 %v264
    %1363 = vmatprep.subr.mxu0 0.0
    %1364 = vmatpush1.msra.mxu0 0.0
    %1365 = vmatprep.subr.mxu0 0.0
    %1366 = vmatpush1.msra.mxu0 0.0
    %1367 = vmatprep.subr.mxu0 0.0
    %1368 = vmatpush1.msra.mxu0 0.0
    %1369 = vmatprep.subr.mxu0 0.0
    %1370 = vmatpush1.msra.mxu0 0.0
    %1371 = vmatprep.subr.mxu0 0.0
    %1372 = vmatpush1.msra.mxu0 0.0
    %1373 = vmatprep.subr.mxu0 0.0
    %1374 = vmatpush1.msra.mxu0 0.0
    %1375 = vmatprep.subr.mxu0 0.0
    %1376 = vmatpush1.msra.mxu0 0.0
    %1377 = vmatprep.subr.mxu0 0.0
    %1378 = vmatpush1.msra.mxu0 0.0
    %1379 = vmatprep.subr.mxu0 0.0
    %1380 = vmatpush1.msra.mxu0 0.0
    %1381 = vmatprep.subr.mxu0 0.0
    %1382 = vmatpush1.msra.mxu0 0.0
    %1383 = vmatprep.subr.mxu0 0.0
    %1384 = vmatpush1.msra.mxu0 0.0
    %1385 = vmatprep.subr.mxu0 0.0
    %1386 = vmatpush1.msra.mxu0 0.0
    %1387 = vmatprep.subr.mxu0 0.0
    %1388 = vmatpush1.msra.mxu0 0.0
    %1389 = vmatprep.subr.mxu0 0.0
    %1390 = vmatpush1.msra.mxu0 0.0
    %1391 = vmatprep.subr.mxu0 0.0
    %1392 = vmatpush1.msra.mxu0 0.0
    %1393 = vmatprep.subr.mxu0 0.0
    %1394 = vmatpush1.msra.mxu0 0.0
    %1395 = vmatprep.mubr.f32.mxu0 0.0
    %1396 = vmatmul.mubr.f32.gmra.mrb[0].mxu0 %v1254
    %v1397 = vpop.f32.mrb[0].mxu0
    %v1398 = vadd.f32 0.0, %v1397
    %v1399 = vpop.f32.mrb[0].mxu0
    %v1400 = vadd.f32 0.0, %v1399
    %1401 = vdwg.mxu0
    %v1402 = vadd.f32 %v1256, %v1327
    %v1403 = vadd.f32 %v1257, %v1329
    %v1404 = vadd.f32 %v1258, %v1398
    %v1405 = vadd.f32 %v1259, %v1400
    %v1406 = vxor.u32 %v1402, 2147483648
    %v1407 = vmul.f32 %v1406, 1.442695
    %v1408 = vpow.pop %v1407
    %v1409 = vadd.f32 %v1408, 1.0
    %v1410 = vrcp.pop %v1409
    %v1411 = vmul.f32 1.0, %v1410
    %v1412 = vxor.u32 %v1403, 2147483648
    %v1413 = vmul.f32 %v1412, 1.442695
    %v1414 = vpow.pop %v1413
    %v1415 = vadd.f32 %v1414, 1.0
    %v1416 = vrcp.pop %v1415
    %v1417 = vmul.f32 1.0, %v1416
    %v1418 = vtanh.pop %v1404
    %v1419 = vxor.u32 %v1405, 2147483648
    %v1420 = vmul.f32 %v1419, 1.442695
    %v1421 = vpow.pop %v1420
    %v1422 = vadd.f32 %v1421, 1.0
    %v1423 = vrcp.pop %v1422
    %v1424 = vmul.f32 1.0, %v1423
    %v1425 = vmul.f32 %v1417, %v1252
    %v1426 = vmul.f32 %v1411, %v1418
    %v1427 = vadd.f32 %v1425, %v1426
    %v1428 = vtanh.pop %v1427
    %v1429 = vmul.f32 %v1424, %v1428
    %1430 = vst [vmem:[#allocation2 + $0x20] sm:$0xff] %v1429
    %v1431 = vld [vmem:[#allocation3 + $0xa0] sm:$0xff]
    %v1432 = vld [vmem:[#allocation3 + $0xa8] sm:$0xff]
    %v1433 = vld [vmem:[#allocation3 + $0xb0] sm:$0xff]
    %v1434 = vld [vmem:[#allocation3 + $0xb8] sm:$0xff]
    %1435 = vmatprep.subr.mxu0 %v203
    %1436 = vmatpush1.msra.mxu0 %v202
    %1437 = vmatprep.subr.mxu0 %v207
    %1438 = vmatpush1.msra.mxu0 %v206
    %1439 = vmatprep.subr.mxu0 %v211
    %1440 = vmatpush1.msra.mxu0 %v210
    %1441 = vmatprep.subr.mxu0 %v215
    %1442 = vmatpush1.msra.mxu0 %v214
    %1443 = vmatprep.subr.mxu0 %v219
    %1444 = vmatpush1.msra.mxu0 %v218
    %1445 = vmatprep.subr.mxu0 %v223
    %1446 = vmatpush1.msra.mxu0 %v222
    %1447 = vmatprep.subr.mxu0 %v227
    %1448 = vmatpush1.msra.mxu0 %v226
    %1449 = vmatprep.subr.mxu0 %v231
    %1450 = vmatpush1.msra.mxu0 %v230
    %1451 = vmatprep.subr.mxu0 %v235
    %1452 = vmatpush1.msra.mxu0 %v234
    %1453 = vmatprep.subr.mxu0 %v239
    %1454 = vmatpush1.msra.mxu0 %v238
    %1455 = vmatprep.subr.mxu0 %v243
    %1456 = vmatpush1.msra.mxu0 %v242
    %1457 = vmatprep.subr.mxu0 %v247
    %1458 = vmatpush1.msra.mxu0 %v246
    %1459 = vmatprep.subr.mxu0 %v251
    %1460 = vmatpush1.msra.mxu0 %v250
    %1461 = vmatprep.subr.mxu0 %v255
    %1462 = vmatpush1.msra.mxu0 %v254
    %1463 = vmatprep.subr.mxu0 %v259
    %1464 = vmatpush1.msra.mxu0 %v258
    %1465 = vmatprep.subr.mxu0 %v263
    %1466 = vmatpush1.msra.mxu0 %v262
    %1467 = vmatprep.subr.mxu0 0.0
    %1468 = vmatpush1.msra.mxu0 0.0
    %1469 = vmatprep.subr.mxu0 0.0
    %1470 = vmatpush1.msra.mxu0 0.0
    %1471 = vmatprep.subr.mxu0 0.0
    %1472 = vmatpush1.msra.mxu0 0.0
    %1473 = vmatprep.subr.mxu0 0.0
    %1474 = vmatpush1.msra.mxu0 0.0
    %1475 = vmatprep.subr.mxu0 0.0
    %1476 = vmatpush1.msra.mxu0 0.0
    %1477 = vmatprep.subr.mxu0 0.0
    %1478 = vmatpush1.msra.mxu0 0.0
    %1479 = vmatprep.subr.mxu0 0.0
    %1480 = vmatpush1.msra.mxu0 0.0
    %1481 = vmatprep.subr.mxu0 0.0
    %1482 = vmatpush1.msra.mxu0 0.0
    %1483 = vmatprep.subr.mxu0 0.0
    %1484 = vmatpush1.msra.mxu0 0.0
    %1485 = vmatprep.subr.mxu0 0.0
    %1486 = vmatpush1.msra.mxu0 0.0
    %1487 = vmatprep.subr.mxu0 0.0
    %1488 = vmatpush1.msra.mxu0 0.0
    %1489 = vmatprep.subr.mxu0 0.0
    %1490 = vmatpush1.msra.mxu0 0.0
    %1491 = vmatprep.subr.mxu0 0.0
    %1492 = vmatpush1.msra.mxu0 0.0
    %1493 = vmatprep.subr.mxu0 0.0
    %1494 = vmatpush1.msra.mxu0 0.0
    %1495 = vmatprep.subr.mxu0 0.0
    %1496 = vmatpush1.msra.mxu0 0.0
    %1497 = vmatprep.subr.mxu0 0.0
    %1498 = vmatpush1.msra.mxu0 0.0
    %1499 = vmatprep.mubr.f32.mxu0 0.0
    %1500 = vmatmul.mubr.f32.gmra.mrb[0].mxu0 %v1429
    %v1501 = vpop.f32.mrb[0].mxu0
    %v1502 = vadd.f32 0.0, %v1501
    %v1503 = vpop.f32.mrb[0].mxu0
    %v1504 = vadd.f32 0.0, %v1503
    %1505 = vdwg.mxu0
    %1506 = vmatprep.subr.mxu0 %v205
    %1507 = vmatpush1.msra.mxu0 %v204
    %1508 = vmatprep.subr.mxu0 %v209
    %1509 = vmatpush1.msra.mxu0 %v208
    %1510 = vmatprep.subr.mxu0 %v213
    %1511 = vmatpush1.msra.mxu0 %v212
    %1512 = vmatprep.subr.mxu0 %v217
    %1513 = vmatpush1.msra.mxu0 %v216
    %1514 = vmatprep.subr.mxu0 %v221
    %1515 = vmatpush1.msra.mxu0 %v220
    %1516 = vmatprep.subr.mxu0 %v225
    %1517 = vmatpush1.msra.mxu0 %v224
    %1518 = vmatprep.subr.mxu0 %v229
    %1519 = vmatpush1.msra.mxu0 %v228
    %1520 = vmatprep.subr.mxu0 %v233
    %1521 = vmatpush1.msra.mxu0 %v232
    %1522 = vmatprep.subr.mxu0 %v237
    %1523 = vmatpush1.msra.mxu0 %v236
    %1524 = vmatprep.subr.mxu0 %v241
    %1525 = vmatpush1.msra.mxu0 %v240
    %1526 = vmatprep.subr.mxu0 %v245
    %1527 = vmatpush1.msra.mxu0 %v244
    %1528 = vmatprep.subr.mxu0 %v249
    %1529 = vmatpush1.msra.mxu0 %v248
    %1530 = vmatprep.subr.mxu0 %v253
    %1531 = vmatpush1.msra.mxu0 %v252
    %1532 = vmatprep.subr.mxu0 %v257
    %1533 = vmatpush1.msra.mxu0 %v256
    %1534 = vmatprep.subr.mxu0 %v261
    %1535 = vmatpush1.msra.mxu0 %v260
    %1536 = vmatprep.subr.mxu0 %v265
    %1537 = vmatpush1.msra.mxu0 %v264
    %1538 = vmatprep.subr.mxu0 0.0
    %1539 = vmatpush1.msra.mxu0 0.0
    %1540 = vmatprep.subr.mxu0 0.0
    %1541 = vmatpush1.msra.mxu0 0.0
    %1542 = vmatprep.subr.mxu0 0.0
    %1543 = vmatpush1.msra.mxu0 0.0
    %1544 = vmatprep.subr.mxu0 0.0
    %1545 = vmatpush1.msra.mxu0 0.0
    %1546 = vmatprep.subr.mxu0 0.0
    %1547 = vmatpush1.msra.mxu0 0.0
    %1548 = vmatprep.subr.mxu0 0.0
    %1549 = vmatpush1.msra.mxu0 0.0
    %1550 = vmatprep.subr.mxu0 0.0
    %1551 = vmatpush1.msra.mxu0 0.0
    %1552 = vmatprep.subr.mxu0 0.0
    %1553 = vmatpush1.msra.mxu0 0.0
    %1554 = vmatprep.subr.mxu0 0.0
    %1555 = vmatpush1.msra.mxu0 0.0
    %1556 = vmatprep.subr.mxu0 0.0
    %1557 = vmatpush1.msra.mxu0 0.0
    %1558 = vmatprep.subr.mxu0 0.0
    %1559 = vmatpush1.msra.mxu0 0.0
    %1560 = vmatprep.subr.mxu0 0.0
    %1561 = vmatpush1.msra.mxu0 0.0
    %1562 = vmatprep.subr.mxu0 0.0
    %1563 = vmatpush1.msra.mxu0 0.0
    %1564 = vmatprep.subr.mxu0 0.0
    %1565 = vmatpush1.msra.mxu0 0.0
    %1566 = vmatprep.subr.mxu0 0.0
    %1567 = vmatpush1.msra.mxu0 0.0
    %1568 = vmatprep.subr.mxu0 0.0
    %1569 = vmatpush1.msra.mxu0 0.0
    %1570 = vmatprep.mubr.f32.mxu0 0.0
    %1571 = vmatmul.mubr.f32.gmra.mrb[0].mxu0 %v1429
    %v1572 = vpop.f32.mrb[0].mxu0
    %v1573 = vadd.f32 0.0, %v1572
    %v1574 = vpop.f32.mrb[0].mxu0
    %v1575 = vadd.f32 0.0, %v1574
    %1576 = vdwg.mxu0
    %v1577 = vadd.f32 %v1431, %v1502
    %v1578 = vadd.f32 %v1432, %v1504
    %v1579 = vadd.f32 %v1433, %v1573
    %v1580 = vadd.f32 %v1434, %v1575
    %v1581 = vxor.u32 %v1577, 2147483648
    %v1582 = vmul.f32 %v1581, 1.442695
    %v1583 = vpow.pop %v1582
    %v1584 = vadd.f32 %v1583, 1.0
    %v1585 = vrcp.pop %v1584
    %v1586 = vmul.f32 1.0, %v1585
    %v1587 = vxor.u32 %v1578, 2147483648
    %v1588 = vmul.f32 %v1587, 1.442695
    %v1589 = vpow.pop %v1588
    %v1590 = vadd.f32 %v1589, 1.0
    %v1591 = vrcp.pop %v1590
    %v1592 = vmul.f32 1.0, %v1591
    %v1593 = vtanh.pop %v1579
    %v1594 = vxor.u32 %v1580, 2147483648
    %v1595 = vmul.f32 %v1594, 1.442695
    %v1596 = vpow.pop %v1595
    %v1597 = vadd.f32 %v1596, 1.0
    %v1598 = vrcp.pop %v1597
    %v1599 = vmul.f32 1.0, %v1598
    %v1600 = vmul.f32 %v1592, %v1427
    %v1601 = vmul.f32 %v1586, %v1593
    %v1602 = vadd.f32 %v1600, %v1601
    %v1603 = vtanh.pop %v1602
    %v1604 = vmul.f32 %v1599, %v1603
    %1605 = vst [vmem:[#allocation2 + $0x28] sm:$0xff] %v1604
    %v1606 = vld [vmem:[#allocation3 + $0xc0] sm:$0xff]
    %v1607 = vld [vmem:[#allocation3 + $0xc8] sm:$0xff]
    %v1608 = vld [vmem:[#allocation3 + $0xd0] sm:$0xff]
    %v1609 = vld [vmem:[#allocation3 + $0xd8] sm:$0xff]
    %1610 = vmatprep.subr.mxu0 %v203
    %1611 = vmatpush1.msra.mxu0 %v202
    %1612 = vmatprep.subr.mxu0 %v207
    %1613 = vmatpush1.msra.mxu0 %v206
    %1614 = vmatprep.subr.mxu0 %v211
    %1615 = vmatpush1.msra.mxu0 %v210
    %1616 = vmatprep.subr.mxu0 %v215
    %1617 = vmatpush1.msra.mxu0 %v214
    %1618 = vmatprep.subr.mxu0 %v219
    %1619 = vmatpush1.msra.mxu0 %v218
    %1620 = vmatprep.subr.mxu0 %v223
    %1621 = vmatpush1.msra.mxu0 %v222
    %1622 = vmatprep.subr.mxu0 %v227
    %1623 = vmatpush1.msra.mxu0 %v226
    %1624 = vmatprep.subr.mxu0 %v231
    %1625 = vmatpush1.msra.mxu0 %v230
    %1626 = vmatprep.subr.mxu0 %v235
    %1627 = vmatpush1.msra.mxu0 %v234
    %1628 = vmatprep.subr.mxu0 %v239
    %1629 = vmatpush1.msra.mxu0 %v238
    %1630 = vmatprep.subr.mxu0 %v243
    %1631 = vmatpush1.msra.mxu0 %v242
    %1632 = vmatprep.subr.mxu0 %v247
    %1633 = vmatpush1.msra.mxu0 %v246
    %1634 = vmatprep.subr.mxu0 %v251
    %1635 = vmatpush1.msra.mxu0 %v250
    %1636 = vmatprep.subr.mxu0 %v255
    %1637 = vmatpush1.msra.mxu0 %v254
    %1638 = vmatprep.subr.mxu0 %v259
    %1639 = vmatpush1.msra.mxu0 %v258
    %1640 = vmatprep.subr.mxu0 %v263
    %1641 = vmatpush1.msra.mxu0 %v262
    %1642 = vmatprep.subr.mxu0 0.0
    %1643 = vmatpush1.msra.mxu0 0.0
    %1644 = vmatprep.subr.mxu0 0.0
    %1645 = vmatpush1.msra.mxu0 0.0
    %1646 = vmatprep.subr.mxu0 0.0
    %1647 = vmatpush1.msra.mxu0 0.0
    %1648 = vmatprep.subr.mxu0 0.0
    %1649 = vmatpush1.msra.mxu0 0.0
    %1650 = vmatprep.subr.mxu0 0.0
    %1651 = vmatpush1.msra.mxu0 0.0
    %1652 = vmatprep.subr.mxu0 0.0
    %1653 = vmatpush1.msra.mxu0 0.0
    %1654 = vmatprep.subr.mxu0 0.0
    %1655 = vmatpush1.msra.mxu0 0.0
    %1656 = vmatprep.subr.mxu0 0.0
    %1657 = vmatpush1.msra.mxu0 0.0
    %1658 = vmatprep.subr.mxu0 0.0
    %1659 = vmatpush1.msra.mxu0 0.0
    %1660 = vmatprep.subr.mxu0 0.0
    %1661 = vmatpush1.msra.mxu0 0.0
    %1662 = vmatprep.subr.mxu0 0.0
    %1663 = vmatpush1.msra.mxu0 0.0
    %1664 = vmatprep.subr.mxu0 0.0
    %1665 = vmatpush1.msra.mxu0 0.0
    %1666 = vmatprep.subr.mxu0 0.0
    %1667 = vmatpush1.msra.mxu0 0.0
    %1668 = vmatprep.subr.mxu0 0.0
    %1669 = vmatpush1.msra.mxu0 0.0
    %1670 = vmatprep.subr.mxu0 0.0
    %1671 = vmatpush1.msra.mxu0 0.0
    %1672 = vmatprep.subr.mxu0 0.0
    %1673 = vmatpush1.msra.mxu0 0.0
    %1674 = vmatprep.mubr.f32.mxu0 0.0
    %1675 = vmatmul.mubr.f32.gmra.mrb[0].mxu0 %v1604
    %v1676 = vpop.f32.mrb[0].mxu0
    %v1677 = vadd.f32 0.0, %v1676
    %v1678 = vpop.f32.mrb[0].mxu0
    %v1679 = vadd.f32 0.0, %v1678
    %1680 = vdwg.mxu0
    %1681 = vmatprep.subr.mxu0 %v205
    %1682 = vmatpush1.msra.mxu0 %v204
    %1683 = vmatprep.subr.mxu0 %v209
    %1684 = vmatpush1.msra.mxu0 %v208
    %1685 = vmatprep.subr.mxu0 %v213
    %1686 = vmatpush1.msra.mxu0 %v212
    %1687 = vmatprep.subr.mxu0 %v217
    %1688 = vmatpush1.msra.mxu0 %v216
    %1689 = vmatprep.subr.mxu0 %v221
    %1690 = vmatpush1.msra.mxu0 %v220
    %1691 = vmatprep.subr.mxu0 %v225
    %1692 = vmatpush1.msra.mxu0 %v224
    %1693 = vmatprep.subr.mxu0 %v229
    %1694 = vmatpush1.msra.mxu0 %v228
    %1695 = vmatprep.subr.mxu0 %v233
    %1696 = vmatpush1.msra.mxu0 %v232
    %1697 = vmatprep.subr.mxu0 %v237
    %1698 = vmatpush1.msra.mxu0 %v236
    %1699 = vmatprep.subr.mxu0 %v241
    %1700 = vmatpush1.msra.mxu0 %v240
    %1701 = vmatprep.subr.mxu0 %v245
    %1702 = vmatpush1.msra.mxu0 %v244
    %1703 = vmatprep.subr.mxu0 %v249
    %1704 = vmatpush1.msra.mxu0 %v248
    %1705 = vmatprep.subr.mxu0 %v253
    %1706 = vmatpush1.msra.mxu0 %v252
    %1707 = vmatprep.subr.mxu0 %v257
    %1708 = vmatpush1.msra.mxu0 %v256
    %1709 = vmatprep.subr.mxu0 %v261
    %1710 = vmatpush1.msra.mxu0 %v260
    %1711 = vmatprep.subr.mxu0 %v265
    %1712 = vmatpush1.msra.mxu0 %v264
    %1713 = vmatprep.subr.mxu0 0.0
    %1714 = vmatpush1.msra.mxu0 0.0
    %1715 = vmatprep.subr.mxu0 0.0
    %1716 = vmatpush1.msra.mxu0 0.0
    %1717 = vmatprep.subr.mxu0 0.0
    %1718 = vmatpush1.msra.mxu0 0.0
    %1719 = vmatprep.subr.mxu0 0.0
    %1720 = vmatpush1.msra.mxu0 0.0
    %1721 = vmatprep.subr.mxu0 0.0
    %1722 = vmatpush1.msra.mxu0 0.0
    %1723 = vmatprep.subr.mxu0 0.0
    %1724 = vmatpush1.msra.mxu0 0.0
    %1725 = vmatprep.subr.mxu0 0.0
    %1726 = vmatpush1.msra.mxu0 0.0
    %1727 = vmatprep.subr.mxu0 0.0
    %1728 = vmatpush1.msra.mxu0 0.0
    %1729 = vmatprep.subr.mxu0 0.0
    %1730 = vmatpush1.msra.mxu0 0.0
    %1731 = vmatprep.subr.mxu0 0.0
    %1732 = vmatpush1.msra.mxu0 0.0
    %1733 = vmatprep.subr.mxu0 0.0
    %1734 = vmatpush1.msra.mxu0 0.0
    %1735 = vmatprep.subr.mxu0 0.0
    %1736 = vmatpush1.msra.mxu0 0.0
    %1737 = vmatprep.subr.mxu0 0.0
    %1738 = vmatpush1.msra.mxu0 0.0
    %1739 = vmatprep.subr.mxu0 0.0
    %1740 = vmatpush1.msra.mxu0 0.0
    %1741 = vmatprep.subr.mxu0 0.0
    %1742 = vmatpush1.msra.mxu0 0.0
    %1743 = vmatprep.subr.mxu0 0.0
    %1744 = vmatpush1.msra.mxu0 0.0
    %1745 = vmatprep.mubr.f32.mxu0 0.0
    %1746 = vmatmul.mubr.f32.gmra.mrb[0].mxu0 %v1604
    %v1747 = vpop.f32.mrb[0].mxu0
    %v1748 = vadd.f32 0.0, %v1747
    %v1749 = vpop.f32.mrb[0].mxu0
    %v1750 = vadd.f32 0.0, %v1749
    %1751 = vdwg.mxu0
    %v1752 = vadd.f32 %v1606, %v1677
    %v1753 = vadd.f32 %v1607, %v1679
    %v1754 = vadd.f32 %v1608, %v1748
    %v1755 = vadd.f32 %v1609, %v1750
    %v1756 = vxor.u32 %v1752, 2147483648
    %v1757 = vmul.f32 %v1756, 1.442695
    %v1758 = vpow.pop %v1757
    %v1759 = vadd.f32 %v1758, 1.0
    %v1760 = vrcp.pop %v1759
    %v1761 = vmul.f32 1.0, %v1760
    %v1762 = vxor.u32 %v1753, 2147483648
    %v1763 = vmul.f32 %v1762, 1.442695
    %v1764 = vpow.pop %v1763
    %v1765 = vadd.f32 %v1764, 1.0
    %v1766 = vrcp.pop %v1765
    %v1767 = vmul.f32 1.0, %v1766
    %v1768 = vtanh.pop %v1754
    %v1769 = vxor.u32 %v1755, 2147483648
    %v1770 = vmul.f32 %v1769, 1.442695
    %v1771 = vpow.pop %v1770
    %v1772 = vadd.f32 %v1771, 1.0
    %v1773 = vrcp.pop %v1772
    %v1774 = vmul.f32 1.0, %v1773
    %v1775 = vmul.f32 %v1767, %v1602
    %v1776 = vmul.f32 %v1761, %v1768
    %v1777 = vadd.f32 %v1775, %v1776
    %v1778 = vtanh.pop %v1777
    %v1779 = vmul.f32 %v1774, %v1778
    %1780 = vst [vmem:[#allocation2 + $0x30] sm:$0xff] %v1779
    %v1781 = vld [vmem:[#allocation3 + $0xe0] sm:$0xff]
    %v1782 = vld [vmem:[#allocation3 + $0xe8] sm:$0xff]
    %v1783 = vld [vmem:[#allocation3 + $0xf0] sm:$0xff]
    %v1784 = vld [vmem:[#allocation3 + $0xf8] sm:$0xff]
    %1785 = vmatprep.subr.mxu0 %v203
    %1786 = vmatpush1.msra.mxu0 %v202
    %1787 = vmatprep.subr.mxu0 %v207
    %1788 = vmatpush1.msra.mxu0 %v206
    %1789 = vmatprep.subr.mxu0 %v211
    %1790 = vmatpush1.msra.mxu0 %v210
    %1791 = vmatprep.subr.mxu0 %v215
    %1792 = vmatpush1.msra.mxu0 %v214
    %1793 = vmatprep.subr.mxu0 %v219
    %1794 = vmatpush1.msra.mxu0 %v218
    %1795 = vmatprep.subr.mxu0 %v223
    %1796 = vmatpush1.msra.mxu0 %v222
    %1797 = vmatprep.subr.mxu0 %v227
    %1798 = vmatpush1.msra.mxu0 %v226
    %1799 = vmatprep.subr.mxu0 %v231
    %1800 = vmatpush1.msra.mxu0 %v230
    %1801 = vmatprep.subr.mxu0 %v235
    %1802 = vmatpush1.msra.mxu0 %v234
    %1803 = vmatprep.subr.mxu0 %v239
    %1804 = vmatpush1.msra.mxu0 %v238
    %1805 = vmatprep.subr.mxu0 %v243
    %1806 = vmatpush1.msra.mxu0 %v242
    %1807 = vmatprep.subr.mxu0 %v247
    %1808 = vmatpush1.msra.mxu0 %v246
    %1809 = vmatprep.subr.mxu0 %v251
    %1810 = vmatpush1.msra.mxu0 %v250
    %1811 = vmatprep.subr.mxu0 %v255
    %1812 = vmatpush1.msra.mxu0 %v254
    %1813 = vmatprep.subr.mxu0 %v259
    %1814 = vmatpush1.msra.mxu0 %v258
    %1815 = vmatprep.subr.mxu0 %v263
    %1816 = vmatpush1.msra.mxu0 %v262
    %1817 = vmatprep.subr.mxu0 0.0
    %1818 = vmatpush1.msra.mxu0 0.0
    %1819 = vmatprep.subr.mxu0 0.0
    %1820 = vmatpush1.msra.mxu0 0.0
    %1821 = vmatprep.subr.mxu0 0.0
    %1822 = vmatpush1.msra.mxu0 0.0
    %1823 = vmatprep.subr.mxu0 0.0
    %1824 = vmatpush1.msra.mxu0 0.0
    %1825 = vmatprep.subr.mxu0 0.0
    %1826 = vmatpush1.msra.mxu0 0.0
    %1827 = vmatprep.subr.mxu0 0.0
    %1828 = vmatpush1.msra.mxu0 0.0
    %1829 = vmatprep.subr.mxu0 0.0
    %1830 = vmatpush1.msra.mxu0 0.0
    %1831 = vmatprep.subr.mxu0 0.0
    %1832 = vmatpush1.msra.mxu0 0.0
    %1833 = vmatprep.subr.mxu0 0.0
    %1834 = vmatpush1.msra.mxu0 0.0
    %1835 = vmatprep.subr.mxu0 0.0
    %1836 = vmatpush1.msra.mxu0 0.0
    %1837 = vmatprep.subr.mxu0 0.0
    %1838 = vmatpush1.msra.mxu0 0.0
    %1839 = vmatprep.subr.mxu0 0.0
    %1840 = vmatpush1.msra.mxu0 0.0
    %1841 = vmatprep.subr.mxu0 0.0
    %1842 = vmatpush1.msra.mxu0 0.0
    %1843 = vmatprep.subr.mxu0 0.0
    %1844 = vmatpush1.msra.mxu0 0.0
    %1845 = vmatprep.subr.mxu0 0.0
    %1846 = vmatpush1.msra.mxu0 0.0
    %1847 = vmatprep.subr.mxu0 0.0
    %1848 = vmatpush1.msra.mxu0 0.0
    %1849 = vmatprep.mubr.f32.mxu0 0.0
    %1850 = vmatmul.mubr.f32.gmra.mrb[0].mxu0 %v1779
    %v1851 = vpop.f32.mrb[0].mxu0
    %v1852 = vadd.f32 0.0, %v1851
    %v1853 = vpop.f32.mrb[0].mxu0
    %v1854 = vadd.f32 0.0, %v1853
    %1855 = vdwg.mxu0
    %1856 = vmatprep.subr.mxu0 %v205
    %1857 = vmatpush1.msra.mxu0 %v204
    %1858 = vmatprep.subr.mxu0 %v209
    %1859 = vmatpush1.msra.mxu0 %v208
    %1860 = vmatprep.subr.mxu0 %v213
    %1861 = vmatpush1.msra.mxu0 %v212
    %1862 = vmatprep.subr.mxu0 %v217
    %1863 = vmatpush1.msra.mxu0 %v216
    %1864 = vmatprep.subr.mxu0 %v221
    %1865 = vmatpush1.msra.mxu0 %v220
    %1866 = vmatprep.subr.mxu0 %v225
    %1867 = vmatpush1.msra.mxu0 %v224
    %1868 = vmatprep.subr.mxu0 %v229
    %1869 = vmatpush1.msra.mxu0 %v228
    %1870 = vmatprep.subr.mxu0 %v233
    %1871 = vmatpush1.msra.mxu0 %v232
    %1872 = vmatprep.subr.mxu0 %v237
    %1873 = vmatpush1.msra.mxu0 %v236
    %1874 = vmatprep.subr.mxu0 %v241
    %1875 = vmatpush1.msra.mxu0 %v240
    %1876 = vmatprep.subr.mxu0 %v245
    %1877 = vmatpush1.msra.mxu0 %v244
    %1878 = vmatprep.subr.mxu0 %v249
    %1879 = vmatpush1.msra.mxu0 %v248
    %1880 = vmatprep.subr.mxu0 %v253
    %1881 = vmatpush1.msra.mxu0 %v252
    %1882 = vmatprep.subr.mxu0 %v257
    %1883 = vmatpush1.msra.mxu0 %v256
    %1884 = vmatprep.subr.mxu0 %v261
    %1885 = vmatpush1.msra.mxu0 %v260
    %1886 = vmatprep.subr.mxu0 %v265
    %1887 = vmatpush1.msra.mxu0 %v264
    %1888 = vmatprep.subr.mxu0 0.0
    %1889 = vmatpush1.msra.mxu0 0.0
    %1890 = vmatprep.subr.mxu0 0.0
    %1891 = vmatpush1.msra.mxu0 0.0
    %1892 = vmatprep.subr.mxu0 0.0
    %1893 = vmatpush1.msra.mxu0 0.0
    %1894 = vmatprep.subr.mxu0 0.0
    %1895 = vmatpush1.msra.mxu0 0.0
    %1896 = vmatprep.subr.mxu0 0.0
    %1897 = vmatpush1.msra.mxu0 0.0
    %1898 = vmatprep.subr.mxu0 0.0
    %1899 = vmatpush1.msra.mxu0 0.0
    %1900 = vmatprep.subr.mxu0 0.0
    %1901 = vmatpush1.msra.mxu0 0.0
    %1902 = vmatprep.subr.mxu0 0.0
    %1903 = vmatpush1.msra.mxu0 0.0
    %1904 = vmatprep.subr.mxu0 0.0
    %1905 = vmatpush1.msra.mxu0 0.0
    %1906 = vmatprep.subr.mxu0 0.0
    %1907 = vmatpush1.msra.mxu0 0.0
    %1908 = vmatprep.subr.mxu0 0.0
    %1909 = vmatpush1.msra.mxu0 0.0
    %1910 = vmatprep.subr.mxu0 0.0
    %1911 = vmatpush1.msra.mxu0 0.0
    %1912 = vmatprep.subr.mxu0 0.0
    %1913 = vmatpush1.msra.mxu0 0.0
    %1914 = vmatprep.subr.mxu0 0.0
    %1915 = vmatpush1.msra.mxu0 0.0
    %1916 = vmatprep.subr.mxu0 0.0
    %1917 = vmatpush1.msra.mxu0 0.0
    %1918 = vmatprep.subr.mxu0 0.0
    %1919 = vmatpush1.msra.mxu0 0.0
    %1920 = vmatprep.mubr.f32.mxu0 0.0
    %1921 = vmatmul.mubr.f32.gmra.mrb[0].mxu0 %v1779
    %v1922 = vpop.f32.mrb[0].mxu0
    %v1923 = vadd.f32 0.0, %v1922
    %v1924 = vpop.f32.mrb[0].mxu0
    %v1925 = vadd.f32 0.0, %v1924
    %1926 = vdwg.mxu0
    %v1927 = vadd.f32 %v1781, %v1852
    %v1928 = vadd.f32 %v1782, %v1854
    %v1929 = vadd.f32 %v1783, %v1923
    %v1930 = vadd.f32 %v1784, %v1925
    %v1931 = vxor.u32 %v1927, 2147483648
    %v1932 = vmul.f32 %v1931, 1.442695
    %v1933 = vpow.pop %v1932
    %v1934 = vadd.f32 %v1933, 1.0
    %v1935 = vrcp.pop %v1934
    %v1936 = vmul.f32 1.0, %v1935
    %v1937 = vxor.u32 %v1928, 2147483648
    %v1938 = vmul.f32 %v1937, 1.442695
    %v1939 = vpow.pop %v1938
    %v1940 = vadd.f32 %v1939, 1.0
    %v1941 = vrcp.pop %v1940
    %v1942 = vmul.f32 1.0, %v1941
    %v1943 = vtanh.pop %v1929
    %v1944 = vxor.u32 %v1930, 2147483648
    %v1945 = vmul.f32 %v1944, 1.442695
    %v1946 = vpow.pop %v1945
    %v1947 = vadd.f32 %v1946, 1.0
    %v1948 = vrcp.pop %v1947
    %v1949 = vmul.f32 1.0, %v1948
    %v1950 = vmul.f32 %v1942, %v1777
    %v1951 = vmul.f32 %v1936, %v1943
    %v1952 = vadd.f32 %v1950, %v1951
    %v1953 = vtanh.pop %v1952
    %v1954 = vmul.f32 %v1949, %v1953
    %1955 = vst [vmem:[#allocation2 + $0x38] sm:$0xff] %v1954
    %1956 = vst [vmem:[#allocation17] sm:$0xff] %v1954
    %1957 = vst [vmem:[#allocation19] sm:$0xff] %v1952
    %v1958 = vld [vmem:[#allocation10] sm:$0xff]
    %v1959 = vld [vmem:[#allocation10 + $0x8] sm:$0xff]
    %v1960 = vld [vmem:[#allocation10 + $0x10] sm:$0xff]
    %v1961 = vld [vmem:[#allocation10 + $0x18] sm:$0xff]
    %v1962 = vld [vmem:[#allocation10 + $0x20] sm:$0xff]
    %v1963 = vld [vmem:[#allocation10 + $0x28] sm:$0xff]
    %v1964 = vld [vmem:[#allocation10 + $0x30] sm:$0xff]
    %v1965 = vld [vmem:[#allocation10 + $0x38] sm:$0xff]
    %v1966 = vld [vmem:[#allocation10 + $0x40] sm:$0xff]
    %v1967 = vld [vmem:[#allocation10 + $0x48] sm:$0xff]
    %v1968 = vld [vmem:[#allocation10 + $0x50] sm:$0xff]
    %v1969 = vld [vmem:[#allocation10 + $0x58] sm:$0xff]
    %v1970 = vld [vmem:[#allocation10 + $0x60] sm:$0xff]
    %v1971 = vld [vmem:[#allocation10 + $0x68] sm:$0xff]
    %v1972 = vld [vmem:[#allocation10 + $0x70] sm:$0xff]
    %v1973 = vld [vmem:[#allocation10 + $0x78] sm:$0xff]
    %v1974 = vld [vmem:[#allocation10 + $0x80] sm:$0xff]
    %v1975 = vld [vmem:[#allocation10 + $0x88] sm:$0xff]
    %v1976 = vld [vmem:[#allocation10 + $0x90] sm:$0xff]
    %v1977 = vld [vmem:[#allocation10 + $0x98] sm:$0xff]
    %v1978 = vld [vmem:[#allocation10 + $0xa0] sm:$0xff]
    %v1979 = vld [vmem:[#allocation10 + $0xa8] sm:$0xff]
    %v1980 = vld [vmem:[#allocation10 + $0xb0] sm:$0xff]
    %v1981 = vld [vmem:[#allocation10 + $0xb8] sm:$0xff]
    %v1982 = vld [vmem:[#allocation10 + $0xc0] sm:$0xff]
    %v1983 = vld [vmem:[#allocation10 + $0xc8] sm:$0xff]
    %v1984 = vld [vmem:[#allocation10 + $0xd0] sm:$0xff]
    %v1985 = vld [vmem:[#allocation10 + $0xd8] sm:$0xff]
    %v1986 = vld [vmem:[#allocation10 + $0xe0] sm:$0xff]
    %v1987 = vld [vmem:[#allocation10 + $0xe8] sm:$0xff]
    %v1988 = vld [vmem:[#allocation10 + $0xf0] sm:$0xff]
    %v1989 = vld [vmem:[#allocation10 + $0xf8] sm:$0xff]
    %v1990 = vld [vmem:[#allocation10 + $0x100] sm:$0xff]
    %v1991 = vld [vmem:[#allocation10 + $0x108] sm:$0xff]
    %v1992 = vld [vmem:[#allocation10 + $0x110] sm:$0xff]
    %v1993 = vld [vmem:[#allocation10 + $0x118] sm:$0xff]
    %v1994 = vld [vmem:[#allocation10 + $0x120] sm:$0xff]
    %v1995 = vld [vmem:[#allocation10 + $0x128] sm:$0xff]
    %v1996 = vld [vmem:[#allocation10 + $0x130] sm:$0xff]
    %v1997 = vld [vmem:[#allocation10 + $0x138] sm:$0xff]
    %v1998 = vld [vmem:[#allocation10 + $0x140] sm:$0xff]
    %v1999 = vld [vmem:[#allocation10 + $0x148] sm:$0xff]
    %v2000 = vld [vmem:[#allocation10 + $0x150] sm:$0xff]
    %v2001 = vld [vmem:[#allocation10 + $0x158] sm:$0xff]
    %v2002 = vld [vmem:[#allocation10 + $0x160] sm:$0xff]
    %v2003 = vld [vmem:[#allocation10 + $0x168] sm:$0xff]
    %v2004 = vld [vmem:[#allocation10 + $0x170] sm:$0xff]
    %v2005 = vld [vmem:[#allocation10 + $0x178] sm:$0xff]
    %v2006 = vld [vmem:[#allocation10 + $0x180] sm:$0xff]
    %v2007 = vld [vmem:[#allocation10 + $0x188] sm:$0xff]
    %v2008 = vld [vmem:[#allocation10 + $0x190] sm:$0xff]
    %v2009 = vld [vmem:[#allocation10 + $0x198] sm:$0xff]
    %v2010 = vld [vmem:[#allocation10 + $0x1a0] sm:$0xff]
    %v2011 = vld [vmem:[#allocation10 + $0x1a8] sm:$0xff]
    %v2012 = vld [vmem:[#allocation10 + $0x1b0] sm:$0xff]
    %v2013 = vld [vmem:[#allocation10 + $0x1b8] sm:$0xff]
    %v2014 = vld [vmem:[#allocation10 + $0x1c0] sm:$0xff]
    %v2015 = vld [vmem:[#allocation10 + $0x1c8] sm:$0xff]
    %v2016 = vld [vmem:[#allocation10 + $0x1d0] sm:$0xff]
    %v2017 = vld [vmem:[#allocation10 + $0x1d8] sm:$0xff]
    %v2018 = vld [vmem:[#allocation10 + $0x1e0] sm:$0xff]
    %v2019 = vld [vmem:[#allocation10 + $0x1e8] sm:$0xff]
    %v2020 = vld [vmem:[#allocation10 + $0x1f0] sm:$0xff]
    %v2021 = vld [vmem:[#allocation10 + $0x1f8] sm:$0xff]
    %v2022 = vld [vmem:[#allocation12] sm:$0xff]
    %v2023 = vld [vmem:[#allocation12 + $0x8] sm:$0xff]
    %v2024 = vld [vmem:[#allocation12 + $0x10] sm:$0xff]
    %v2025 = vld [vmem:[#allocation12 + $0x18] sm:$0xff]
    %v2026 = vld [vmem:[#allocation12 + $0x20] sm:$0xff]
    %v2027 = vld [vmem:[#allocation12 + $0x28] sm:$0xff]
    %v2028 = vld [vmem:[#allocation12 + $0x30] sm:$0xff]
    %v2029 = vld [vmem:[#allocation12 + $0x38] sm:$0xff]
    %v2030 = vld [vmem:[#allocation12 + $0x40] sm:$0xff]
    %v2031 = vld [vmem:[#allocation12 + $0x48] sm:$0xff]
    %v2032 = vld [vmem:[#allocation12 + $0x50] sm:$0xff]
    %v2033 = vld [vmem:[#allocation12 + $0x58] sm:$0xff]
    %v2034 = vld [vmem:[#allocation12 + $0x60] sm:$0xff]
    %v2035 = vld [vmem:[#allocation12 + $0x68] sm:$0xff]
    %v2036 = vld [vmem:[#allocation12 + $0x70] sm:$0xff]
    %v2037 = vld [vmem:[#allocation12 + $0x78] sm:$0xff]
    %v2038 = vld [vmem:[#allocation12 + $0x80] sm:$0xff]
    %v2039 = vld [vmem:[#allocation12 + $0x88] sm:$0xff]
    %v2040 = vld [vmem:[#allocation12 + $0x90] sm:$0xff]
    %v2041 = vld [vmem:[#allocation12 + $0x98] sm:$0xff]
    %v2042 = vld [vmem:[#allocation12 + $0xa0] sm:$0xff]
    %v2043 = vld [vmem:[#allocation12 + $0xa8] sm:$0xff]
    %v2044 = vld [vmem:[#allocation12 + $0xb0] sm:$0xff]
    %v2045 = vld [vmem:[#allocation12 + $0xb8] sm:$0xff]
    %v2046 = vld [vmem:[#allocation12 + $0xc0] sm:$0xff]
    %v2047 = vld [vmem:[#allocation12 + $0xc8] sm:$0xff]
    %v2048 = vld [vmem:[#allocation12 + $0xd0] sm:$0xff]
    %v2049 = vld [vmem:[#allocation12 + $0xd8] sm:$0xff]
    %v2050 = vld [vmem:[#allocation12 + $0xe0] sm:$0xff]
    %v2051 = vld [vmem:[#allocation12 + $0xe8] sm:$0xff]
    %v2052 = vld [vmem:[#allocation12 + $0xf0] sm:$0xff]
    %v2053 = vld [vmem:[#allocation12 + $0xf8] sm:$0xff]
    %v2054 = vld [vmem:[#allocation12 + $0x100] sm:$0xff]
    %v2055 = vld [vmem:[#allocation12 + $0x108] sm:$0xff]
    %v2056 = vld [vmem:[#allocation12 + $0x110] sm:$0xff]
    %v2057 = vld [vmem:[#allocation12 + $0x118] sm:$0xff]
    %v2058 = vld [vmem:[#allocation12 + $0x120] sm:$0xff]
    %v2059 = vld [vmem:[#allocation12 + $0x128] sm:$0xff]
    %v2060 = vld [vmem:[#allocation12 + $0x130] sm:$0xff]
    %v2061 = vld [vmem:[#allocation12 + $0x138] sm:$0xff]
    %v2062 = vld [vmem:[#allocation12 + $0x140] sm:$0xff]
    %v2063 = vld [vmem:[#allocation12 + $0x148] sm:$0xff]
    %v2064 = vld [vmem:[#allocation12 + $0x150] sm:$0xff]
    %v2065 = vld [vmem:[#allocation12 + $0x158] sm:$0xff]
    %v2066 = vld [vmem:[#allocation12 + $0x160] sm:$0xff]
    %v2067 = vld [vmem:[#allocation12 + $0x168] sm:$0xff]
    %v2068 = vld [vmem:[#allocation12 + $0x170] sm:$0xff]
    %v2069 = vld [vmem:[#allocation12 + $0x178] sm:$0xff]
    %v2070 = vld [vmem:[#allocation12 + $0x180] sm:$0xff]
    %v2071 = vld [vmem:[#allocation12 + $0x188] sm:$0xff]
    %v2072 = vld [vmem:[#allocation12 + $0x190] sm:$0xff]
    %v2073 = vld [vmem:[#allocation12 + $0x198] sm:$0xff]
    %v2074 = vld [vmem:[#allocation12 + $0x1a0] sm:$0xff]
    %v2075 = vld [vmem:[#allocation12 + $0x1a8] sm:$0xff]
    %v2076 = vld [vmem:[#allocation12 + $0x1b0] sm:$0xff]
    %v2077 = vld [vmem:[#allocation12 + $0x1b8] sm:$0xff]
    %v2078 = vld [vmem:[#allocation12 + $0x1c0] sm:$0xff]
    %v2079 = vld [vmem:[#allocation12 + $0x1c8] sm:$0xff]
    %v2080 = vld [vmem:[#allocation12 + $0x1d0] sm:$0xff]
    %v2081 = vld [vmem:[#allocation12 + $0x1d8] sm:$0xff]
    %v2082 = vld [vmem:[#allocation12 + $0x1e0] sm:$0xff]
    %v2083 = vld [vmem:[#allocation12 + $0x1e8] sm:$0xff]
    %v2084 = vld [vmem:[#allocation12 + $0x1f0] sm:$0xff]
    %v2085 = vld [vmem:[#allocation12 + $0x1f8] sm:$0xff]
    %v2086 = vld [vmem:[%s6] sm:$0xf]
    %v2087 = vld [vmem:[#allocation2] sm:$0xff]
    %v2088 = vld [vmem:[#allocation2 + $0x8] sm:$0xff]
    %v2089 = vld [vmem:[#allocation2 + $0x10] sm:$0xff]
    %v2090 = vld [vmem:[#allocation2 + $0x18] sm:$0xff]
    %v2091 = vld [vmem:[#allocation2 + $0x20] sm:$0xff]
    %v2092 = vld [vmem:[#allocation2 + $0x28] sm:$0xff]
    %v2093 = vld [vmem:[#allocation2 + $0x30] sm:$0xff]
    %v2094 = vld [vmem:[#allocation2 + $0x38] sm:$0xff]
    %v2096 = vlaneseq
    %v2097 = vshrl.u32 %v2096, 7
    %v2098 = vsub.s32 0, %v2097
    %v2099 = vrot.slane %v2086, %v2098
    %v2100 = vlaneseq
    %v2101 = vshrl.u32 %v2100, 7
    %v2102 = vsub.s32 1, %v2101
    %v2103 = vrot.slane %v2086, %v2102
    %v2104 = vlaneseq
    %v2105 = vshrl.u32 %v2104, 7
    %v2106 = vsub.s32 2, %v2105
    %v2107 = vrot.slane %v2086, %v2106
    %v2108 = vlaneseq
    %v2109 = vshrl.u32 %v2108, 7
    %v2110 = vsub.s32 3, %v2109
    %v2111 = vrot.slane %v2086, %v2110
    %2116 = vmatprep.subr.mxu0 %v1959
    %2117 = vmatpush1.msra.mxu0 %v1958
    %2118 = vmatprep.subr.mxu0 %v1963
    %2119 = vmatpush1.msra.mxu0 %v1962
    %2120 = vmatprep.subr.mxu0 %v1967
    %2121 = vmatpush1.msra.mxu0 %v1966
    %2122 = vmatprep.subr.mxu0 %v1971
    %2123 = vmatpush1.msra.mxu0 %v1970
    %2124 = vmatprep.subr.mxu0 %v1975
    %2125 = vmatpush1.msra.mxu0 %v1974
    %2126 = vmatprep.subr.mxu0 %v1979
    %2127 = vmatpush1.msra.mxu0 %v1978
    %2128 = vmatprep.subr.mxu0 %v1983
    %2129 = vmatpush1.msra.mxu0 %v1982
    %2130 = vmatprep.subr.mxu0 %v1987
    %2131 = vmatpush1.msra.mxu0 %v1986
    %2132 = vmatprep.subr.mxu0 %v1991
    %2133 = vmatpush1.msra.mxu0 %v1990
    %2134 = vmatprep.subr.mxu0 %v1995
    %2135 = vmatpush1.msra.mxu0 %v1994
    %2136 = vmatprep.subr.mxu0 %v1999
    %2137 = vmatpush1.msra.mxu0 %v1998
    %2138 = vmatprep.subr.mxu0 %v2003
    %2139 = vmatpush1.msra.mxu0 %v2002
    %2140 = vmatprep.subr.mxu0 %v2007
    %2141 = vmatpush1.msra.mxu0 %v2006
    %2142 = vmatprep.subr.mxu0 %v2011
    %2143 = vmatpush1.msra.mxu0 %v2010
    %2144 = vmatprep.subr.mxu0 %v2015
    %2145 = vmatpush1.msra.mxu0 %v2014
    %2146 = vmatprep.subr.mxu0 %v2019
    %2147 = vmatpush1.msra.mxu0 %v2018
    %2148 = vmatprep.subr.mxu0 0.0
    %2149 = vmatpush1.msra.mxu0 0.0
    %2150 = vmatprep.subr.mxu0 0.0
    %2151 = vmatpush1.msra.mxu0 0.0
    %2152 = vmatprep.subr.mxu0 0.0
    %2153 = vmatpush1.msra.mxu0 0.0
    %2154 = vmatprep.subr.mxu0 0.0
    %2155 = vmatpush1.msra.mxu0 0.0
    %2156 = vmatprep.subr.mxu0 0.0
    %2157 = vmatpush1.msra.mxu0 0.0
    %2158 = vmatprep.subr.mxu0 0.0
    %2159 = vmatpush1.msra.mxu0 0.0
    %2160 = vmatprep.subr.mxu0 0.0
    %2161 = vmatpush1.msra.mxu0 0.0
    %2162 = vmatprep.subr.mxu0 0.0
    %2163 = vmatpush1.msra.mxu0 0.0
    %2164 = vmatprep.subr.mxu0 0.0
    %2165 = vmatpush1.msra.mxu0 0.0
    %2166 = vmatprep.subr.mxu0 0.0
    %2167 = vmatpush1.msra.mxu0 0.0
    %2168 = vmatprep.subr.mxu0 0.0
    %2169 = vmatpush1.msra.mxu0 0.0
    %2170 = vmatprep.subr.mxu0 0.0
    %2171 = vmatpush1.msra.mxu0 0.0
    %2172 = vmatprep.subr.mxu0 0.0
    %2173 = vmatpush1.msra.mxu0 0.0
    %2174 = vmatprep.subr.mxu0 0.0
    %2175 = vmatpush1.msra.mxu0 0.0
    %2176 = vmatprep.subr.mxu0 0.0
    %2177 = vmatpush1.msra.mxu0 0.0
    %2178 = vmatprep.subr.mxu0 0.0
    %2179 = vmatpush1.msra.mxu0 0.0
    %2180 = vmatprep.mubr.f32.mxu0 0.0
    %2181 = vmatmul.mubr.f32.gmra.mrb[0].mxu0 %v2087
    %v2182 = vpop.f32.mrb[0].mxu0
    %v2183 = vadd.f32 %v2099, %v2182
    %v2184 = vpop.f32.mrb[0].mxu0
    %v2185 = vadd.f32 %v2103, %v2184
    %2186 = vmatprep.mubr.f32.mxu0 0.0
    %2187 = vmatmul.mubr.f32.gmra.mrb[0].mxu0 %v2088
    %v2188 = vpop.f32.mrb[0].mxu0
    %v2189 = vadd.f32 %v2099, %v2188
    %v2190 = vpop.f32.mrb[0].mxu0
    %v2191 = vadd.f32 %v2103, %v2190
    %2192 = vmatprep.mubr.f32.mxu0 0.0
    %2193 = vmatmul.mubr.f32.gmra.mrb[0].mxu0 %v2089
    %v2194 = vpop.f32.mrb[0].mxu0
    %v2195 = vadd.f32 %v2099, %v2194
    %v2196 = vpop.f32.mrb[0].mxu0
    %v2197 = vadd.f32 %v2103, %v2196
    %2198 = vmatprep.mubr.f32.mxu0 0.0
    %2199 = vmatmul.mubr.f32.gmra.mrb[0].mxu0 %v2090
    %v2200 = vpop.f32.mrb[0].mxu0
    %v2201 = vadd.f32 %v2099, %v2200
    %v2202 = vpop.f32.mrb[0].mxu0
    %v2203 = vadd.f32 %v2103, %v2202
    %2204 = vmatprep.mubr.f32.mxu0 0.0
    %2205 = vmatmul.mubr.f32.gmra.mrb[0].mxu0 %v2091
    %v2206 = vpop.f32.mrb[0].mxu0
    %v2207 = vadd.f32 %v2099, %v2206
    %v2208 = vpop.f32.mrb[0].mxu0
    %v2209 = vadd.f32 %v2103, %v2208
    %2210 = vmatprep.mubr.f32.mxu0 0.0
    %2211 = vmatmul.mubr.f32.gmra.mrb[0].mxu0 %v2092
    %v2212 = vpop.f32.mrb[0].mxu0
    %v2213 = vadd.f32 %v2099, %v2212
    %v2214 = vpop.f32.mrb[0].mxu0
    %v2215 = vadd.f32 %v2103, %v2214
    %2216 = vmatprep.mubr.f32.mxu0 0.0
    %2217 = vmatmul.mubr.f32.gmra.mrb[0].mxu0 %v2093
    %v2218 = vpop.f32.mrb[0].mxu0
    %v2219 = vadd.f32 %v2099, %v2218
    %v2220 = vpop.f32.mrb[0].mxu0
    %v2221 = vadd.f32 %v2103, %v2220
    %2222 = vmatprep.mubr.f32.mxu0 0.0
    %2223 = vmatmul.mubr.f32.gmra.mrb[0].mxu0 %v2094
    %v2224 = vpop.f32.mrb[0].mxu0
    %v2225 = vadd.f32 %v2099, %v2224
    %v2226 = vpop.f32.mrb[0].mxu0
    %v2227 = vadd.f32 %v2103, %v2226
    %2228 = vdwg.mxu0
    %2229 = vmatprep.subr.mxu0 %v1961
    %2230 = vmatpush1.msra.mxu0 %v1960
    %2231 = vmatprep.subr.mxu0 %v1965
    %2232 = vmatpush1.msra.mxu0 %v1964
    %2233 = vmatprep.subr.mxu0 %v1969
    %2234 = vmatpush1.msra.mxu0 %v1968
    %2235 = vmatprep.subr.mxu0 %v1973
    %2236 = vmatpush1.msra.mxu0 %v1972
    %2237 = vmatprep.subr.mxu0 %v1977
    %2238 = vmatpush1.msra.mxu0 %v1976
    %2239 = vmatprep.subr.mxu0 %v1981
    %2240 = vmatpush1.msra.mxu0 %v1980
    %2241 = vmatprep.subr.mxu0 %v1985
    %2242 = vmatpush1.msra.mxu0 %v1984
    %2243 = vmatprep.subr.mxu0 %v1989
    %2244 = vmatpush1.msra.mxu0 %v1988
    %2245 = vmatprep.subr.mxu0 %v1993
    %2246 = vmatpush1.msra.mxu0 %v1992
    %2247 = vmatprep.subr.mxu0 %v1997
    %2248 = vmatpush1.msra.mxu0 %v1996
    %2249 = vmatprep.subr.mxu0 %v2001
    %2250 = vmatpush1.msra.mxu0 %v2000
    %2251 = vmatprep.subr.mxu0 %v2005
    %2252 = vmatpush1.msra.mxu0 %v2004
    %2253 = vmatprep.subr.mxu0 %v2009
    %2254 = vmatpush1.msra.mxu0 %v2008
    %2255 = vmatprep.subr.mxu0 %v2013
    %2256 = vmatpush1.msra.mxu0 %v2012
    %2257 = vmatprep.subr.mxu0 %v2017
    %2258 = vmatpush1.msra.mxu0 %v2016
    %2259 = vmatprep.subr.mxu0 %v2021
    %2260 = vmatpush1.msra.mxu0 %v2020
    %2261 = vmatprep.subr.mxu0 0.0
    %2262 = vmatpush1.msra.mxu0 0.0
    %2263 = vmatprep.subr.mxu0 0.0
    %2264 = vmatpush1.msra.mxu0 0.0
    %2265 = vmatprep.subr.mxu0 0.0
    %2266 = vmatpush1.msra.mxu0 0.0
    %2267 = vmatprep.subr.mxu0 0.0
    %2268 = vmatpush1.msra.mxu0 0.0
    %2269 = vmatprep.subr.mxu0 0.0
    %2270 = vmatpush1.msra.mxu0 0.0
    %2271 = vmatprep.subr.mxu0 0.0
    %2272 = vmatpush1.msra.mxu0 0.0
    %2273 = vmatprep.subr.mxu0 0.0
    %2274 = vmatpush1.msra.mxu0 0.0
    %2275 = vmatprep.subr.mxu0 0.0
    %2276 = vmatpush1.msra.mxu0 0.0
    %2277 = vmatprep.subr.mxu0 0.0
    %2278 = vmatpush1.msra.mxu0 0.0
    %2279 = vmatprep.subr.mxu0 0.0
    %2280 = vmatpush1.msra.mxu0 0.0
    %2281 = vmatprep.subr.mxu0 0.0
    %2282 = vmatpush1.msra.mxu0 0.0
    %2283 = vmatprep.subr.mxu0 0.0
    %2284 = vmatpush1.msra.mxu0 0.0
    %2285 = vmatprep.subr.mxu0 0.0
    %2286 = vmatpush1.msra.mxu0 0.0
    %2287 = vmatprep.subr.mxu0 0.0
    %2288 = vmatpush1.msra.mxu0 0.0
    %2289 = vmatprep.subr.mxu0 0.0
    %2290 = vmatpush1.msra.mxu0 0.0
    %2291 = vmatprep.subr.mxu0 0.0
    %2292 = vmatpush1.msra.mxu0 0.0
    %2293 = vmatprep.mubr.f32.mxu0 0.0
    %2294 = vmatmul.mubr.f32.gmra.mrb[0].mxu0 %v2087
    %v2295 = vpop.f32.mrb[0].mxu0
    %v2296 = vadd.f32 %v2107, %v2295
    %v2297 = vpop.f32.mrb[0].mxu0
    %v2298 = vadd.f32 %v2111, %v2297
    %2299 = vmatprep.mubr.f32.mxu0 0.0
    %2300 = vmatmul.mubr.f32.gmra.mrb[0].mxu0 %v2088
    %v2301 = vpop.f32.mrb[0].mxu0
    %v2302 = vadd.f32 %v2107, %v2301
    %v2303 = vpop.f32.mrb[0].mxu0
    %v2304 = vadd.f32 %v2111, %v2303
    %2305 = vmatprep.mubr.f32.mxu0 0.0
    %2306 = vmatmul.mubr.f32.gmra.mrb[0].mxu0 %v2089
    %v2307 = vpop.f32.mrb[0].mxu0
    %v2308 = vadd.f32 %v2107, %v2307
    %v2309 = vpop.f32.mrb[0].mxu0
    %v2310 = vadd.f32 %v2111, %v2309
    %2311 = vmatprep.mubr.f32.mxu0 0.0
    %2312 = vmatmul.mubr.f32.gmra.mrb[0].mxu0 %v2090
    %v2313 = vpop.f32.mrb[0].mxu0
    %v2314 = vadd.f32 %v2107, %v2313
    %v2315 = vpop.f32.mrb[0].mxu0
    %v2316 = vadd.f32 %v2111, %v2315
    %2317 = vmatprep.mubr.f32.mxu0 0.0
    %2318 = vmatmul.mubr.f32.gmra.mrb[0].mxu0 %v2091
    %v2319 = vpop.f32.mrb[0].mxu0
    %v2320 = vadd.f32 %v2107, %v2319
    %v2321 = vpop.f32.mrb[0].mxu0
    %v2322 = vadd.f32 %v2111, %v2321
    %2323 = vmatprep.mubr.f32.mxu0 0.0
    %2324 = vmatmul.mubr.f32.gmra.mrb[0].mxu0 %v2092
    %v2325 = vpop.f32.mrb[0].mxu0
    %v2326 = vadd.f32 %v2107, %v2325
    %v2327 = vpop.f32.mrb[0].mxu0
    %v2328 = vadd.f32 %v2111, %v2327
    %2329 = vmatprep.mubr.f32.mxu0 0.0
    %2330 = vmatmul.mubr.f32.gmra.mrb[0].mxu0 %v2093
    %v2331 = vpop.f32.mrb[0].mxu0
    %v2332 = vadd.f32 %v2107, %v2331
    %v2333 = vpop.f32.mrb[0].mxu0
    %v2334 = vadd.f32 %v2111, %v2333
    %2335 = vmatprep.mubr.f32.mxu0 0.0
    %2336 = vmatmul.mubr.f32.gmra.mrb[0].mxu0 %v2094
    %v2337 = vpop.f32.mrb[0].mxu0
    %v2338 = vadd.f32 %v2107, %v2337
    %v2339 = vpop.f32.mrb[0].mxu0
    %v2340 = vadd.f32 %v2111, %v2339
    %2341 = vdwg.mxu0
    %2342 = vst [vmem:[#allocation3] sm:$0xff] %v2183
    %2343 = vst [vmem:[#allocation3 + $0x8] sm:$0xff] %v2185
    %2344 = vst [vmem:[#allocation3 + $0x10] sm:$0xff] %v2296
    %2345 = vst [vmem:[#allocation3 + $0x18] sm:$0xff] %v2298
    %2346 = vst [vmem:[#allocation3 + $0x20] sm:$0xff] %v2189
    %2347 = vst [vmem:[#allocation3 + $0x28] sm:$0xff] %v2191
    %2348 = vst [vmem:[#allocation3 + $0x30] sm:$0xff] %v2302
    %2349 = vst [vmem:[#allocation3 + $0x38] sm:$0xff] %v2304
    %2350 = vst [vmem:[#allocation3 + $0x40] sm:$0xff] %v2195
    %2351 = vst [vmem:[#allocation3 + $0x48] sm:$0xff] %v2197
    %2352 = vst [vmem:[#allocation3 + $0x50] sm:$0xff] %v2308
    %2353 = vst [vmem:[#allocation3 + $0x58] sm:$0xff] %v2310
    %2354 = vst [vmem:[#allocation3 + $0x60] sm:$0xff] %v2201
    %2355 = vst [vmem:[#allocation3 + $0x68] sm:$0xff] %v2203
    %2356 = vst [vmem:[#allocation3 + $0x70] sm:$0xff] %v2314
    %2357 = vst [vmem:[#allocation3 + $0x78] sm:$0xff] %v2316
    %2358 = vst [vmem:[#allocation3 + $0x80] sm:$0xff] %v2207
    %2359 = vst [vmem:[#allocation3 + $0x88] sm:$0xff] %v2209
    %2360 = vst [vmem:[#allocation3 + $0x90] sm:$0xff] %v2320
    %2361 = vst [vmem:[#allocation3 + $0x98] sm:$0xff] %v2322
    %2362 = vst [vmem:[#allocation3 + $0xa0] sm:$0xff] %v2213
    %2363 = vst [vmem:[#allocation3 + $0xa8] sm:$0xff] %v2215
    %2364 = vst [vmem:[#allocation3 + $0xb0] sm:$0xff] %v2326
    %2365 = vst [vmem:[#allocation3 + $0xb8] sm:$0xff] %v2328
    %2366 = vst [vmem:[#allocation3 + $0xc0] sm:$0xff] %v2219
    %2367 = vst [vmem:[#allocation3 + $0xc8] sm:$0xff] %v2221
    %2368 = vst [vmem:[#allocation3 + $0xd0] sm:$0xff] %v2332
    %2369 = vst [vmem:[#allocation3 + $0xd8] sm:$0xff] %v2334
    %2370 = vst [vmem:[#allocation3 + $0xe0] sm:$0xff] %v2225
    %2371 = vst [vmem:[#allocation3 + $0xe8] sm:$0xff] %v2227
    %2372 = vst [vmem:[#allocation3 + $0xf0] sm:$0xff] %v2338
    %2373 = vst [vmem:[#allocation3 + $0xf8] sm:$0xff] %v2340
    %s2374 = scalar_lea.vmem %s7, 8
    %v2375 = vld [vmem:[%s2374] sm:$0xff]
    %s2376 = scalar_lea.vmem [#allocation13], 8
    %v2377 = vld [vmem:[%s2376] sm:$0xff]
    %v2378 = vld [vmem:[#allocation3] sm:$0xff]
    %v2379 = vld [vmem:[#allocation3 + $0x8] sm:$0xff]
    %v2380 = vld [vmem:[#allocation3 + $0x10] sm:$0xff]
    %v2381 = vld [vmem:[#allocation3 + $0x18] sm:$0xff]
    %2382 = vmatprep.subr.mxu0 %v2023
    %2383 = vmatpush1.msra.mxu0 %v2022
    %2384 = vmatprep.subr.mxu0 %v2027
    %2385 = vmatpush1.msra.mxu0 %v2026
    %2386 = vmatprep.subr.mxu0 %v2031
    %2387 = vmatpush1.msra.mxu0 %v2030
    %2388 = vmatprep.subr.mxu0 %v2035
    %2389 = vmatpush1.msra.mxu0 %v2034
    %2390 = vmatprep.subr.mxu0 %v2039
    %2391 = vmatpush1.msra.mxu0 %v2038
    %2392 = vmatprep.subr.mxu0 %v2043
    %2393 = vmatpush1.msra.mxu0 %v2042
    %2394 = vmatprep.subr.mxu0 %v2047
    %2395 = vmatpush1.msra.mxu0 %v2046
    %2396 = vmatprep.subr.mxu0 %v2051
    %2397 = vmatpush1.msra.mxu0 %v2050
    %2398 = vmatprep.subr.mxu0 %v2055
    %2399 = vmatpush1.msra.mxu0 %v2054
    %2400 = vmatprep.subr.mxu0 %v2059
    %2401 = vmatpush1.msra.mxu0 %v2058
    %2402 = vmatprep.subr.mxu0 %v2063
    %2403 = vmatpush1.msra.mxu0 %v2062
    %2404 = vmatprep.subr.mxu0 %v2067
    %2405 = vmatpush1.msra.mxu0 %v2066
    %2406 = vmatprep.subr.mxu0 %v2071
    %2407 = vmatpush1.msra.mxu0 %v2070
    %2408 = vmatprep.subr.mxu0 %v2075
    %2409 = vmatpush1.msra.mxu0 %v2074
    %2410 = vmatprep.subr.mxu0 %v2079
    %2411 = vmatpush1.msra.mxu0 %v2078
    %2412 = vmatprep.subr.mxu0 %v2083
    %2413 = vmatpush1.msra.mxu0 %v2082
    %2414 = vmatprep.subr.mxu0 0.0
    %2415 = vmatpush1.msra.mxu0 0.0
    %2416 = vmatprep.subr.mxu0 0.0
    %2417 = vmatpush1.msra.mxu0 0.0
    %2418 = vmatprep.subr.mxu0 0.0
    %2419 = vmatpush1.msra.mxu0 0.0
    %2420 = vmatprep.subr.mxu0 0.0
    %2421 = vmatpush1.msra.mxu0 0.0
    %2422 = vmatprep.subr.mxu0 0.0
    %2423 = vmatpush1.msra.mxu0 0.0
    %2424 = vmatprep.subr.mxu0 0.0
    %2425 = vmatpush1.msra.mxu0 0.0
    %2426 = vmatprep.subr.mxu0 0.0
    %2427 = vmatpush1.msra.mxu0 0.0
    %2428 = vmatprep.subr.mxu0 0.0
    %2429 = vmatpush1.msra.mxu0 0.0
    %2430 = vmatprep.subr.mxu0 0.0
    %2431 = vmatpush1.msra.mxu0 0.0
    %2432 = vmatprep.subr.mxu0 0.0
    %2433 = vmatpush1.msra.mxu0 0.0
    %2434 = vmatprep.subr.mxu0 0.0
    %2435 = vmatpush1.msra.mxu0 0.0
    %2436 = vmatprep.subr.mxu0 0.0
    %2437 = vmatpush1.msra.mxu0 0.0
    %2438 = vmatprep.subr.mxu0 0.0
    %2439 = vmatpush1.msra.mxu0 0.0
    %2440 = vmatprep.subr.mxu0 0.0
    %2441 = vmatpush1.msra.mxu0 0.0
    %2442 = vmatprep.subr.mxu0 0.0
    %2443 = vmatpush1.msra.mxu0 0.0
    %2444 = vmatprep.subr.mxu0 0.0
    %2445 = vmatpush1.msra.mxu0 0.0
    %2446 = vmatprep.mubr.f32.mxu0 0.0
    %2447 = vmatmul.mubr.f32.gmra.mrb[0].mxu0 %v2375
    %v2448 = vpop.f32.mrb[0].mxu0
    %v2449 = vadd.f32 0.0, %v2448
    %v2450 = vpop.f32.mrb[0].mxu0
    %v2451 = vadd.f32 0.0, %v2450
    %2452 = vdwg.mxu0
    %2453 = vmatprep.subr.mxu0 %v2025
    %2454 = vmatpush1.msra.mxu0 %v2024
    %2455 = vmatprep.subr.mxu0 %v2029
    %2456 = vmatpush1.msra.mxu0 %v2028
    %2457 = vmatprep.subr.mxu0 %v2033
    %2458 = vmatpush1.msra.mxu0 %v2032
    %2459 = vmatprep.subr.mxu0 %v2037
    %2460 = vmatpush1.msra.mxu0 %v2036
    %2461 = vmatprep.subr.mxu0 %v2041
    %2462 = vmatpush1.msra.mxu0 %v2040
    %2463 = vmatprep.subr.mxu0 %v2045
    %2464 = vmatpush1.msra.mxu0 %v2044
    %2465 = vmatprep.subr.mxu0 %v2049
    %2466 = vmatpush1.msra.mxu0 %v2048
    %2467 = vmatprep.subr.mxu0 %v2053
    %2468 = vmatpush1.msra.mxu0 %v2052
    %2469 = vmatprep.subr.mxu0 %v2057
    %2470 = vmatpush1.msra.mxu0 %v2056
    %2471 = vmatprep.subr.mxu0 %v2061
    %2472 = vmatpush1.msra.mxu0 %v2060
    %2473 = vmatprep.subr.mxu0 %v2065
    %2474 = vmatpush1.msra.mxu0 %v2064
    %2475 = vmatprep.subr.mxu0 %v2069
    %2476 = vmatpush1.msra.mxu0 %v2068
    %2477 = vmatprep.subr.mxu0 %v2073
    %2478 = vmatpush1.msra.mxu0 %v2072
    %2479 = vmatprep.subr.mxu0 %v2077
    %2480 = vmatpush1.msra.mxu0 %v2076
    %2481 = vmatprep.subr.mxu0 %v2081
    %2482 = vmatpush1.msra.mxu0 %v2080
    %2483 = vmatprep.subr.mxu0 %v2085
    %2484 = vmatpush1.msra.mxu0 %v2084
    %2485 = vmatprep.subr.mxu0 0.0
    %2486 = vmatpush1.msra.mxu0 0.0
    %2487 = vmatprep.subr.mxu0 0.0
    %2488 = vmatpush1.msra.mxu0 0.0
    %2489 = vmatprep.subr.mxu0 0.0
    %2490 = vmatpush1.msra.mxu0 0.0
    %2491 = vmatprep.subr.mxu0 0.0
    %2492 = vmatpush1.msra.mxu0 0.0
    %2493 = vmatprep.subr.mxu0 0.0
    %2494 = vmatpush1.msra.mxu0 0.0
    %2495 = vmatprep.subr.mxu0 0.0
    %2496 = vmatpush1.msra.mxu0 0.0
    %2497 = vmatprep.subr.mxu0 0.0
    %2498 = vmatpush1.msra.mxu0 0.0
    %2499 = vmatprep.subr.mxu0 0.0
    %2500 = vmatpush1.msra.mxu0 0.0
    %2501 = vmatprep.subr.mxu0 0.0
    %2502 = vmatpush1.msra.mxu0 0.0
    %2503 = vmatprep.subr.mxu0 0.0
    %2504 = vmatpush1.msra.mxu0 0.0
    %2505 = vmatprep.subr.mxu0 0.0
    %2506 = vmatpush1.msra.mxu0 0.0
    %2507 = vmatprep.subr.mxu0 0.0
    %2508 = vmatpush1.msra.mxu0 0.0
    %2509 = vmatprep.subr.mxu0 0.0
    %2510 = vmatpush1.msra.mxu0 0.0
    %2511 = vmatprep.subr.mxu0 0.0
    %2512 = vmatpush1.msra.mxu0 0.0
    %2513 = vmatprep.subr.mxu0 0.0
    %2514 = vmatpush1.msra.mxu0 0.0
    %2515 = vmatprep.subr.mxu0 0.0
    %2516 = vmatpush1.msra.mxu0 0.0
    %2517 = vmatprep.mubr.f32.mxu0 0.0
    %2518 = vmatmul.mubr.f32.gmra.mrb[0].mxu0 %v2375
    %v2519 = vpop.f32.mrb[0].mxu0
    %v2520 = vadd.f32 0.0, %v2519
    %v2521 = vpop.f32.mrb[0].mxu0
    %v2522 = vadd.f32 0.0, %v2521
    %2523 = vdwg.mxu0
    %v2524 = vadd.f32 %v2378, %v2449
    %v2525 = vadd.f32 %v2379, %v2451
    %v2526 = vadd.f32 %v2380, %v2520
    %v2527 = vadd.f32 %v2381, %v2522
    %v2528 = vxor.u32 %v2524, 2147483648
    %v2529 = vmul.f32 %v2528, 1.442695
    %v2530 = vpow.pop %v2529
    %v2531 = vadd.f32 %v2530, 1.0
    %v2532 = vrcp.pop %v2531
    %v2533 = vmul.f32 1.0, %v2532
    %v2534 = vxor.u32 %v2525, 2147483648
    %v2535 = vmul.f32 %v2534, 1.442695
    %v2536 = vpow.pop %v2535
    %v2537 = vadd.f32 %v2536, 1.0
    %v2538 = vrcp.pop %v2537
    %v2539 = vmul.f32 1.0, %v2538
    %v2540 = vtanh.pop %v2526
    %v2541 = vxor.u32 %v2527, 2147483648
    %v2542 = vmul.f32 %v2541, 1.442695
    %v2543 = vpow.pop %v2542
    %v2544 = vadd.f32 %v2543, 1.0
    %v2545 = vrcp.pop %v2544
    %v2546 = vmul.f32 1.0, %v2545
    %v2547 = vmul.f32 %v2539, %v2377
    %v2548 = vmul.f32 %v2533, %v2540
    %v2549 = vadd.f32 %v2547, %v2548
    %v2550 = vtanh.pop %v2549
    %v2551 = vmul.f32 %v2546, %v2550
    %2552 = vst [vmem:[#allocation2] sm:$0xff] %v2551
    %v2553 = vld [vmem:[#allocation3 + $0x20] sm:$0xff]
    %v2554 = vld [vmem:[#allocation3 + $0x28] sm:$0xff]
    %v2555 = vld [vmem:[#allocation3 + $0x30] sm:$0xff]
    %v2556 = vld [vmem:[#allocation3 + $0x38] sm:$0xff]
    %2557 = vmatprep.subr.mxu0 %v2023
    %2558 = vmatpush1.msra.mxu0 %v2022
    %2559 = vmatprep.subr.mxu0 %v2027
    %2560 = vmatpush1.msra.mxu0 %v2026
    %2561 = vmatprep.subr.mxu0 %v2031
    %2562 = vmatpush1.msra.mxu0 %v2030
    %2563 = vmatprep.subr.mxu0 %v2035
    %2564 = vmatpush1.msra.mxu0 %v2034
    %2565 = vmatprep.subr.mxu0 %v2039
    %2566 = vmatpush1.msra.mxu0 %v2038
    %2567 = vmatprep.subr.mxu0 %v2043
    %2568 = vmatpush1.msra.mxu0 %v2042
    %2569 = vmatprep.subr.mxu0 %v2047
    %2570 = vmatpush1.msra.mxu0 %v2046
    %2571 = vmatprep.subr.mxu0 %v2051
    %2572 = vmatpush1.msra.mxu0 %v2050
    %2573 = vmatprep.subr.mxu0 %v2055
    %2574 = vmatpush1.msra.mxu0 %v2054
    %2575 = vmatprep.subr.mxu0 %v2059
    %2576 = vmatpush1.msra.mxu0 %v2058
    %2577 = vmatprep.subr.mxu0 %v2063
    %2578 = vmatpush1.msra.mxu0 %v2062
    %2579 = vmatprep.subr.mxu0 %v2067
    %2580 = vmatpush1.msra.mxu0 %v2066
    %2581 = vmatprep.subr.mxu0 %v2071
    %2582 = vmatpush1.msra.mxu0 %v2070
    %2583 = vmatprep.subr.mxu0 %v2075
    %2584 = vmatpush1.msra.mxu0 %v2074
    %2585 = vmatprep.subr.mxu0 %v2079
    %2586 = vmatpush1.msra.mxu0 %v2078
    %2587 = vmatprep.subr.mxu0 %v2083
    %2588 = vmatpush1.msra.mxu0 %v2082
    %2589 = vmatprep.subr.mxu0 0.0
    %2590 = vmatpush1.msra.mxu0 0.0
    %2591 = vmatprep.subr.mxu0 0.0
    %2592 = vmatpush1.msra.mxu0 0.0
    %2593 = vmatprep.subr.mxu0 0.0
    %2594 = vmatpush1.msra.mxu0 0.0
    %2595 = vmatprep.subr.mxu0 0.0
    %2596 = vmatpush1.msra.mxu0 0.0
    %2597 = vmatprep.subr.mxu0 0.0
    %2598 = vmatpush1.msra.mxu0 0.0
    %2599 = vmatprep.subr.mxu0 0.0
    %2600 = vmatpush1.msra.mxu0 0.0
    %2601 = vmatprep.subr.mxu0 0.0
    %2602 = vmatpush1.msra.mxu0 0.0
    %2603 = vmatprep.subr.mxu0 0.0
    %2604 = vmatpush1.msra.mxu0 0.0
    %2605 = vmatprep.subr.mxu0 0.0
    %2606 = vmatpush1.msra.mxu0 0.0
    %2607 = vmatprep.subr.mxu0 0.0
    %2608 = vmatpush1.msra.mxu0 0.0
    %2609 = vmatprep.subr.mxu0 0.0
    %2610 = vmatpush1.msra.mxu0 0.0
    %2611 = vmatprep.subr.mxu0 0.0
    %2612 = vmatpush1.msra.mxu0 0.0
    %2613 = vmatprep.subr.mxu0 0.0
    %2614 = vmatpush1.msra.mxu0 0.0
    %2615 = vmatprep.subr.mxu0 0.0
    %2616 = vmatpush1.msra.mxu0 0.0
    %2617 = vmatprep.subr.mxu0 0.0
    %2618 = vmatpush1.msra.mxu0 0.0
    %2619 = vmatprep.subr.mxu0 0.0
    %2620 = vmatpush1.msra.mxu0 0.0
    %2621 = vmatprep.mubr.f32.mxu0 0.0
    %2622 = vmatmul.mubr.f32.gmra.mrb[0].mxu0 %v2551
    %v2623 = vpop.f32.mrb[0].mxu0
    %v2624 = vadd.f32 0.0, %v2623
    %v2625 = vpop.f32.mrb[0].mxu0
    %v2626 = vadd.f32 0.0, %v2625
    %2627 = vdwg.mxu0
    %2628 = vmatprep.subr.mxu0 %v2025
    %2629 = vmatpush1.msra.mxu0 %v2024
    %2630 = vmatprep.subr.mxu0 %v2029
    %2631 = vmatpush1.msra.mxu0 %v2028
    %2632 = vmatprep.subr.mxu0 %v2033
    %2633 = vmatpush1.msra.mxu0 %v2032
    %2634 = vmatprep.subr.mxu0 %v2037
    %2635 = vmatpush1.msra.mxu0 %v2036
    %2636 = vmatprep.subr.mxu0 %v2041
    %2637 = vmatpush1.msra.mxu0 %v2040
    %2638 = vmatprep.subr.mxu0 %v2045
    %2639 = vmatpush1.msra.mxu0 %v2044
    %2640 = vmatprep.subr.mxu0 %v2049
    %2641 = vmatpush1.msra.mxu0 %v2048
    %2642 = vmatprep.subr.mxu0 %v2053
    %2643 = vmatpush1.msra.mxu0 %v2052
    %2644 = vmatprep.subr.mxu0 %v2057
    %2645 = vmatpush1.msra.mxu0 %v2056
    %2646 = vmatprep.subr.mxu0 %v2061
    %2647 = vmatpush1.msra.mxu0 %v2060
    %2648 = vmatprep.subr.mxu0 %v2065
    %2649 = vmatpush1.msra.mxu0 %v2064
    %2650 = vmatprep.subr.mxu0 %v2069
    %2651 = vmatpush1.msra.mxu0 %v2068
    %2652 = vmatprep.subr.mxu0 %v2073
    %2653 = vmatpush1.msra.mxu0 %v2072
    %2654 = vmatprep.subr.mxu0 %v2077
    %2655 = vmatpush1.msra.mxu0 %v2076
    %2656 = vmatprep.subr.mxu0 %v2081
    %2657 = vmatpush1.msra.mxu0 %v2080
    %2658 = vmatprep.subr.mxu0 %v2085
    %2659 = vmatpush1.msra.mxu0 %v2084
    %2660 = vmatprep.subr.mxu0 0.0
    %2661 = vmatpush1.msra.mxu0 0.0
    %2662 = vmatprep.subr.mxu0 0.0
    %2663 = vmatpush1.msra.mxu0 0.0
    %2664 = vmatprep.subr.mxu0 0.0
    %2665 = vmatpush1.msra.mxu0 0.0
    %2666 = vmatprep.subr.mxu0 0.0
    %2667 = vmatpush1.msra.mxu0 0.0
    %2668 = vmatprep.subr.mxu0 0.0
    %2669 = vmatpush1.msra.mxu0 0.0
    %2670 = vmatprep.subr.mxu0 0.0
    %2671 = vmatpush1.msra.mxu0 0.0
    %2672 = vmatprep.subr.mxu0 0.0
    %2673 = vmatpush1.msra.mxu0 0.0
    %2674 = vmatprep.subr.mxu0 0.0
    %2675 = vmatpush1.msra.mxu0 0.0
    %2676 = vmatprep.subr.mxu0 0.0
    %2677 = vmatpush1.msra.mxu0 0.0
    %2678 = vmatprep.subr.mxu0 0.0
    %2679 = vmatpush1.msra.mxu0 0.0
    %2680 = vmatprep.subr.mxu0 0.0
    %2681 = vmatpush1.msra.mxu0 0.0
    %2682 = vmatprep.subr.mxu0 0.0
    %2683 = vmatpush1.msra.mxu0 0.0
    %2684 = vmatprep.subr.mxu0 0.0
    %2685 = vmatpush1.msra.mxu0 0.0
    %2686 = vmatprep.subr.mxu0 0.0
    %2687 = vmatpush1.msra.mxu0 0.0
    %2688 = vmatprep.subr.mxu0 0.0
    %2689 = vmatpush1.msra.mxu0 0.0
    %2690 = vmatprep.subr.mxu0 0.0
    %2691 = vmatpush1.msra.mxu0 0.0
    %2692 = vmatprep.mubr.f32.mxu0 0.0
    %2693 = vmatmul.mubr.f32.gmra.mrb[0].mxu0 %v2551
    %v2694 = vpop.f32.mrb[0].mxu0
    %v2695 = vadd.f32 0.0, %v2694
    %v2696 = vpop.f32.mrb[0].mxu0
    %v2697 = vadd.f32 0.0, %v2696
    %2698 = vdwg.mxu0
    %v2699 = vadd.f32 %v2553, %v2624
    %v2700 = vadd.f32 %v2554, %v2626
    %v2701 = vadd.f32 %v2555, %v2695
    %v2702 = vadd.f32 %v2556, %v2697
    %v2703 = vxor.u32 %v2699, 2147483648
    %v2704 = vmul.f32 %v2703, 1.442695
    %v2705 = vpow.pop %v2704
    %v2706 = vadd.f32 %v2705, 1.0
    %v2707 = vrcp.pop %v2706
    %v2708 = vmul.f32 1.0, %v2707
    %v2709 = vxor.u32 %v2700, 2147483648
    %v2710 = vmul.f32 %v2709, 1.442695
    %v2711 = vpow.pop %v2710
    %v2712 = vadd.f32 %v2711, 1.0
    %v2713 = vrcp.pop %v2712
    %v2714 = vmul.f32 1.0, %v2713
    %v2715 = vtanh.pop %v2701
    %v2716 = vxor.u32 %v2702, 2147483648
    %v2717 = vmul.f32 %v2716, 1.442695
    %v2718 = vpow.pop %v2717
    %v2719 = vadd.f32 %v2718, 1.0
    %v2720 = vrcp.pop %v2719
    %v2721 = vmul.f32 1.0, %v2720
    %v2722 = vmul.f32 %v2714, %v2549
    %v2723 = vmul.f32 %v2708, %v2715
    %v2724 = vadd.f32 %v2722, %v2723
    %v2725 = vtanh.pop %v2724
    %v2726 = vmul.f32 %v2721, %v2725
    %2727 = vst [vmem:[#allocation2 + $0x8] sm:$0xff] %v2726
    %v2728 = vld [vmem:[#allocation3 + $0x40] sm:$0xff]
    %v2729 = vld [vmem:[#allocation3 + $0x48] sm:$0xff]
    %v2730 = vld [vmem:[#allocation3 + $0x50] sm:$0xff]
    %v2731 = vld [vmem:[#allocation3 + $0x58] sm:$0xff]
    %2732 = vmatprep.subr.mxu0 %v2023
    %2733 = vmatpush1.msra.mxu0 %v2022
    %2734 = vmatprep.subr.mxu0 %v2027
    %2735 = vmatpush1.msra.mxu0 %v2026
    %2736 = vmatprep.subr.mxu0 %v2031
    %2737 = vmatpush1.msra.mxu0 %v2030
    %2738 = vmatprep.subr.mxu0 %v2035
    %2739 = vmatpush1.msra.mxu0 %v2034
    %2740 = vmatprep.subr.mxu0 %v2039
    %2741 = vmatpush1.msra.mxu0 %v2038
    %2742 = vmatprep.subr.mxu0 %v2043
    %2743 = vmatpush1.msra.mxu0 %v2042
    %2744 = vmatprep.subr.mxu0 %v2047
    %2745 = vmatpush1.msra.mxu0 %v2046
    %2746 = vmatprep.subr.mxu0 %v2051
    %2747 = vmatpush1.msra.mxu0 %v2050
    %2748 = vmatprep.subr.mxu0 %v2055
    %2749 = vmatpush1.msra.mxu0 %v2054
    %2750 = vmatprep.subr.mxu0 %v2059
    %2751 = vmatpush1.msra.mxu0 %v2058
    %2752 = vmatprep.subr.mxu0 %v2063
    %2753 = vmatpush1.msra.mxu0 %v2062
    %2754 = vmatprep.subr.mxu0 %v2067
    %2755 = vmatpush1.msra.mxu0 %v2066
    %2756 = vmatprep.subr.mxu0 %v2071
    %2757 = vmatpush1.msra.mxu0 %v2070
    %2758 = vmatprep.subr.mxu0 %v2075
    %2759 = vmatpush1.msra.mxu0 %v2074
    %2760 = vmatprep.subr.mxu0 %v2079
    %2761 = vmatpush1.msra.mxu0 %v2078
    %2762 = vmatprep.subr.mxu0 %v2083
    %2763 = vmatpush1.msra.mxu0 %v2082
    %2764 = vmatprep.subr.mxu0 0.0
    %2765 = vmatpush1.msra.mxu0 0.0
    %2766 = vmatprep.subr.mxu0 0.0
    %2767 = vmatpush1.msra.mxu0 0.0
    %2768 = vmatprep.subr.mxu0 0.0
    %2769 = vmatpush1.msra.mxu0 0.0
    %2770 = vmatprep.subr.mxu0 0.0
    %2771 = vmatpush1.msra.mxu0 0.0
    %2772 = vmatprep.subr.mxu0 0.0
    %2773 = vmatpush1.msra.mxu0 0.0
    %2774 = vmatprep.subr.mxu0 0.0
    %2775 = vmatpush1.msra.mxu0 0.0
    %2776 = vmatprep.subr.mxu0 0.0
    %2777 = vmatpush1.msra.mxu0 0.0
    %2778 = vmatprep.subr.mxu0 0.0
    %2779 = vmatpush1.msra.mxu0 0.0
    %2780 = vmatprep.subr.mxu0 0.0
    %2781 = vmatpush1.msra.mxu0 0.0
    %2782 = vmatprep.subr.mxu0 0.0
    %2783 = vmatpush1.msra.mxu0 0.0
    %2784 = vmatprep.subr.mxu0 0.0
    %2785 = vmatpush1.msra.mxu0 0.0
    %2786 = vmatprep.subr.mxu0 0.0
    %2787 = vmatpush1.msra.mxu0 0.0
    %2788 = vmatprep.subr.mxu0 0.0
    %2789 = vmatpush1.msra.mxu0 0.0
    %2790 = vmatprep.subr.mxu0 0.0
    %2791 = vmatpush1.msra.mxu0 0.0
    %2792 = vmatprep.subr.mxu0 0.0
    %2793 = vmatpush1.msra.mxu0 0.0
    %2794 = vmatprep.subr.mxu0 0.0
    %2795 = vmatpush1.msra.mxu0 0.0
    %2796 = vmatprep.mubr.f32.mxu0 0.0
    %2797 = vmatmul.mubr.f32.gmra.mrb[0].mxu0 %v2726
    %v2798 = vpop.f32.mrb[0].mxu0
    %v2799 = vadd.f32 0.0, %v2798
    %v2800 = vpop.f32.mrb[0].mxu0
    %v2801 = vadd.f32 0.0, %v2800
    %2802 = vdwg.mxu0
    %2803 = vmatprep.subr.mxu0 %v2025
    %2804 = vmatpush1.msra.mxu0 %v2024
    %2805 = vmatprep.subr.mxu0 %v2029
    %2806 = vmatpush1.msra.mxu0 %v2028
    %2807 = vmatprep.subr.mxu0 %v2033
    %2808 = vmatpush1.msra.mxu0 %v2032
    %2809 = vmatprep.subr.mxu0 %v2037
    %2810 = vmatpush1.msra.mxu0 %v2036
    %2811 = vmatprep.subr.mxu0 %v2041
    %2812 = vmatpush1.msra.mxu0 %v2040
    %2813 = vmatprep.subr.mxu0 %v2045
    %2814 = vmatpush1.msra.mxu0 %v2044
    %2815 = vmatprep.subr.mxu0 %v2049
    %2816 = vmatpush1.msra.mxu0 %v2048
    %2817 = vmatprep.subr.mxu0 %v2053
    %2818 = vmatpush1.msra.mxu0 %v2052
    %2819 = vmatprep.subr.mxu0 %v2057
    %2820 = vmatpush1.msra.mxu0 %v2056
    %2821 = vmatprep.subr.mxu0 %v2061
    %2822 = vmatpush1.msra.mxu0 %v2060
    %2823 = vmatprep.subr.mxu0 %v2065
    %2824 = vmatpush1.msra.mxu0 %v2064
    %2825 = vmatprep.subr.mxu0 %v2069
    %2826 = vmatpush1.msra.mxu0 %v2068
    %2827 = vmatprep.subr.mxu0 %v2073
    %2828 = vmatpush1.msra.mxu0 %v2072
    %2829 = vmatprep.subr.mxu0 %v2077
    %2830 = vmatpush1.msra.mxu0 %v2076
    %2831 = vmatprep.subr.mxu0 %v2081
    %2832 = vmatpush1.msra.mxu0 %v2080
    %2833 = vmatprep.subr.mxu0 %v2085
    %2834 = vmatpush1.msra.mxu0 %v2084
    %2835 = vmatprep.subr.mxu0 0.0
    %2836 = vmatpush1.msra.mxu0 0.0
    %2837 = vmatprep.subr.mxu0 0.0
    %2838 = vmatpush1.msra.mxu0 0.0
    %2839 = vmatprep.subr.mxu0 0.0
    %2840 = vmatpush1.msra.mxu0 0.0
    %2841 = vmatprep.subr.mxu0 0.0
    %2842 = vmatpush1.msra.mxu0 0.0
    %2843 = vmatprep.subr.mxu0 0.0
    %2844 = vmatpush1.msra.mxu0 0.0
    %2845 = vmatprep.subr.mxu0 0.0
    %2846 = vmatpush1.msra.mxu0 0.0
    %2847 = vmatprep.subr.mxu0 0.0
    %2848 = vmatpush1.msra.mxu0 0.0
    %2849 = vmatprep.subr.mxu0 0.0
    %2850 = vmatpush1.msra.mxu0 0.0
    %2851 = vmatprep.subr.mxu0 0.0
    %2852 = vmatpush1.msra.mxu0 0.0
    %2853 = vmatprep.subr.mxu0 0.0
    %2854 = vmatpush1.msra.mxu0 0.0
    %2855 = vmatprep.subr.mxu0 0.0
    %2856 = vmatpush1.msra.mxu0 0.0
    %2857 = vmatprep.subr.mxu0 0.0
    %2858 = vmatpush1.msra.mxu0 0.0
    %2859 = vmatprep.subr.mxu0 0.0
    %2860 = vmatpush1.msra.mxu0 0.0
    %2861 = vmatprep.subr.mxu0 0.0
    %2862 = vmatpush1.msra.mxu0 0.0
    %2863 = vmatprep.subr.mxu0 0.0
    %2864 = vmatpush1.msra.mxu0 0.0
    %2865 = vmatprep.subr.mxu0 0.0
    %2866 = vmatpush1.msra.mxu0 0.0
    %2867 = vmatprep.mubr.f32.mxu0 0.0
    %2868 = vmatmul.mubr.f32.gmra.mrb[0].mxu0 %v2726
    %v2869 = vpop.f32.mrb[0].mxu0
    %v2870 = vadd.f32 0.0, %v2869
    %v2871 = vpop.f32.mrb[0].mxu0
    %v2872 = vadd.f32 0.0, %v2871
    %2873 = vdwg.mxu0
    %v2874 = vadd.f32 %v2728, %v2799
    %v2875 = vadd.f32 %v2729, %v2801
    %v2876 = vadd.f32 %v2730, %v2870
    %v2877 = vadd.f32 %v2731, %v2872
    %v2878 = vxor.u32 %v2874, 2147483648
    %v2879 = vmul.f32 %v2878, 1.442695
    %v2880 = vpow.pop %v2879
    %v2881 = vadd.f32 %v2880, 1.0
    %v2882 = vrcp.pop %v2881
    %v2883 = vmul.f32 1.0, %v2882
    %v2884 = vxor.u32 %v2875, 2147483648
    %v2885 = vmul.f32 %v2884, 1.442695
    %v2886 = vpow.pop %v2885
    %v2887 = vadd.f32 %v2886, 1.0
    %v2888 = vrcp.pop %v2887
    %v2889 = vmul.f32 1.0, %v2888
    %v2890 = vtanh.pop %v2876
    %v2891 = vxor.u32 %v2877, 2147483648
    %v2892 = vmul.f32 %v2891, 1.442695
    %v2893 = vpow.pop %v2892
    %v2894 = vadd.f32 %v2893, 1.0
    %v2895 = vrcp.pop %v2894
    %v2896 = vmul.f32 1.0, %v2895
    %v2897 = vmul.f32 %v2889, %v2724
    %v2898 = vmul.f32 %v2883, %v2890
    %v2899 = vadd.f32 %v2897, %v2898
    %v2900 = vtanh.pop %v2899
    %v2901 = vmul.f32 %v2896, %v2900
    %2902 = vst [vmem:[#allocation2 + $0x10] sm:$0xff] %v2901
    %v2903 = vld [vmem:[#allocation3 + $0x60] sm:$0xff]
    %v2904 = vld [vmem:[#allocation3 + $0x68] sm:$0xff]
    %v2905 = vld [vmem:[#allocation3 + $0x70] sm:$0xff]
    %v2906 = vld [vmem:[#allocation3 + $0x78] sm:$0xff]
    %2907 = vmatprep.subr.mxu0 %v2023
    %2908 = vmatpush1.msra.mxu0 %v2022
    %2909 = vmatprep.subr.mxu0 %v2027
    %2910 = vmatpush1.msra.mxu0 %v2026
    %2911 = vmatprep.subr.mxu0 %v2031
    %2912 = vmatpush1.msra.mxu0 %v2030
    %2913 = vmatprep.subr.mxu0 %v2035
    %2914 = vmatpush1.msra.mxu0 %v2034
    %2915 = vmatprep.subr.mxu0 %v2039
    %2916 = vmatpush1.msra.mxu0 %v2038
    %2917 = vmatprep.subr.mxu0 %v2043
    %2918 = vmatpush1.msra.mxu0 %v2042
    %2919 = vmatprep.subr.mxu0 %v2047
    %2920 = vmatpush1.msra.mxu0 %v2046
    %2921 = vmatprep.subr.mxu0 %v2051
    %2922 = vmatpush1.msra.mxu0 %v2050
    %2923 = vmatprep.subr.mxu0 %v2055
    %2924 = vmatpush1.msra.mxu0 %v2054
    %2925 = vmatprep.subr.mxu0 %v2059
    %2926 = vmatpush1.msra.mxu0 %v2058
    %2927 = vmatprep.subr.mxu0 %v2063
    %2928 = vmatpush1.msra.mxu0 %v2062
    %2929 = vmatprep.subr.mxu0 %v2067
    %2930 = vmatpush1.msra.mxu0 %v2066
    %2931 = vmatprep.subr.mxu0 %v2071
    %2932 = vmatpush1.msra.mxu0 %v2070
    %2933 = vmatprep.subr.mxu0 %v2075
    %2934 = vmatpush1.msra.mxu0 %v2074
    %2935 = vmatprep.subr.mxu0 %v2079
    %2936 = vmatpush1.msra.mxu0 %v2078
    %2937 = vmatprep.subr.mxu0 %v2083
    %2938 = vmatpush1.msra.mxu0 %v2082
    %2939 = vmatprep.subr.mxu0 0.0
    %2940 = vmatpush1.msra.mxu0 0.0
    %2941 = vmatprep.subr.mxu0 0.0
    %2942 = vmatpush1.msra.mxu0 0.0
    %2943 = vmatprep.subr.mxu0 0.0
    %2944 = vmatpush1.msra.mxu0 0.0
    %2945 = vmatprep.subr.mxu0 0.0
    %2946 = vmatpush1.msra.mxu0 0.0
    %2947 = vmatprep.subr.mxu0 0.0
    %2948 = vmatpush1.msra.mxu0 0.0
    %2949 = vmatprep.subr.mxu0 0.0
    %2950 = vmatpush1.msra.mxu0 0.0
    %2951 = vmatprep.subr.mxu0 0.0
    %2952 = vmatpush1.msra.mxu0 0.0
    %2953 = vmatprep.subr.mxu0 0.0
    %2954 = vmatpush1.msra.mxu0 0.0
    %2955 = vmatprep.subr.mxu0 0.0
    %2956 = vmatpush1.msra.mxu0 0.0
    %2957 = vmatprep.subr.mxu0 0.0
    %2958 = vmatpush1.msra.mxu0 0.0
    %2959 = vmatprep.subr.mxu0 0.0
    %2960 = vmatpush1.msra.mxu0 0.0
    %2961 = vmatprep.subr.mxu0 0.0
    %2962 = vmatpush1.msra.mxu0 0.0
    %2963 = vmatprep.subr.mxu0 0.0
    %2964 = vmatpush1.msra.mxu0 0.0
    %2965 = vmatprep.subr.mxu0 0.0
    %2966 = vmatpush1.msra.mxu0 0.0
    %2967 = vmatprep.subr.mxu0 0.0
    %2968 = vmatpush1.msra.mxu0 0.0
    %2969 = vmatprep.subr.mxu0 0.0
    %2970 = vmatpush1.msra.mxu0 0.0
    %2971 = vmatprep.mubr.f32.mxu0 0.0
    %2972 = vmatmul.mubr.f32.gmra.mrb[0].mxu0 %v2901
    %v2973 = vpop.f32.mrb[0].mxu0
    %v2974 = vadd.f32 0.0, %v2973
    %v2975 = vpop.f32.mrb[0].mxu0
    %v2976 = vadd.f32 0.0, %v2975
    %2977 = vdwg.mxu0
    %2978 = vmatprep.subr.mxu0 %v2025
    %2979 = vmatpush1.msra.mxu0 %v2024
    %2980 = vmatprep.subr.mxu0 %v2029
    %2981 = vmatpush1.msra.mxu0 %v2028
    %2982 = vmatprep.subr.mxu0 %v2033
    %2983 = vmatpush1.msra.mxu0 %v2032
    %2984 = vmatprep.subr.mxu0 %v2037
    %2985 = vmatpush1.msra.mxu0 %v2036
    %2986 = vmatprep.subr.mxu0 %v2041
    %2987 = vmatpush1.msra.mxu0 %v2040
    %2988 = vmatprep.subr.mxu0 %v2045
    %2989 = vmatpush1.msra.mxu0 %v2044
    %2990 = vmatprep.subr.mxu0 %v2049
    %2991 = vmatpush1.msra.mxu0 %v2048
    %2992 = vmatprep.subr.mxu0 %v2053
    %2993 = vmatpush1.msra.mxu0 %v2052
    %2994 = vmatprep.subr.mxu0 %v2057
    %2995 = vmatpush1.msra.mxu0 %v2056
    %2996 = vmatprep.subr.mxu0 %v2061
    %2997 = vmatpush1.msra.mxu0 %v2060
    %2998 = vmatprep.subr.mxu0 %v2065
    %2999 = vmatpush1.msra.mxu0 %v2064
    %3000 = vmatprep.subr.mxu0 %v2069
    %3001 = vmatpush1.msra.mxu0 %v2068
    %3002 = vmatprep.subr.mxu0 %v2073
    %3003 = vmatpush1.msra.mxu0 %v2072
    %3004 = vmatprep.subr.mxu0 %v2077
    %3005 = vmatpush1.msra.mxu0 %v2076
    %3006 = vmatprep.subr.mxu0 %v2081
    %3007 = vmatpush1.msra.mxu0 %v2080
    %3008 = vmatprep.subr.mxu0 %v2085
    %3009 = vmatpush1.msra.mxu0 %v2084
    %3010 = vmatprep.subr.mxu0 0.0
    %3011 = vmatpush1.msra.mxu0 0.0
    %3012 = vmatprep.subr.mxu0 0.0
    %3013 = vmatpush1.msra.mxu0 0.0
    %3014 = vmatprep.subr.mxu0 0.0
    %3015 = vmatpush1.msra.mxu0 0.0
    %3016 = vmatprep.subr.mxu0 0.0
    %3017 = vmatpush1.msra.mxu0 0.0
    %3018 = vmatprep.subr.mxu0 0.0
    %3019 = vmatpush1.msra.mxu0 0.0
    %3020 = vmatprep.subr.mxu0 0.0
    %3021 = vmatpush1.msra.mxu0 0.0
    %3022 = vmatprep.subr.mxu0 0.0
    %3023 = vmatpush1.msra.mxu0 0.0
    %3024 = vmatprep.subr.mxu0 0.0
    %3025 = vmatpush1.msra.mxu0 0.0
    %3026 = vmatprep.subr.mxu0 0.0
    %3027 = vmatpush1.msra.mxu0 0.0
    %3028 = vmatprep.subr.mxu0 0.0
    %3029 = vmatpush1.msra.mxu0 0.0
    %3030 = vmatprep.subr.mxu0 0.0
    %3031 = vmatpush1.msra.mxu0 0.0
    %3032 = vmatprep.subr.mxu0 0.0
    %3033 = vmatpush1.msra.mxu0 0.0
    %3034 = vmatprep.subr.mxu0 0.0
    %3035 = vmatpush1.msra.mxu0 0.0
    %3036 = vmatprep.subr.mxu0 0.0
    %3037 = vmatpush1.msra.mxu0 0.0
    %3038 = vmatprep.subr.mxu0 0.0
    %3039 = vmatpush1.msra.mxu0 0.0
    %3040 = vmatprep.subr.mxu0 0.0
    %3041 = vmatpush1.msra.mxu0 0.0
    %3042 = vmatprep.mubr.f32.mxu0 0.0
    %3043 = vmatmul.mubr.f32.gmra.mrb[0].mxu0 %v2901
    %v3044 = vpop.f32.mrb[0].mxu0
    %v3045 = vadd.f32 0.0, %v3044
    %v3046 = vpop.f32.mrb[0].mxu0
    %v3047 = vadd.f32 0.0, %v3046
    %3048 = vdwg.mxu0
    %v3049 = vadd.f32 %v2903, %v2974
    %v3050 = vadd.f32 %v2904, %v2976
    %v3051 = vadd.f32 %v2905, %v3045
    %v3052 = vadd.f32 %v2906, %v3047
    %v3053 = vxor.u32 %v3049, 2147483648
    %v3054 = vmul.f32 %v3053, 1.442695
    %v3055 = vpow.pop %v3054
    %v3056 = vadd.f32 %v3055, 1.0
    %v3057 = vrcp.pop %v3056
    %v3058 = vmul.f32 1.0, %v3057
    %v3059 = vxor.u32 %v3050, 2147483648
    %v3060 = vmul.f32 %v3059, 1.442695
    %v3061 = vpow.pop %v3060
    %v3062 = vadd.f32 %v3061, 1.0
    %v3063 = vrcp.pop %v3062
    %v3064 = vmul.f32 1.0, %v3063
    %v3065 = vtanh.pop %v3051
    %v3066 = vxor.u32 %v3052, 2147483648
    %v3067 = vmul.f32 %v3066, 1.442695
    %v3068 = vpow.pop %v3067
    %v3069 = vadd.f32 %v3068, 1.0
    %v3070 = vrcp.pop %v3069
    %v3071 = vmul.f32 1.0, %v3070
    %v3072 = vmul.f32 %v3064, %v2899
    %v3073 = vmul.f32 %v3058, %v3065
    %v3074 = vadd.f32 %v3072, %v3073
    %v3075 = vtanh.pop %v3074
    %v3076 = vmul.f32 %v3071, %v3075
    %3077 = vst [vmem:[#allocation2 + $0x18] sm:$0xff] %v3076
    %v3078 = vld [vmem:[#allocation3 + $0x80] sm:$0xff]
    %v3079 = vld [vmem:[#allocation3 + $0x88] sm:$0xff]
    %v3080 = vld [vmem:[#allocation3 + $0x90] sm:$0xff]
    %v3081 = vld [vmem:[#allocation3 + $0x98] sm:$0xff]
    %3082 = vmatprep.subr.mxu0 %v2023
    %3083 = vmatpush1.msra.mxu0 %v2022
    %3084 = vmatprep.subr.mxu0 %v2027
    %3085 = vmatpush1.msra.mxu0 %v2026
    %3086 = vmatprep.subr.mxu0 %v2031
    %3087 = vmatpush1.msra.mxu0 %v2030
    %3088 = vmatprep.subr.mxu0 %v2035
    %3089 = vmatpush1.msra.mxu0 %v2034
    %3090 = vmatprep.subr.mxu0 %v2039
    %3091 = vmatpush1.msra.mxu0 %v2038
    %3092 = vmatprep.subr.mxu0 %v2043
    %3093 = vmatpush1.msra.mxu0 %v2042
    %3094 = vmatprep.subr.mxu0 %v2047
    %3095 = vmatpush1.msra.mxu0 %v2046
    %3096 = vmatprep.subr.mxu0 %v2051
    %3097 = vmatpush1.msra.mxu0 %v2050
    %3098 = vmatprep.subr.mxu0 %v2055
    %3099 = vmatpush1.msra.mxu0 %v2054
    %3100 = vmatprep.subr.mxu0 %v2059
    %3101 = vmatpush1.msra.mxu0 %v2058
    %3102 = vmatprep.subr.mxu0 %v2063
    %3103 = vmatpush1.msra.mxu0 %v2062
    %3104 = vmatprep.subr.mxu0 %v2067
    %3105 = vmatpush1.msra.mxu0 %v2066
    %3106 = vmatprep.subr.mxu0 %v2071
    %3107 = vmatpush1.msra.mxu0 %v2070
    %3108 = vmatprep.subr.mxu0 %v2075
    %3109 = vmatpush1.msra.mxu0 %v2074
    %3110 = vmatprep.subr.mxu0 %v2079
    %3111 = vmatpush1.msra.mxu0 %v2078
    %3112 = vmatprep.subr.mxu0 %v2083
    %3113 = vmatpush1.msra.mxu0 %v2082
    %3114 = vmatprep.subr.mxu0 0.0
    %3115 = vmatpush1.msra.mxu0 0.0
    %3116 = vmatprep.subr.mxu0 0.0
    %3117 = vmatpush1.msra.mxu0 0.0
    %3118 = vmatprep.subr.mxu0 0.0
    %3119 = vmatpush1.msra.mxu0 0.0
    %3120 = vmatprep.subr.mxu0 0.0
    %3121 = vmatpush1.msra.mxu0 0.0
    %3122 = vmatprep.subr.mxu0 0.0
    %3123 = vmatpush1.msra.mxu0 0.0
    %3124 = vmatprep.subr.mxu0 0.0
    %3125 = vmatpush1.msra.mxu0 0.0
    %3126 = vmatprep.subr.mxu0 0.0
    %3127 = vmatpush1.msra.mxu0 0.0
    %3128 = vmatprep.subr.mxu0 0.0
    %3129 = vmatpush1.msra.mxu0 0.0
    %3130 = vmatprep.subr.mxu0 0.0
    %3131 = vmatpush1.msra.mxu0 0.0
    %3132 = vmatprep.subr.mxu0 0.0
    %3133 = vmatpush1.msra.mxu0 0.0
    %3134 = vmatprep.subr.mxu0 0.0
    %3135 = vmatpush1.msra.mxu0 0.0
    %3136 = vmatprep.subr.mxu0 0.0
    %3137 = vmatpush1.msra.mxu0 0.0
    %3138 = vmatprep.subr.mxu0 0.0
    %3139 = vmatpush1.msra.mxu0 0.0
    %3140 = vmatprep.subr.mxu0 0.0
    %3141 = vmatpush1.msra.mxu0 0.0
    %3142 = vmatprep.subr.mxu0 0.0
    %3143 = vmatpush1.msra.mxu0 0.0
    %3144 = vmatprep.subr.mxu0 0.0
    %3145 = vmatpush1.msra.mxu0 0.0
    %3146 = vmatprep.mubr.f32.mxu0 0.0
    %3147 = vmatmul.mubr.f32.gmra.mrb[0].mxu0 %v3076
    %v3148 = vpop.f32.mrb[0].mxu0
    %v3149 = vadd.f32 0.0, %v3148
    %v3150 = vpop.f32.mrb[0].mxu0
    %v3151 = vadd.f32 0.0, %v3150
    %3152 = vdwg.mxu0
    %3153 = vmatprep.subr.mxu0 %v2025
    %3154 = vmatpush1.msra.mxu0 %v2024
    %3155 = vmatprep.subr.mxu0 %v2029
    %3156 = vmatpush1.msra.mxu0 %v2028
    %3157 = vmatprep.subr.mxu0 %v2033
    %3158 = vmatpush1.msra.mxu0 %v2032
    %3159 = vmatprep.subr.mxu0 %v2037
    %3160 = vmatpush1.msra.mxu0 %v2036
    %3161 = vmatprep.subr.mxu0 %v2041
    %3162 = vmatpush1.msra.mxu0 %v2040
    %3163 = vmatprep.subr.mxu0 %v2045
    %3164 = vmatpush1.msra.mxu0 %v2044
    %3165 = vmatprep.subr.mxu0 %v2049
    %3166 = vmatpush1.msra.mxu0 %v2048
    %3167 = vmatprep.subr.mxu0 %v2053
    %3168 = vmatpush1.msra.mxu0 %v2052
    %3169 = vmatprep.subr.mxu0 %v2057
    %3170 = vmatpush1.msra.mxu0 %v2056
    %3171 = vmatprep.subr.mxu0 %v2061
    %3172 = vmatpush1.msra.mxu0 %v2060
    %3173 = vmatprep.subr.mxu0 %v2065
    %3174 = vmatpush1.msra.mxu0 %v2064
    %3175 = vmatprep.subr.mxu0 %v2069
    %3176 = vmatpush1.msra.mxu0 %v2068
    %3177 = vmatprep.subr.mxu0 %v2073
    %3178 = vmatpush1.msra.mxu0 %v2072
    %3179 = vmatprep.subr.mxu0 %v2077
    %3180 = vmatpush1.msra.mxu0 %v2076
    %3181 = vmatprep.subr.mxu0 %v2081
    %3182 = vmatpush1.msra.mxu0 %v2080
    %3183 = vmatprep.subr.mxu0 %v2085
    %3184 = vmatpush1.msra.mxu0 %v2084
    %3185 = vmatprep.subr.mxu0 0.0
    %3186 = vmatpush1.msra.mxu0 0.0
    %3187 = vmatprep.subr.mxu0 0.0
    %3188 = vmatpush1.msra.mxu0 0.0
    %3189 = vmatprep.subr.mxu0 0.0
    %3190 = vmatpush1.msra.mxu0 0.0
    %3191 = vmatprep.subr.mxu0 0.0
    %3192 = vmatpush1.msra.mxu0 0.0
    %3193 = vmatprep.subr.mxu0 0.0
    %3194 = vmatpush1.msra.mxu0 0.0
    %3195 = vmatprep.subr.mxu0 0.0
    %3196 = vmatpush1.msra.mxu0 0.0
    %3197 = vmatprep.subr.mxu0 0.0
    %3198 = vmatpush1.msra.mxu0 0.0
    %3199 = vmatprep.subr.mxu0 0.0
    %3200 = vmatpush1.msra.mxu0 0.0
    %3201 = vmatprep.subr.mxu0 0.0
    %3202 = vmatpush1.msra.mxu0 0.0
    %3203 = vmatprep.subr.mxu0 0.0
    %3204 = vmatpush1.msra.mxu0 0.0
    %3205 = vmatprep.subr.mxu0 0.0
    %3206 = vmatpush1.msra.mxu0 0.0
    %3207 = vmatprep.subr.mxu0 0.0
    %3208 = vmatpush1.msra.mxu0 0.0
    %3209 = vmatprep.subr.mxu0 0.0
    %3210 = vmatpush1.msra.mxu0 0.0
    %3211 = vmatprep.subr.mxu0 0.0
    %3212 = vmatpush1.msra.mxu0 0.0
    %3213 = vmatprep.subr.mxu0 0.0
    %3214 = vmatpush1.msra.mxu0 0.0
    %3215 = vmatprep.subr.mxu0 0.0
    %3216 = vmatpush1.msra.mxu0 0.0
    %3217 = vmatprep.mubr.f32.mxu0 0.0
    %3218 = vmatmul.mubr.f32.gmra.mrb[0].mxu0 %v3076
    %v3219 = vpop.f32.mrb[0].mxu0
    %v3220 = vadd.f32 0.0, %v3219
    %v3221 = vpop.f32.mrb[0].mxu0
    %v3222 = vadd.f32 0.0, %v3221
    %3223 = vdwg.mxu0
    %v3224 = vadd.f32 %v3078, %v3149
    %v3225 = vadd.f32 %v3079, %v3151
    %v3226 = vadd.f32 %v3080, %v3220
    %v3227 = vadd.f32 %v3081, %v3222
    %v3228 = vxor.u32 %v3224, 2147483648
    %v3229 = vmul.f32 %v3228, 1.442695
    %v3230 = vpow.pop %v3229
    %v3231 = vadd.f32 %v3230, 1.0
    %v3232 = vrcp.pop %v3231
    %v3233 = vmul.f32 1.0, %v3232
    %v3234 = vxor.u32 %v3225, 2147483648
    %v3235 = vmul.f32 %v3234, 1.442695
    %v3236 = vpow.pop %v3235
    %v3237 = vadd.f32 %v3236, 1.0
    %v3238 = vrcp.pop %v3237
    %v3239 = vmul.f32 1.0, %v3238
    %v3240 = vtanh.pop %v3226
    %v3241 = vxor.u32 %v3227, 2147483648
    %v3242 = vmul.f32 %v3241, 1.442695
    %v3243 = vpow.pop %v3242
    %v3244 = vadd.f32 %v3243, 1.0
    %v3245 = vrcp.pop %v3244
    %v3246 = vmul.f32 1.0, %v3245
    %v3247 = vmul.f32 %v3239, %v3074
    %v3248 = vmul.f32 %v3233, %v3240
    %v3249 = vadd.f32 %v3247, %v3248
    %v3250 = vtanh.pop %v3249
    %v3251 = vmul.f32 %v3246, %v3250
    %3252 = vst [vmem:[#allocation2 + $0x20] sm:$0xff] %v3251
    %v3253 = vld [vmem:[#allocation3 + $0xa0] sm:$0xff]
    %v3254 = vld [vmem:[#allocation3 + $0xa8] sm:$0xff]
    %v3255 = vld [vmem:[#allocation3 + $0xb0] sm:$0xff]
    %v3256 = vld [vmem:[#allocation3 + $0xb8] sm:$0xff]
    %3257 = vmatprep.subr.mxu0 %v2023
    %3258 = vmatpush1.msra.mxu0 %v2022
    %3259 = vmatprep.subr.mxu0 %v2027
    %3260 = vmatpush1.msra.mxu0 %v2026
    %3261 = vmatprep.subr.mxu0 %v2031
    %3262 = vmatpush1.msra.mxu0 %v2030
    %3263 = vmatprep.subr.mxu0 %v2035
    %3264 = vmatpush1.msra.mxu0 %v2034
    %3265 = vmatprep.subr.mxu0 %v2039
    %3266 = vmatpush1.msra.mxu0 %v2038
    %3267 = vmatprep.subr.mxu0 %v2043
    %3268 = vmatpush1.msra.mxu0 %v2042
    %3269 = vmatprep.subr.mxu0 %v2047
    %3270 = vmatpush1.msra.mxu0 %v2046
    %3271 = vmatprep.subr.mxu0 %v2051
    %3272 = vmatpush1.msra.mxu0 %v2050
    %3273 = vmatprep.subr.mxu0 %v2055
    %3274 = vmatpush1.msra.mxu0 %v2054
    %3275 = vmatprep.subr.mxu0 %v2059
    %3276 = vmatpush1.msra.mxu0 %v2058
    %3277 = vmatprep.subr.mxu0 %v2063
    %3278 = vmatpush1.msra.mxu0 %v2062
    %3279 = vmatprep.subr.mxu0 %v2067
    %3280 = vmatpush1.msra.mxu0 %v2066
    %3281 = vmatprep.subr.mxu0 %v2071
    %3282 = vmatpush1.msra.mxu0 %v2070
    %3283 = vmatprep.subr.mxu0 %v2075
    %3284 = vmatpush1.msra.mxu0 %v2074
    %3285 = vmatprep.subr.mxu0 %v2079
    %3286 = vmatpush1.msra.mxu0 %v2078
    %3287 = vmatprep.subr.mxu0 %v2083
    %3288 = vmatpush1.msra.mxu0 %v2082
    %3289 = vmatprep.subr.mxu0 0.0
    %3290 = vmatpush1.msra.mxu0 0.0
    %3291 = vmatprep.subr.mxu0 0.0
    %3292 = vmatpush1.msra.mxu0 0.0
    %3293 = vmatprep.subr.mxu0 0.0
    %3294 = vmatpush1.msra.mxu0 0.0
    %3295 = vmatprep.subr.mxu0 0.0
    %3296 = vmatpush1.msra.mxu0 0.0
    %3297 = vmatprep.subr.mxu0 0.0
    %3298 = vmatpush1.msra.mxu0 0.0
    %3299 = vmatprep.subr.mxu0 0.0
    %3300 = vmatpush1.msra.mxu0 0.0
    %3301 = vmatprep.subr.mxu0 0.0
    %3302 = vmatpush1.msra.mxu0 0.0
    %3303 = vmatprep.subr.mxu0 0.0
    %3304 = vmatpush1.msra.mxu0 0.0
    %3305 = vmatprep.subr.mxu0 0.0
    %3306 = vmatpush1.msra.mxu0 0.0
    %3307 = vmatprep.subr.mxu0 0.0
    %3308 = vmatpush1.msra.mxu0 0.0
    %3309 = vmatprep.subr.mxu0 0.0
    %3310 = vmatpush1.msra.mxu0 0.0
    %3311 = vmatprep.subr.mxu0 0.0
    %3312 = vmatpush1.msra.mxu0 0.0
    %3313 = vmatprep.subr.mxu0 0.0
    %3314 = vmatpush1.msra.mxu0 0.0
    %3315 = vmatprep.subr.mxu0 0.0
    %3316 = vmatpush1.msra.mxu0 0.0
    %3317 = vmatprep.subr.mxu0 0.0
    %3318 = vmatpush1.msra.mxu0 0.0
    %3319 = vmatprep.subr.mxu0 0.0
    %3320 = vmatpush1.msra.mxu0 0.0
    %3321 = vmatprep.mubr.f32.mxu0 0.0
    %3322 = vmatmul.mubr.f32.gmra.mrb[0].mxu0 %v3251
    %v3323 = vpop.f32.mrb[0].mxu0
    %v3324 = vadd.f32 0.0, %v3323
    %v3325 = vpop.f32.mrb[0].mxu0
    %v3326 = vadd.f32 0.0, %v3325
    %3327 = vdwg.mxu0
    %3328 = vmatprep.subr.mxu0 %v2025
    %3329 = vmatpush1.msra.mxu0 %v2024
    %3330 = vmatprep.subr.mxu0 %v2029
    %3331 = vmatpush1.msra.mxu0 %v2028
    %3332 = vmatprep.subr.mxu0 %v2033
    %3333 = vmatpush1.msra.mxu0 %v2032
    %3334 = vmatprep.subr.mxu0 %v2037
    %3335 = vmatpush1.msra.mxu0 %v2036
    %3336 = vmatprep.subr.mxu0 %v2041
    %3337 = vmatpush1.msra.mxu0 %v2040
    %3338 = vmatprep.subr.mxu0 %v2045
    %3339 = vmatpush1.msra.mxu0 %v2044
    %3340 = vmatprep.subr.mxu0 %v2049
    %3341 = vmatpush1.msra.mxu0 %v2048
    %3342 = vmatprep.subr.mxu0 %v2053
    %3343 = vmatpush1.msra.mxu0 %v2052
    %3344 = vmatprep.subr.mxu0 %v2057
    %3345 = vmatpush1.msra.mxu0 %v2056
    %3346 = vmatprep.subr.mxu0 %v2061
    %3347 = vmatpush1.msra.mxu0 %v2060
    %3348 = vmatprep.subr.mxu0 %v2065
    %3349 = vmatpush1.msra.mxu0 %v2064
    %3350 = vmatprep.subr.mxu0 %v2069
    %3351 = vmatpush1.msra.mxu0 %v2068
    %3352 = vmatprep.subr.mxu0 %v2073
    %3353 = vmatpush1.msra.mxu0 %v2072
    %3354 = vmatprep.subr.mxu0 %v2077
    %3355 = vmatpush1.msra.mxu0 %v2076
    %3356 = vmatprep.subr.mxu0 %v2081
    %3357 = vmatpush1.msra.mxu0 %v2080
    %3358 = vmatprep.subr.mxu0 %v2085
    %3359 = vmatpush1.msra.mxu0 %v2084
    %3360 = vmatprep.subr.mxu0 0.0
    %3361 = vmatpush1.msra.mxu0 0.0
    %3362 = vmatprep.subr.mxu0 0.0
    %3363 = vmatpush1.msra.mxu0 0.0
    %3364 = vmatprep.subr.mxu0 0.0
    %3365 = vmatpush1.msra.mxu0 0.0
    %3366 = vmatprep.subr.mxu0 0.0
    %3367 = vmatpush1.msra.mxu0 0.0
    %3368 = vmatprep.subr.mxu0 0.0
    %3369 = vmatpush1.msra.mxu0 0.0
    %3370 = vmatprep.subr.mxu0 0.0
    %3371 = vmatpush1.msra.mxu0 0.0
    %3372 = vmatprep.subr.mxu0 0.0
    %3373 = vmatpush1.msra.mxu0 0.0
    %3374 = vmatprep.subr.mxu0 0.0
    %3375 = vmatpush1.msra.mxu0 0.0
    %3376 = vmatprep.subr.mxu0 0.0
    %3377 = vmatpush1.msra.mxu0 0.0
    %3378 = vmatprep.subr.mxu0 0.0
    %3379 = vmatpush1.msra.mxu0 0.0
    %3380 = vmatprep.subr.mxu0 0.0
    %3381 = vmatpush1.msra.mxu0 0.0
    %3382 = vmatprep.subr.mxu0 0.0
    %3383 = vmatpush1.msra.mxu0 0.0
    %3384 = vmatprep.subr.mxu0 0.0
    %3385 = vmatpush1.msra.mxu0 0.0
    %3386 = vmatprep.subr.mxu0 0.0
    %3387 = vmatpush1.msra.mxu0 0.0
    %3388 = vmatprep.subr.mxu0 0.0
    %3389 = vmatpush1.msra.mxu0 0.0
    %3390 = vmatprep.subr.mxu0 0.0
    %3391 = vmatpush1.msra.mxu0 0.0
    %3392 = vmatprep.mubr.f32.mxu0 0.0
    %3393 = vmatmul.mubr.f32.gmra.mrb[0].mxu0 %v3251
    %v3394 = vpop.f32.mrb[0].mxu0
    %v3395 = vadd.f32 0.0, %v3394
    %v3396 = vpop.f32.mrb[0].mxu0
    %v3397 = vadd.f32 0.0, %v3396
    %3398 = vdwg.mxu0
    %v3399 = vadd.f32 %v3253, %v3324
    %v3400 = vadd.f32 %v3254, %v3326
    %v3401 = vadd.f32 %v3255, %v3395
    %v3402 = vadd.f32 %v3256, %v3397
    %v3403 = vxor.u32 %v3399, 2147483648
    %v3404 = vmul.f32 %v3403, 1.442695
    %v3405 = vpow.pop %v3404
    %v3406 = vadd.f32 %v3405, 1.0
    %v3407 = vrcp.pop %v3406
    %v3408 = vmul.f32 1.0, %v3407
    %v3409 = vxor.u32 %v3400, 2147483648
    %v3410 = vmul.f32 %v3409, 1.442695
    %v3411 = vpow.pop %v3410
    %v3412 = vadd.f32 %v3411, 1.0
    %v3413 = vrcp.pop %v3412
    %v3414 = vmul.f32 1.0, %v3413
    %v3415 = vtanh.pop %v3401
    %v3416 = vxor.u32 %v3402, 2147483648
    %v3417 = vmul.f32 %v3416, 1.442695
    %v3418 = vpow.pop %v3417
    %v3419 = vadd.f32 %v3418, 1.0
    %v3420 = vrcp.pop %v3419
    %v3421 = vmul.f32 1.0, %v3420
    %v3422 = vmul.f32 %v3414, %v3249
    %v3423 = vmul.f32 %v3408, %v3415
    %v3424 = vadd.f32 %v3422, %v3423
    %v3425 = vtanh.pop %v3424
    %v3426 = vmul.f32 %v3421, %v3425
    %3427 = vst [vmem:[#allocation2 + $0x28] sm:$0xff] %v3426
    %v3428 = vld [vmem:[#allocation3 + $0xc0] sm:$0xff]
    %v3429 = vld [vmem:[#allocation3 + $0xc8] sm:$0xff]
    %v3430 = vld [vmem:[#allocation3 + $0xd0] sm:$0xff]
    %v3431 = vld [vmem:[#allocation3 + $0xd8] sm:$0xff]
    %3432 = vmatprep.subr.mxu0 %v2023
    %3433 = vmatpush1.msra.mxu0 %v2022
    %3434 = vmatprep.subr.mxu0 %v2027
    %3435 = vmatpush1.msra.mxu0 %v2026
    %3436 = vmatprep.subr.mxu0 %v2031
    %3437 = vmatpush1.msra.mxu0 %v2030
    %3438 = vmatprep.subr.mxu0 %v2035
    %3439 = vmatpush1.msra.mxu0 %v2034
    %3440 = vmatprep.subr.mxu0 %v2039
    %3441 = vmatpush1.msra.mxu0 %v2038
    %3442 = vmatprep.subr.mxu0 %v2043
    %3443 = vmatpush1.msra.mxu0 %v2042
    %3444 = vmatprep.subr.mxu0 %v2047
    %3445 = vmatpush1.msra.mxu0 %v2046
    %3446 = vmatprep.subr.mxu0 %v2051
    %3447 = vmatpush1.msra.mxu0 %v2050
    %3448 = vmatprep.subr.mxu0 %v2055
    %3449 = vmatpush1.msra.mxu0 %v2054
    %3450 = vmatprep.subr.mxu0 %v2059
    %3451 = vmatpush1.msra.mxu0 %v2058
    %3452 = vmatprep.subr.mxu0 %v2063
    %3453 = vmatpush1.msra.mxu0 %v2062
    %3454 = vmatprep.subr.mxu0 %v2067
    %3455 = vmatpush1.msra.mxu0 %v2066
    %3456 = vmatprep.subr.mxu0 %v2071
    %3457 = vmatpush1.msra.mxu0 %v2070
    %3458 = vmatprep.subr.mxu0 %v2075
    %3459 = vmatpush1.msra.mxu0 %v2074
    %3460 = vmatprep.subr.mxu0 %v2079
    %3461 = vmatpush1.msra.mxu0 %v2078
    %3462 = vmatprep.subr.mxu0 %v2083
    %3463 = vmatpush1.msra.mxu0 %v2082
    %3464 = vmatprep.subr.mxu0 0.0
    %3465 = vmatpush1.msra.mxu0 0.0
    %3466 = vmatprep.subr.mxu0 0.0
    %3467 = vmatpush1.msra.mxu0 0.0
    %3468 = vmatprep.subr.mxu0 0.0
    %3469 = vmatpush1.msra.mxu0 0.0
    %3470 = vmatprep.subr.mxu0 0.0
    %3471 = vmatpush1.msra.mxu0 0.0
    %3472 = vmatprep.subr.mxu0 0.0
    %3473 = vmatpush1.msra.mxu0 0.0
    %3474 = vmatprep.subr.mxu0 0.0
    %3475 = vmatpush1.msra.mxu0 0.0
    %3476 = vmatprep.subr.mxu0 0.0
    %3477 = vmatpush1.msra.mxu0 0.0
    %3478 = vmatprep.subr.mxu0 0.0
    %3479 = vmatpush1.msra.mxu0 0.0
    %3480 = vmatprep.subr.mxu0 0.0
    %3481 = vmatpush1.msra.mxu0 0.0
    %3482 = vmatprep.subr.mxu0 0.0
    %3483 = vmatpush1.msra.mxu0 0.0
    %3484 = vmatprep.subr.mxu0 0.0
    %3485 = vmatpush1.msra.mxu0 0.0
    %3486 = vmatprep.subr.mxu0 0.0
    %3487 = vmatpush1.msra.mxu0 0.0
    %3488 = vmatprep.subr.mxu0 0.0
    %3489 = vmatpush1.msra.mxu0 0.0
    %3490 = vmatprep.subr.mxu0 0.0
    %3491 = vmatpush1.msra.mxu0 0.0
    %3492 = vmatprep.subr.mxu0 0.0
    %3493 = vmatpush1.msra.mxu0 0.0
    %3494 = vmatprep.subr.mxu0 0.0
    %3495 = vmatpush1.msra.mxu0 0.0
    %3496 = vmatprep.mubr.f32.mxu0 0.0
    %3497 = vmatmul.mubr.f32.gmra.mrb[0].mxu0 %v3426
    %v3498 = vpop.f32.mrb[0].mxu0
    %v3499 = vadd.f32 0.0, %v3498
    %v3500 = vpop.f32.mrb[0].mxu0
    %v3501 = vadd.f32 0.0, %v3500
    %3502 = vdwg.mxu0
    %3503 = vmatprep.subr.mxu0 %v2025
    %3504 = vmatpush1.msra.mxu0 %v2024
    %3505 = vmatprep.subr.mxu0 %v2029
    %3506 = vmatpush1.msra.mxu0 %v2028
    %3507 = vmatprep.subr.mxu0 %v2033
    %3508 = vmatpush1.msra.mxu0 %v2032
    %3509 = vmatprep.subr.mxu0 %v2037
    %3510 = vmatpush1.msra.mxu0 %v2036
    %3511 = vmatprep.subr.mxu0 %v2041
    %3512 = vmatpush1.msra.mxu0 %v2040
    %3513 = vmatprep.subr.mxu0 %v2045
    %3514 = vmatpush1.msra.mxu0 %v2044
    %3515 = vmatprep.subr.mxu0 %v2049
    %3516 = vmatpush1.msra.mxu0 %v2048
    %3517 = vmatprep.subr.mxu0 %v2053
    %3518 = vmatpush1.msra.mxu0 %v2052
    %3519 = vmatprep.subr.mxu0 %v2057
    %3520 = vmatpush1.msra.mxu0 %v2056
    %3521 = vmatprep.subr.mxu0 %v2061
    %3522 = vmatpush1.msra.mxu0 %v2060
    %3523 = vmatprep.subr.mxu0 %v2065
    %3524 = vmatpush1.msra.mxu0 %v2064
    %3525 = vmatprep.subr.mxu0 %v2069
    %3526 = vmatpush1.msra.mxu0 %v2068
    %3527 = vmatprep.subr.mxu0 %v2073
    %3528 = vmatpush1.msra.mxu0 %v2072
    %3529 = vmatprep.subr.mxu0 %v2077
    %3530 = vmatpush1.msra.mxu0 %v2076
    %3531 = vmatprep.subr.mxu0 %v2081
    %3532 = vmatpush1.msra.mxu0 %v2080
    %3533 = vmatprep.subr.mxu0 %v2085
    %3534 = vmatpush1.msra.mxu0 %v2084
    %3535 = vmatprep.subr.mxu0 0.0
    %3536 = vmatpush1.msra.mxu0 0.0
    %3537 = vmatprep.subr.mxu0 0.0
    %3538 = vmatpush1.msra.mxu0 0.0
    %3539 = vmatprep.subr.mxu0 0.0
    %3540 = vmatpush1.msra.mxu0 0.0
    %3541 = vmatprep.subr.mxu0 0.0
    %3542 = vmatpush1.msra.mxu0 0.0
    %3543 = vmatprep.subr.mxu0 0.0
    %3544 = vmatpush1.msra.mxu0 0.0
    %3545 = vmatprep.subr.mxu0 0.0
    %3546 = vmatpush1.msra.mxu0 0.0
    %3547 = vmatprep.subr.mxu0 0.0
    %3548 = vmatpush1.msra.mxu0 0.0
    %3549 = vmatprep.subr.mxu0 0.0
    %3550 = vmatpush1.msra.mxu0 0.0
    %3551 = vmatprep.subr.mxu0 0.0
    %3552 = vmatpush1.msra.mxu0 0.0
    %3553 = vmatprep.subr.mxu0 0.0
    %3554 = vmatpush1.msra.mxu0 0.0
    %3555 = vmatprep.subr.mxu0 0.0
    %3556 = vmatpush1.msra.mxu0 0.0
    %3557 = vmatprep.subr.mxu0 0.0
    %3558 = vmatpush1.msra.mxu0 0.0
    %3559 = vmatprep.subr.mxu0 0.0
    %3560 = vmatpush1.msra.mxu0 0.0
    %3561 = vmatprep.subr.mxu0 0.0
    %3562 = vmatpush1.msra.mxu0 0.0
    %3563 = vmatprep.subr.mxu0 0.0
    %3564 = vmatpush1.msra.mxu0 0.0
    %3565 = vmatprep.subr.mxu0 0.0
    %3566 = vmatpush1.msra.mxu0 0.0
    %3567 = vmatprep.mubr.f32.mxu0 0.0
    %3568 = vmatmul.mubr.f32.gmra.mrb[0].mxu0 %v3426
    %v3569 = vpop.f32.mrb[0].mxu0
    %v3570 = vadd.f32 0.0, %v3569
    %v3571 = vpop.f32.mrb[0].mxu0
    %v3572 = vadd.f32 0.0, %v3571
    %3573 = vdwg.mxu0
    %v3574 = vadd.f32 %v3428, %v3499
    %v3575 = vadd.f32 %v3429, %v3501
    %v3576 = vadd.f32 %v3430, %v3570
    %v3577 = vadd.f32 %v3431, %v3572
    %v3578 = vxor.u32 %v3574, 2147483648
    %v3579 = vmul.f32 %v3578, 1.442695
    %v3580 = vpow.pop %v3579
    %v3581 = vadd.f32 %v3580, 1.0
    %v3582 = vrcp.pop %v3581
    %v3583 = vmul.f32 1.0, %v3582
    %v3584 = vxor.u32 %v3575, 2147483648
    %v3585 = vmul.f32 %v3584, 1.442695
    %v3586 = vpow.pop %v3585
    %v3587 = vadd.f32 %v3586, 1.0
    %v3588 = vrcp.pop %v3587
    %v3589 = vmul.f32 1.0, %v3588
    %v3590 = vtanh.pop %v3576
    %v3591 = vxor.u32 %v3577, 2147483648
    %v3592 = vmul.f32 %v3591, 1.442695
    %v3593 = vpow.pop %v3592
    %v3594 = vadd.f32 %v3593, 1.0
    %v3595 = vrcp.pop %v3594
    %v3596 = vmul.f32 1.0, %v3595
    %v3597 = vmul.f32 %v3589, %v3424
    %v3598 = vmul.f32 %v3583, %v3590
    %v3599 = vadd.f32 %v3597, %v3598
    %v3600 = vtanh.pop %v3599
    %v3601 = vmul.f32 %v3596, %v3600
    %3602 = vst [vmem:[#allocation2 + $0x30] sm:$0xff] %v3601
    %v3603 = vld [vmem:[#allocation3 + $0xe0] sm:$0xff]
    %v3604 = vld [vmem:[#allocation3 + $0xe8] sm:$0xff]
    %v3605 = vld [vmem:[#allocation3 + $0xf0] sm:$0xff]
    %v3606 = vld [vmem:[#allocation3 + $0xf8] sm:$0xff]
    %3607 = vmatprep.subr.mxu0 %v2023
    %3608 = vmatpush1.msra.mxu0 %v2022
    %3609 = vmatprep.subr.mxu0 %v2027
    %3610 = vmatpush1.msra.mxu0 %v2026
    %3611 = vmatprep.subr.mxu0 %v2031
    %3612 = vmatpush1.msra.mxu0 %v2030
    %3613 = vmatprep.subr.mxu0 %v2035
    %3614 = vmatpush1.msra.mxu0 %v2034
    %3615 = vmatprep.subr.mxu0 %v2039
    %3616 = vmatpush1.msra.mxu0 %v2038
    %3617 = vmatprep.subr.mxu0 %v2043
    %3618 = vmatpush1.msra.mxu0 %v2042
    %3619 = vmatprep.subr.mxu0 %v2047
    %3620 = vmatpush1.msra.mxu0 %v2046
    %3621 = vmatprep.subr.mxu0 %v2051
    %3622 = vmatpush1.msra.mxu0 %v2050
    %3623 = vmatprep.subr.mxu0 %v2055
    %3624 = vmatpush1.msra.mxu0 %v2054
    %3625 = vmatprep.subr.mxu0 %v2059
    %3626 = vmatpush1.msra.mxu0 %v2058
    %3627 = vmatprep.subr.mxu0 %v2063
    %3628 = vmatpush1.msra.mxu0 %v2062
    %3629 = vmatprep.subr.mxu0 %v2067
    %3630 = vmatpush1.msra.mxu0 %v2066
    %3631 = vmatprep.subr.mxu0 %v2071
    %3632 = vmatpush1.msra.mxu0 %v2070
    %3633 = vmatprep.subr.mxu0 %v2075
    %3634 = vmatpush1.msra.mxu0 %v2074
    %3635 = vmatprep.subr.mxu0 %v2079
    %3636 = vmatpush1.msra.mxu0 %v2078
    %3637 = vmatprep.subr.mxu0 %v2083
    %3638 = vmatpush1.msra.mxu0 %v2082
    %3639 = vmatprep.subr.mxu0 0.0
    %3640 = vmatpush1.msra.mxu0 0.0
    %3641 = vmatprep.subr.mxu0 0.0
    %3642 = vmatpush1.msra.mxu0 0.0
    %3643 = vmatprep.subr.mxu0 0.0
    %3644 = vmatpush1.msra.mxu0 0.0
    %3645 = vmatprep.subr.mxu0 0.0
    %3646 = vmatpush1.msra.mxu0 0.0
    %3647 = vmatprep.subr.mxu0 0.0
    %3648 = vmatpush1.msra.mxu0 0.0
    %3649 = vmatprep.subr.mxu0 0.0
    %3650 = vmatpush1.msra.mxu0 0.0
    %3651 = vmatprep.subr.mxu0 0.0
    %3652 = vmatpush1.msra.mxu0 0.0
    %3653 = vmatprep.subr.mxu0 0.0
    %3654 = vmatpush1.msra.mxu0 0.0
    %3655 = vmatprep.subr.mxu0 0.0
    %3656 = vmatpush1.msra.mxu0 0.0
    %3657 = vmatprep.subr.mxu0 0.0
    %3658 = vmatpush1.msra.mxu0 0.0
    %3659 = vmatprep.subr.mxu0 0.0
    %3660 = vmatpush1.msra.mxu0 0.0
    %3661 = vmatprep.subr.mxu0 0.0
    %3662 = vmatpush1.msra.mxu0 0.0
    %3663 = vmatprep.subr.mxu0 0.0
    %3664 = vmatpush1.msra.mxu0 0.0
    %3665 = vmatprep.subr.mxu0 0.0
    %3666 = vmatpush1.msra.mxu0 0.0
    %3667 = vmatprep.subr.mxu0 0.0
    %3668 = vmatpush1.msra.mxu0 0.0
    %3669 = vmatprep.subr.mxu0 0.0
    %3670 = vmatpush1.msra.mxu0 0.0
    %3671 = vmatprep.mubr.f32.mxu0 0.0
    %3672 = vmatmul.mubr.f32.gmra.mrb[0].mxu0 %v3601
    %v3673 = vpop.f32.mrb[0].mxu0
    %v3674 = vadd.f32 0.0, %v3673
    %v3675 = vpop.f32.mrb[0].mxu0
    %v3676 = vadd.f32 0.0, %v3675
    %3677 = vdwg.mxu0
    %3678 = vmatprep.subr.mxu0 %v2025
    %3679 = vmatpush1.msra.mxu0 %v2024
    %3680 = vmatprep.subr.mxu0 %v2029
    %3681 = vmatpush1.msra.mxu0 %v2028
    %3682 = vmatprep.subr.mxu0 %v2033
    %3683 = vmatpush1.msra.mxu0 %v2032
    %3684 = vmatprep.subr.mxu0 %v2037
    %3685 = vmatpush1.msra.mxu0 %v2036
    %3686 = vmatprep.subr.mxu0 %v2041
    %3687 = vmatpush1.msra.mxu0 %v2040
    %3688 = vmatprep.subr.mxu0 %v2045
    %3689 = vmatpush1.msra.mxu0 %v2044
    %3690 = vmatprep.subr.mxu0 %v2049
    %3691 = vmatpush1.msra.mxu0 %v2048
    %3692 = vmatprep.subr.mxu0 %v2053
    %3693 = vmatpush1.msra.mxu0 %v2052
    %3694 = vmatprep.subr.mxu0 %v2057
    %3695 = vmatpush1.msra.mxu0 %v2056
    %3696 = vmatprep.subr.mxu0 %v2061
    %3697 = vmatpush1.msra.mxu0 %v2060
    %3698 = vmatprep.subr.mxu0 %v2065
    %3699 = vmatpush1.msra.mxu0 %v2064
    %3700 = vmatprep.subr.mxu0 %v2069
    %3701 = vmatpush1.msra.mxu0 %v2068
    %3702 = vmatprep.subr.mxu0 %v2073
    %3703 = vmatpush1.msra.mxu0 %v2072
    %3704 = vmatprep.subr.mxu0 %v2077
    %3705 = vmatpush1.msra.mxu0 %v2076
    %3706 = vmatprep.subr.mxu0 %v2081
    %3707 = vmatpush1.msra.mxu0 %v2080
    %3708 = vmatprep.subr.mxu0 %v2085
    %3709 = vmatpush1.msra.mxu0 %v2084
    %3710 = vmatprep.subr.mxu0 0.0
    %3711 = vmatpush1.msra.mxu0 0.0
    %3712 = vmatprep.subr.mxu0 0.0
    %3713 = vmatpush1.msra.mxu0 0.0
    %3714 = vmatprep.subr.mxu0 0.0
    %3715 = vmatpush1.msra.mxu0 0.0
    %3716 = vmatprep.subr.mxu0 0.0
    %3717 = vmatpush1.msra.mxu0 0.0
    %3718 = vmatprep.subr.mxu0 0.0
    %3719 = vmatpush1.msra.mxu0 0.0
    %3720 = vmatprep.subr.mxu0 0.0
    %3721 = vmatpush1.msra.mxu0 0.0
    %3722 = vmatprep.subr.mxu0 0.0
    %3723 = vmatpush1.msra.mxu0 0.0
    %3724 = vmatprep.subr.mxu0 0.0
    %3725 = vmatpush1.msra.mxu0 0.0
    %3726 = vmatprep.subr.mxu0 0.0
    %3727 = vmatpush1.msra.mxu0 0.0
    %3728 = vmatprep.subr.mxu0 0.0
    %3729 = vmatpush1.msra.mxu0 0.0
    %3730 = vmatprep.subr.mxu0 0.0
    %3731 = vmatpush1.msra.mxu0 0.0
    %3732 = vmatprep.subr.mxu0 0.0
    %3733 = vmatpush1.msra.mxu0 0.0
    %3734 = vmatprep.subr.mxu0 0.0
    %3735 = vmatpush1.msra.mxu0 0.0
    %3736 = vmatprep.subr.mxu0 0.0
    %3737 = vmatpush1.msra.mxu0 0.0
    %3738 = vmatprep.subr.mxu0 0.0
    %3739 = vmatpush1.msra.mxu0 0.0
    %3740 = vmatprep.subr.mxu0 0.0
    %3741 = vmatpush1.msra.mxu0 0.0
    %3742 = vmatprep.mubr.f32.mxu0 0.0
    %3743 = vmatmul.mubr.f32.gmra.mrb[0].mxu0 %v3601
    %v3744 = vpop.f32.mrb[0].mxu0
    %v3745 = vadd.f32 0.0, %v3744
    %v3746 = vpop.f32.mrb[0].mxu0
    %v3747 = vadd.f32 0.0, %v3746
    %3748 = vdwg.mxu0
    %v3749 = vadd.f32 %v3603, %v3674
    %v3750 = vadd.f32 %v3604, %v3676
    %v3751 = vadd.f32 %v3605, %v3745
    %v3752 = vadd.f32 %v3606, %v3747
    %v3753 = vxor.u32 %v3749, 2147483648
    %v3754 = vmul.f32 %v3753, 1.442695
    %v3755 = vpow.pop %v3754
    %v3756 = vadd.f32 %v3755, 1.0
    %v3757 = vrcp.pop %v3756
    %v3758 = vmul.f32 1.0, %v3757
    %v3759 = vxor.u32 %v3750, 2147483648
    %v3760 = vmul.f32 %v3759, 1.442695
    %v3761 = vpow.pop %v3760
    %v3762 = vadd.f32 %v3761, 1.0
    %v3763 = vrcp.pop %v3762
    %v3764 = vmul.f32 1.0, %v3763
    %v3765 = vtanh.pop %v3751
    %v3766 = vxor.u32 %v3752, 2147483648
    %v3767 = vmul.f32 %v3766, 1.442695
    %v3768 = vpow.pop %v3767
    %v3769 = vadd.f32 %v3768, 1.0
    %v3770 = vrcp.pop %v3769
    %v3771 = vmul.f32 1.0, %v3770
    %v3772 = vmul.f32 %v3764, %v3599
    %v3773 = vmul.f32 %v3758, %v3765
    %v3774 = vadd.f32 %v3772, %v3773
    %v3775 = vtanh.pop %v3774
    %v3776 = vmul.f32 %v3771, %v3775
    %3777 = vst [vmem:[#allocation2 + $0x38] sm:$0xff] %v3776
    %s3778 = scalar_lea.vmem [#allocation17], 8
    %3779 = vst [vmem:[%s3778] sm:$0xff] %v3776
    %s3780 = scalar_lea.vmem [#allocation19], 8
    %3781 = vst [vmem:[%s3780] sm:$0xff] %v3774
    %v3782 = vld [vmem:[#allocation2] sm:$0xff]
    %v3783 = vld [vmem:[#allocation2 + $0x8] sm:$0xff]
    %v3784 = vld [vmem:[#allocation2 + $0x10] sm:$0xff]
    %v3785 = vld [vmem:[#allocation2 + $0x18] sm:$0xff]
    %v3786 = vld [vmem:[#allocation2 + $0x20] sm:$0xff]
    %v3787 = vld [vmem:[#allocation2 + $0x28] sm:$0xff]
    %v3788 = vld [vmem:[#allocation2 + $0x30] sm:$0xff]
    %v3789 = vld [vmem:[#allocation2 + $0x38] sm:$0xff]
    %v3790 = vld [vmem:[#allocation15] sm:$0xff]
    %v3791 = vld [vmem:[#allocation15 + $0x8] sm:$0xff]
    %v3792 = vld [vmem:[#allocation15 + $0x10] sm:$0xff]
    %v3793 = vld [vmem:[#allocation15 + $0x18] sm:$0xff]
    %v3794 = vld [vmem:[#allocation15 + $0x20] sm:$0xff]
    %v3795 = vld [vmem:[#allocation15 + $0x28] sm:$0xff]
    %v3796 = vld [vmem:[#allocation15 + $0x30] sm:$0xff]
    %v3797 = vld [vmem:[#allocation15 + $0x38] sm:$0xff]
    %v3798 = vld [vmem:[#allocation15 + $0x40] sm:$0xff]
    %v3799 = vld [vmem:[#allocation15 + $0x48] sm:$0xff]
    %v3800 = vld [vmem:[#allocation15 + $0x50] sm:$0xff]
    %v3801 = vld [vmem:[#allocation15 + $0x58] sm:$0xff]
    %v3802 = vld [vmem:[#allocation15 + $0x60] sm:$0xff]
    %v3803 = vld [vmem:[#allocation15 + $0x68] sm:$0xff]
    %v3804 = vld [vmem:[#allocation15 + $0x70] sm:$0xff]
    %v3805 = vld [vmem:[#allocation15 + $0x78] sm:$0xff]
    %v3806 = vld [vmem:[#allocation15 + $0x80] sm:$0xff]
    %v3807 = vld [vmem:[#allocation15 + $0x88] sm:$0xff]
    %v3808 = vld [vmem:[#allocation15 + $0x90] sm:$0xff]
    %v3809 = vld [vmem:[#allocation15 + $0x98] sm:$0xff]
    %v3810 = vld [vmem:[#allocation15 + $0xa0] sm:$0xff]
    %v3811 = vld [vmem:[#allocation15 + $0xa8] sm:$0xff]
    %v3812 = vld [vmem:[#allocation15 + $0xb0] sm:$0xff]
    %v3813 = vld [vmem:[#allocation15 + $0xb8] sm:$0xff]
    %v3814 = vld [vmem:[#allocation15 + $0xc0] sm:$0xff]
    %v3815 = vld [vmem:[#allocation15 + $0xc8] sm:$0xff]
    %v3816 = vld [vmem:[#allocation15 + $0xd0] sm:$0xff]
    %v3817 = vld [vmem:[#allocation15 + $0xd8] sm:$0xff]
    %v3818 = vld [vmem:[#allocation15 + $0xe0] sm:$0xff]
    %v3819 = vld [vmem:[#allocation15 + $0xe8] sm:$0xff]
    %v3820 = vld [vmem:[#allocation15 + $0xf0] sm:$0xff]
    %v3821 = vld [vmem:[#allocation15 + $0xf8] sm:$0xff]
    %v3822 = vld [vmem:[%s10] sm:$0x3]
    %v3824 = vlaneseq
    %v3825 = vshrl.u32 %v3824, 7
    %v3826 = vsub.s32 0, %v3825
    %v3827 = vrot.slane %v3822, %v3826
    %v3828 = vlaneseq
    %v3829 = vshrl.u32 %v3828, 7
    %v3830 = vsub.s32 1, %v3829
    %v3831 = vrot.slane %v3822, %v3830
    %3834 = vmatprep.subr.mxu0 %v3791
    %3835 = vmatpush1.msra.mxu0 %v3790
    %3836 = vmatprep.subr.mxu0 %v3793
    %3837 = vmatpush1.msra.mxu0 %v3792
    %3838 = vmatprep.subr.mxu0 %v3795
    %3839 = vmatpush1.msra.mxu0 %v3794
    %3840 = vmatprep.subr.mxu0 %v3797
    %3841 = vmatpush1.msra.mxu0 %v3796
    %3842 = vmatprep.subr.mxu0 %v3799
    %3843 = vmatpush1.msra.mxu0 %v3798
    %3844 = vmatprep.subr.mxu0 %v3801
    %3845 = vmatpush1.msra.mxu0 %v3800
    %3846 = vmatprep.subr.mxu0 %v3803
    %3847 = vmatpush1.msra.mxu0 %v3802
    %3848 = vmatprep.subr.mxu0 %v3805
    %3849 = vmatpush1.msra.mxu0 %v3804
    %3850 = vmatprep.subr.mxu0 %v3807
    %3851 = vmatpush1.msra.mxu0 %v3806
    %3852 = vmatprep.subr.mxu0 %v3809
    %3853 = vmatpush1.msra.mxu0 %v3808
    %3854 = vmatprep.subr.mxu0 %v3811
    %3855 = vmatpush1.msra.mxu0 %v3810
    %3856 = vmatprep.subr.mxu0 %v3813
    %3857 = vmatpush1.msra.mxu0 %v3812
    %3858 = vmatprep.subr.mxu0 %v3815
    %3859 = vmatpush1.msra.mxu0 %v3814
    %3860 = vmatprep.subr.mxu0 %v3817
    %3861 = vmatpush1.msra.mxu0 %v3816
    %3862 = vmatprep.subr.mxu0 %v3819
    %3863 = vmatpush1.msra.mxu0 %v3818
    %3864 = vmatprep.subr.mxu0 %v3821
    %3865 = vmatpush1.msra.mxu0 %v3820
    %3866 = vmatprep.subr.mxu0 0.0
    %3867 = vmatpush1.msra.mxu0 0.0
    %3868 = vmatprep.subr.mxu0 0.0
    %3869 = vmatpush1.msra.mxu0 0.0
    %3870 = vmatprep.subr.mxu0 0.0
    %3871 = vmatpush1.msra.mxu0 0.0
    %3872 = vmatprep.subr.mxu0 0.0
    %3873 = vmatpush1.msra.mxu0 0.0
    %3874 = vmatprep.subr.mxu0 0.0
    %3875 = vmatpush1.msra.mxu0 0.0
    %3876 = vmatprep.subr.mxu0 0.0
    %3877 = vmatpush1.msra.mxu0 0.0
    %3878 = vmatprep.subr.mxu0 0.0
    %3879 = vmatpush1.msra.mxu0 0.0
    %3880 = vmatprep.subr.mxu0 0.0
    %3881 = vmatpush1.msra.mxu0 0.0
    %3882 = vmatprep.subr.mxu0 0.0
    %3883 = vmatpush1.msra.mxu0 0.0
    %3884 = vmatprep.subr.mxu0 0.0
    %3885 = vmatpush1.msra.mxu0 0.0
    %3886 = vmatprep.subr.mxu0 0.0
    %3887 = vmatpush1.msra.mxu0 0.0
    %3888 = vmatprep.subr.mxu0 0.0
    %3889 = vmatpush1.msra.mxu0 0.0
    %3890 = vmatprep.subr.mxu0 0.0
    %3891 = vmatpush1.msra.mxu0 0.0
    %3892 = vmatprep.subr.mxu0 0.0
    %3893 = vmatpush1.msra.mxu0 0.0
    %3894 = vmatprep.subr.mxu0 0.0
    %3895 = vmatpush1.msra.mxu0 0.0
    %3896 = vmatprep.subr.mxu0 0.0
    %3897 = vmatpush1.msra.mxu0 0.0
    %3898 = vmatprep.mubr.f32.mxu0 0.0
    %3899 = vmatmul.mubr.f32.gmra.mrb[0].mxu0 %v3782
    %v3900 = vpop.f32.mrb[0].mxu0
    %v3901 = vadd.f32 %v3827, %v3900
    %v3902 = vpop.f32.mrb[0].mxu0
    %v3903 = vadd.f32 %v3831, %v3902
    %3904 = vmatprep.mubr.f32.mxu0 0.0
    %3905 = vmatmul.mubr.f32.gmra.mrb[0].mxu0 %v3783
    %v3906 = vpop.f32.mrb[0].mxu0
    %v3907 = vadd.f32 %v3827, %v3906
    %v3908 = vpop.f32.mrb[0].mxu0
    %v3909 = vadd.f32 %v3831, %v3908
    %3910 = vmatprep.mubr.f32.mxu0 0.0
    %3911 = vmatmul.mubr.f32.gmra.mrb[0].mxu0 %v3784
    %v3912 = vpop.f32.mrb[0].mxu0
    %v3913 = vadd.f32 %v3827, %v3912
    %v3914 = vpop.f32.mrb[0].mxu0
    %v3915 = vadd.f32 %v3831, %v3914
    %3916 = vmatprep.mubr.f32.mxu0 0.0
    %3917 = vmatmul.mubr.f32.gmra.mrb[0].mxu0 %v3785
    %v3918 = vpop.f32.mrb[0].mxu0
    %v3919 = vadd.f32 %v3827, %v3918
    %v3920 = vpop.f32.mrb[0].mxu0
    %v3921 = vadd.f32 %v3831, %v3920
    %3922 = vmatprep.mubr.f32.mxu0 0.0
    %3923 = vmatmul.mubr.f32.gmra.mrb[0].mxu0 %v3786
    %v3924 = vpop.f32.mrb[0].mxu0
    %v3925 = vadd.f32 %v3827, %v3924
    %v3926 = vpop.f32.mrb[0].mxu0
    %v3927 = vadd.f32 %v3831, %v3926
    %3928 = vmatprep.mubr.f32.mxu0 0.0
    %3929 = vmatmul.mubr.f32.gmra.mrb[0].mxu0 %v3787
    %v3930 = vpop.f32.mrb[0].mxu0
    %v3931 = vadd.f32 %v3827, %v3930
    %v3932 = vpop.f32.mrb[0].mxu0
    %v3933 = vadd.f32 %v3831, %v3932
    %3934 = vmatprep.mubr.f32.mxu0 0.0
    %3935 = vmatmul.mubr.f32.gmra.mrb[0].mxu0 %v3788
    %v3936 = vpop.f32.mrb[0].mxu0
    %v3937 = vadd.f32 %v3827, %v3936
    %v3938 = vpop.f32.mrb[0].mxu0
    %v3939 = vadd.f32 %v3831, %v3938
    %3940 = vmatprep.mubr.f32.mxu0 0.0
    %3941 = vmatmul.mubr.f32.gmra.mrb[0].mxu0 %v3789
    %v3942 = vpop.f32.mrb[0].mxu0
    %v3943 = vadd.f32 %v3827, %v3942
    %v3944 = vpop.f32.mrb[0].mxu0
    %v3945 = vadd.f32 %v3831, %v3944
    %3946 = vdwg.mxu0
    %3947 = vst [vmem:[#allocation16] sm:$0xff] %v3901
    %3948 = vst [vmem:[#allocation16 + $0x8] sm:$0xff] %v3903
    %3949 = vst [vmem:[#allocation16 + $0x10] sm:$0xff] %v3907
    %3950 = vst [vmem:[#allocation16 + $0x18] sm:$0xff] %v3909
    %3951 = vst [vmem:[#allocation16 + $0x20] sm:$0xff] %v3913
    %3952 = vst [vmem:[#allocation16 + $0x28] sm:$0xff] %v3915
    %3953 = vst [vmem:[#allocation16 + $0x30] sm:$0xff] %v3919
    %3954 = vst [vmem:[#allocation16 + $0x38] sm:$0xff] %v3921
    %3955 = vst [vmem:[#allocation16 + $0x40] sm:$0xff] %v3925
    %3956 = vst [vmem:[#allocation16 + $0x48] sm:$0xff] %v3927
    %3957 = vst [vmem:[#allocation16 + $0x50] sm:$0xff] %v3931
    %3958 = vst [vmem:[#allocation16 + $0x58] sm:$0xff] %v3933
    %3959 = vst [vmem:[#allocation16 + $0x60] sm:$0xff] %v3937
    %3960 = vst [vmem:[#allocation16 + $0x68] sm:$0xff] %v3939
    %3961 = vst [vmem:[#allocation16 + $0x70] sm:$0xff] %v3943
    %3962 = vst [vmem:[#allocation16 + $0x78] sm:$0xff] %v3945
    // Predicated region
    $region74: #{tpu_custom_call.1} parent=1 // pred_check
      _
    $region75: #{tpu_custom_call.1} parent=1 // pred_check_branch
      %3964 = sbr.rel (0) target = $region77
    $region76: #{tpu_custom_call.1} parent=1 // pred_region
      %s3966 = ssub.s32 2048, 2048
      %3967 = vsyncadd [#allocation6], %s3966
      %s3968 = sshll.u32 [#allocation16], 4
      %s3969 = int_to_ptr.vmem [resolvable:$true] %s3968
      %3974 = dma.vmem_to_hbm [thread:$0]  %s3969, 2048, %s11, [#allocation6], 256, 256, 16
    $region77: #{tpu_custom_call.1} parent=1 // pred_fallthru
      _
    // Predicated region
    $region78: #{tpu_custom_call.1} parent=1 // pred_check
      _
    $region79: #{tpu_custom_call.1} parent=1 // pred_check_branch
      %3976 = sbr.rel (0) target = $region81
    $region80: #{tpu_custom_call.1} parent=1 // pred_region
      %s3978 = ssub.s32 256, 256
      %3979 = vsyncadd [#allocation18], %s3978
      %s3980 = sshll.u32 [#allocation17], 4
      %s3981 = int_to_ptr.vmem [resolvable:$true] %s3980
      %3986 = dma.vmem_to_hbm [thread:$0]  %s3981, 256, %s12, [#allocation18], 128, 128, 8
    $region81: #{tpu_custom_call.1} parent=1 // pred_fallthru
      _
    // Predicated region
    $region82: #{tpu_custom_call.1} parent=1 // pred_check
      _
    $region83: #{tpu_custom_call.1} parent=1 // pred_check_branch
      %3988 = sbr.rel (0) target = $region85
    $region84: #{tpu_custom_call.1} parent=1 // pred_region
      %s3990 = ssub.s32 256, 256
      %3991 = vsyncadd [#allocation18], %s3990
      %s3992 = sshll.u32 [#allocation19], 4
      %s3993 = int_to_ptr.vmem [resolvable:$true] %s3992
      %3998 = dma.vmem_to_hbm [thread:$0]  %s3993, 256, %s13, [#allocation18], 128, 128, 8
    $region85: #{tpu_custom_call.1} parent=1 // pred_fallthru
      _
    // Predicated region
    $region86: #{tpu_custom_call.1} parent=1 // pred_check
      _
    $region87: #{tpu_custom_call.1} parent=1 // pred_check_branch
      %4000 = sbr.rel (0) target = $region89
    $region88: #{tpu_custom_call.1} parent=1 // pred_region
      %4001 = dma.done [#allocation6], 2048
    $region89: #{tpu_custom_call.1} parent=1 // pred_fallthru
      _
    // Predicated region
    $region90: #{tpu_custom_call.1} parent=1 // pred_check
      _
    $region91: #{tpu_custom_call.1} parent=1 // pred_check_branch
      %4003 = sbr.rel (0) target = $region93
    $region92: #{tpu_custom_call.1} parent=1 // pred_region
      %4004 = dma.done [#allocation18], 256
    $region93: #{tpu_custom_call.1} parent=1 // pred_fallthru
      _
    // Predicated region
    $region94: #{tpu_custom_call.1} parent=1 // pred_check
      _
    $region95: #{tpu_custom_call.1} parent=1 // pred_check_branch
      %4006 = sbr.rel (0) target = $region97
    $region96: #{tpu_custom_call.1} parent=1 // pred_region
      %4007 = dma.done [#allocation18], 256
    $region97: #{tpu_custom_call.1} parent=1 // pred_fallthru
      _
    %4008 = vsyncpa [#allocation5], 1
    %4009 = vsyncpa [#allocation8], 1
    %4010 = vsyncpa [#allocation11], 1
    %4011 = vsyncpa [#allocation14], 1
    %4012 = vsyncpa [#allocation6], 1
    %4013 = vsyncpa [#allocation18], 1

</llo_original>
